<compile_context>
chip_gen: v7x
topology: tpu7x:2x2x1
jax: 0.10.0
libtpu: 0.0.40
codegen_flags: <defaults>
</compile_context>

<pallas_src>
import math

import jax
import jax.numpy as jnp
from jax.experimental import pallas as pl
from jax.experimental.pallas import tpu as pltpu


# ----------------------------- fused Pallas kernel ---------------------------

def fused_forward_kernel(x0_ref, wq_ref, wek_ref, wev_ref, wo_ref, decay_ref,
                         fcw_ref, fcb_ref, o_ref):
    """Forward pass for ONE batch element (grid=(B,), "parallel").

    x0    : (S, D)          precomputed embedding-table lookup + pos. encoding
    wq    : (L, H, D, hd)   W_q split per head (head-major)
    wek   : (L, H, D, hd)   (W_k + W_v) @ W_down @ W_up_k, split per head
    wev   : (L, H, D, hd)   (W_k + W_v) @ W_down @ W_up_v, split per head
    wo    : (L, H, hd, D)   W_o rows grouped by head
    decay : (S, S)          time decay with 1/sqrt(d_model) folded in
    fcw   : (D, Vp)         fc_out weight, padded to 128 lanes
    fcb   : (1, Vp)
    o     : (S, Vp)
    """
    L, H, _, _ = wq_ref.shape
    x = x0_ref[...]                                  # (S, D)
    decay = decay_ref[...]                           # (S, S)

    # TODO(synk): the PyTorch module also appends latent_kv.mean(dim=1) to a
    # python-list "memory" (stateful side effect, no influence on the output).
    for l in range(L):                               # static unroll (L small)
        wq_h = wq_ref[l]                             # (H, D, hd)
        wek_h = wek_ref[l]                           # (H, D, hd)
        wev_h = wev_ref[l]                           # (H, D, hd)
        wo_h = wo_ref[l]                             # (H, hd, D)

        # one tiny (H, S, D) broadcast feeds all three head-batched projections
        xh = jnp.broadcast_to(x[None], (H,) + x.shape)            # (H, S, D)
        qh = jax.lax.dot_general(xh, wq_h, (((2,), (1,)), ((0,), (0,))),
                                 preferred_element_type=jnp.float32)  # (H,S,hd)
        kh = jax.lax.dot_general(xh, wek_h, (((2,), (1,)), ((0,), (0,))),
                                 preferred_element_type=jnp.float32)  # (H,S,hd)
        vh = jax.lax.dot_general(xh, wev_h, (((2,), (1,)), ((0,), (0,))),
                                 preferred_element_type=jnp.float32)  # (H,S,hd)

        # scores: one batched q @ k^T across all heads
        s = jax.lax.dot_general(qh, kh, (((2,), (2,)), ((0,), (0,))),
                                preferred_element_type=jnp.float32)   # (H,S,S)
        s = s * decay[None]                    # time decay (1/sqrt(D) folded in)
        s = s - jnp.max(s, axis=-1, keepdims=True)
        p = jnp.exp(s)
        # exact reciprocal (approx=True ~2^-12 rel. error is borderline vs 1e-4)
        inv = pl.reciprocal(jnp.sum(p, axis=-1, keepdims=True), approx=False)

        oh = jax.lax.dot_general(p, vh, (((2,), (1,)), ((0,), (0,))),
                                 preferred_element_type=jnp.float32) * inv  # (H,S,hd)

        # output projection + sum over heads -> (S, D), full lane width
        ob = jax.lax.dot_general(oh, wo_h, (((2,), (1,)), ((0,), (0,))),
                                 preferred_element_type=jnp.float32)  # (H,S,D)
        x = jnp.sum(ob, axis=0)                                        # (S, D)

    # --- fc_out (lane-dense, padded to Vp) ---
    o_ref[...] = jnp.dot(x, fcw_ref[...],
                         preferred_element_type=jnp.float32) + fcb_ref[...]


# ------------------------------- wrappers ------------------------------------

def preprocess_params(params, cfg):
    """Precompute embedding table, fold latent path, head-split, pad (once)."""
    D = cfg["embedding_dim"]
    H = cfg["num_heads"]
    hd = D // H
    V = cfg["vocab_size"]
    Vp = ((V + 127) // 128) * 128
    e = params["emb"]

    # DynamicRuleEmbedding as a (V, D) table (token_rules are all index 0).
    toks = jnp.arange(V, dtype=jnp.float32)[:, None] / V                  # (V, 1)
    ang = 2.0 * jnp.pi * toks * e["freqs"]                                # (V, F)
    fe = e["a_n"] * jnp.cos(ang) + e["b_n"] * jnp.sin(ang)                # (V, F)
    table = (fe @ e["proj_w"] + e["proj_b"]) @ e["rule0"]                 # (V, D)

    def head_split_in(w):      # (D, D) -> (H, D, hd): per-head input slabs
        return jnp.transpose(w.reshape(D, H, hd), (1, 0, 2))

    wq_h, wek_h, wev_h, wo_h = [], [], [], []
    for lw in params["layers"]:
        w_eff_k = (lw["w_k"] + lw["w_v"]) @ lw["w_down"] @ lw["w_up_k"]   # (D, D)
        w_eff_v = (lw["w_k"] + lw["w_v"]) @ lw["w_down"] @ lw["w_up_v"]   # (D, D)
        wq_h.append(head_split_in(lw["w_q"]))
        wek_h.append(head_split_in(w_eff_k))
        wev_h.append(head_split_in(w_eff_v))
        wo_h.append(lw["w_o"].reshape(H, hd, D))

    decay_scaled = params["decay"] * (1.0 / math.sqrt(D))   # fold 1/sqrt(d_model)
    fc_w = jnp.zeros((D, Vp), jnp.float32).at[:, :V].set(params["fc_w"])
    fc_b = jnp.zeros((1, Vp), jnp.float32).at[:, :V].set(params["fc_b"])

    return dict(table=table, pe=params["pe"],
                wq_h=jnp.stack(wq_h), wek_h=jnp.stack(wek_h),
                wev_h=jnp.stack(wev_h), wo_h=jnp.stack(wo_h),
                decay=decay_scaled, fc_w=fc_w, fc_b=fc_b)


def transformer_forward(src, tgt, pp, cfg):
    # The reference computes a tgt embedding that never reaches the output;
    # it is dead code and intentionally not computed here.
    del tgt
    B, S = src.shape
    D = cfg["embedding_dim"]
    V = cfg["vocab_size"]
    Vp = pp["fc_w"].shape[1]
    L, H = pp["wq_h"].shape[0], pp["wq_h"].shape[1]
    hd = D // H

    tok = src.reshape(-1)                                                  # (BS,)
    x0 = jnp.take(pp["table"], tok, axis=0) + jnp.tile(pp["pe"][:S], (B, 1))

    out = pl.pallas_call(
        fused_forward_kernel,
        out_shape=jax.ShapeDtypeStruct((B * S, Vp), jnp.float32),
        grid_spec=pltpu.PrefetchScalarGridSpec(
            num_scalar_prefetch=0,
            grid=(B,),
            in_specs=[
                pl.BlockSpec((S, D), lambda b: (b, 0)),                 # x0
                pl.BlockSpec((L, H, D, hd), lambda b: (0, 0, 0, 0)),    # wq_h
                pl.BlockSpec((L, H, D, hd), lambda b: (0, 0, 0, 0)),    # wek_h
                pl.BlockSpec((L, H, D, hd), lambda b: (0, 0, 0, 0)),    # wev_h
                pl.BlockSpec((L, H, hd, D), lambda b: (0, 0, 0, 0)),    # wo_h
                pl.BlockSpec((S, S), lambda b: (0, 0)),                 # decay
                pl.BlockSpec((D, Vp), lambda b: (0, 0)),                # fc_w
                pl.BlockSpec((1, Vp), lambda b: (0, 0)),                # fc_b
            ],
            out_specs=pl.BlockSpec((S, Vp), lambda b: (b, 0)),
        ),
        compiler_params=pltpu.CompilerParams(
            dimension_semantics=("parallel",),
            vmem_limit_bytes=32 * 1024 * 1024),
    )(x0, pp["wq_h"], pp["wek_h"], pp["wev_h"], pp["wo_h"],
      pp["decay"], pp["fc_w"], pp["fc_b"])

    return out[:, :V].reshape(B, S, V)


# ------------------------------ parameters -----------------------------------

def make_pe(max_len, d_model):
    position = jnp.arange(max_len, dtype=jnp.float32)[:, None]
    div_term = jnp.exp(jnp.arange(0, d_model, 2, dtype=jnp.float32)
                       * (-math.log(10000.0) / d_model))
    pe = jnp.zeros((max_len, d_model), dtype=jnp.float32)
    pe = pe.at[:, 0::2].set(jnp.sin(position * div_term))
    pe = pe.at[:, 1::2].set(jnp.cos(position * div_term))
    return pe


def init_params(key, cfg):
    V, D, F = cfg["vocab_size"], cfg["embedding_dim"], cfg["num_frequencies"]
    dl = D // cfg["compression_factor"]
    keys = jax.random.split(key, 6 + 7 * cfg["num_layers"])
    ki = iter(keys)
    emb = {
        "a_n": jax.random.normal(next(ki), (V, F), jnp.float32),
        "b_n": jax.random.normal(next(ki), (V, F), jnp.float32),
        "freqs": jnp.linspace(1.0, F, F, dtype=jnp.float32).reshape(1, F),
        "proj_w": jax.random.normal(next(ki), (F, D), jnp.float32) * 0.1,
        "proj_b": jax.random.normal(next(ki), (1, D), jnp.float32) * 0.1,
        "rule0": jax.random.normal(next(ki), (D, D), jnp.float32) * 0.1,
    }
    layers = []
    for _ in range(cfg["num_layers"]):
        layers.append({
            "w_q": jax.random.normal(next(ki), (D, D), jnp.float32) * 0.1,
            "w_k": jax.random.normal(next(ki), (D, D), jnp.float32) * 0.1,
            "w_v": jax.random.normal(next(ki), (D, D), jnp.float32) * 0.1,
            "w_down": jax.random.normal(next(ki), (D, dl), jnp.float32) * 0.1,
            "w_up_k": jax.random.normal(next(ki), (dl, D), jnp.float32) * 0.1,
            "w_up_v": jax.random.normal(next(ki), (dl, D), jnp.float32) * 0.1,
            "w_o": jax.random.normal(next(ki), (D, D), jnp.float32) * 0.1,
        })
    S = cfg["seq_length"]
    idx = jnp.arange(S, dtype=jnp.float32)
    decay = jnp.exp(-cfg["lambda_decay"] * jnp.abs(idx[None, :] - idx[:, None]))
    return {
        "emb": emb,
        "layers": layers,
        "fc_w": jax.random.normal(next(ki), (D, V), jnp.float32) * 0.1,
        "fc_b": jnp.zeros((1, V), jnp.float32),
        "pe": make_pe(cfg["seq_length"], D),
        "decay": decay,
    }


# ------------------------- pure-JAX reference check --------------------------

def forward_ref(src, tgt, params, cfg):
    del tgt  # unused by the reference output as well
    D, H = cfg["embedding_dim"], cfg["num_heads"]
    hd = D // H
    S = src.shape[1]
    e = params["emb"]

    def embed(tok):
        x = tok.astype(jnp.float32)[..., None] / cfg["vocab_size"]
        ang = 2.0 * jnp.pi * e["freqs"] * x
        fe = e["a_n"][tok] * jnp.cos(ang) + e["b_n"][tok] * jnp.sin(ang)
        base = fe @ e["proj_w"] + e["proj_b"][0]
        return base @ e["rule0"]

    x = embed(src) + params["pe"][:S]
    for lw in params["layers"]:
        B = x.shape[0]
        q, k, v = x @ lw["w_q"], x @ lw["w_k"], x @ lw["w_v"]
        lat = (k + v) @ lw["w_down"]
        kr, vr = lat @ lw["w_up_k"], lat @ lw["w_up_v"]
        qh = q.reshape(B, S, H, hd).transpose(0, 2, 1, 3)
        kh = kr.reshape(B, S, H, hd).transpose(0, 2, 1, 3)
        vh = vr.reshape(B, S, H, hd).transpose(0, 2, 1, 3)
        s = jnp.einsum("bhqd,bhkd->bhqk", qh, kh) / math.sqrt(D)
        s = s * params["decay"][None, None]
        w = jax.nn.softmax(s, axis=-1)
        o = jnp.einsum("bhqk,bhkd->bhqd", w, vh)
        x = o.transpose(0, 2, 1, 3).reshape(B, S, D) @ lw["w_o"]
    return x @ params["fc_w"] + params["fc_b"][0]


# ---------------------------------- main --------------------------------------

if __name__ == "__main__":
    cfg = dict(
        vocab_size=100,
        embedding_dim=32,
        num_layers=2,
        num_heads=4,
        seq_length=8,
        lambda_decay=0.01,
        compression_factor=2,
        num_frequencies=50,
    )
    key = jax.random.PRNGKey(0)
    kp, ks, kt = jax.random.split(key, 3)
    params = init_params(kp, cfg)
    pp = preprocess_params(params, cfg)

    batch = 2
    src = jax.random.randint(ks, (batch, cfg["seq_length"]), 0, cfg["vocab_size"])
    tgt = jax.random.randint(kt, (batch, cfg["seq_length"]), 0, cfg["vocab_size"])

    fwd = jax.jit(lambda s, t, p: transformer_forward(s, t, p, cfg))
    out = jax.block_until_ready(fwd(src, tgt, pp))

    ref = forward_ref(src, tgt, params, cfg)
    assert out.shape == (batch, cfg["seq_length"], cfg["vocab_size"])
    assert jnp.allclose(out, ref, rtol=1e-4, atol=1e-4), "mismatch vs reference"

    print("KERNEL_OK")
</pallas_src>

<mosaic_0001>
module attributes {stable_mosaic.version = 11 : i64} {
  func.func @fused_forward_kernel(%arg0: i32, %arg1: memref<8x32xf32, #tpu.memory_space<vmem>>, %arg2: memref<2x4x32x8xf32, #tpu.memory_space<vmem>>, %arg3: memref<2x4x32x8xf32, #tpu.memory_space<vmem>>, %arg4: memref<2x4x32x8xf32, #tpu.memory_space<vmem>>, %arg5: memref<2x4x8x32xf32, #tpu.memory_space<vmem>>, %arg6: memref<8x8xf32, #tpu.memory_space<vmem>>, %arg7: memref<32x128xf32, #tpu.memory_space<vmem>>, %arg8: memref<1x128xf32, #tpu.memory_space<vmem>>, %arg9: memref<8x128xf32, #tpu.memory_space<vmem>>) attributes {dimension_semantics = [#tpu.dimension_semantics<parallel>], iteration_bounds = array<i64: 2>, scalar_prefetch = 0 : i64, scratch_operands = 0 : i64, tpu.core_type = #tpu.core_type<tc>, window_params = [{transform_indices = @transform_0, window_bounds = array<i64: 8, 32>}, {pipeline_mode = #tpu.pipeline_mode<synchronous>, transform_indices = @transform_1, window_bounds = array<i64: 2, 4, 32, 8>}, {pipeline_mode = #tpu.pipeline_mode<synchronous>, transform_indices = @transform_2, window_bounds = array<i64: 2, 4, 32, 8>}, {pipeline_mode = #tpu.pipeline_mode<synchronous>, transform_indices = @transform_3, window_bounds = array<i64: 2, 4, 32, 8>}, {pipeline_mode = #tpu.pipeline_mode<synchronous>, transform_indices = @transform_4, window_bounds = array<i64: 2, 4, 8, 32>}, {pipeline_mode = #tpu.pipeline_mode<synchronous>, transform_indices = @transform_5, window_bounds = array<i64: 8, 8>}, {pipeline_mode = #tpu.pipeline_mode<synchronous>, transform_indices = @transform_6, window_bounds = array<i64: 32, 128>}, {pipeline_mode = #tpu.pipeline_mode<synchronous>, transform_indices = @transform_7, window_bounds = array<i64: 1, 128>}, {transform_indices = @transform_8, window_bounds = array<i64: 8, 128>}]} {
    %c0 = arith.constant 0 : index
    %c0_0 = arith.constant 0 : index
    %0 = vector.load %arg1[%c0, %c0_0] : memref<8x32xf32, #tpu.memory_space<vmem>>, vector<8x32xf32>
    %c0_1 = arith.constant 0 : index
    %c0_2 = arith.constant 0 : index
    %1 = vector.load %arg6[%c0_1, %c0_2] : memref<8x8xf32, #tpu.memory_space<vmem>>, vector<8x8xf32>
    %c0_3 = arith.constant 0 : index
    %c0_4 = arith.constant 0 : index
    %c0_5 = arith.constant 0 : index
    %c0_6 = arith.constant 0 : index
    %2 = vector.load %arg2[%c0_3, %c0_4, %c0_5, %c0_6] : memref<2x4x32x8xf32, #tpu.memory_space<vmem>>, vector<1x4x32x8xf32>
    %3 = vector.shape_cast %2 : vector<1x4x32x8xf32> to vector<4x32x8xf32>
    %c0_7 = arith.constant 0 : index
    %c0_8 = arith.constant 0 : index
    %c0_9 = arith.constant 0 : index
    %c0_10 = arith.constant 0 : index
    %4 = vector.load %arg3[%c0_7, %c0_8, %c0_9, %c0_10] : memref<2x4x32x8xf32, #tpu.memory_space<vmem>>, vector<1x4x32x8xf32>
    %5 = vector.shape_cast %4 : vector<1x4x32x8xf32> to vector<4x32x8xf32>
    %c0_11 = arith.constant 0 : index
    %c0_12 = arith.constant 0 : index
    %c0_13 = arith.constant 0 : index
    %c0_14 = arith.constant 0 : index
    %6 = vector.load %arg4[%c0_11, %c0_12, %c0_13, %c0_14] : memref<2x4x32x8xf32, #tpu.memory_space<vmem>>, vector<1x4x32x8xf32>
    %7 = vector.shape_cast %6 : vector<1x4x32x8xf32> to vector<4x32x8xf32>
    %c0_15 = arith.constant 0 : index
    %c0_16 = arith.constant 0 : index
    %c0_17 = arith.constant 0 : index
    %c0_18 = arith.constant 0 : index
    %8 = vector.load %arg5[%c0_15, %c0_16, %c0_17, %c0_18] : memref<2x4x8x32xf32, #tpu.memory_space<vmem>>, vector<1x4x8x32xf32>
    %9 = vector.shape_cast %8 : vector<1x4x8x32xf32> to vector<4x8x32xf32>
    %10 = vector.shape_cast %0 : vector<8x32xf32> to vector<1x8x32xf32>
    %11 = vector.shape_cast %10 : vector<1x8x32xf32> to vector<1x8x32xf32>
    %12 = vector.broadcast %11 : vector<1x8x32xf32> to vector<4x8x32xf32>
    %cst = arith.constant dense<0.000000e+00> : vector<4x8x8xf32>
    %13 = tpu.matmul %12, %3, %cst {dimension_numbers = #tpu.dot_dimension_numbers<[2], [1], [1], [2], [0, 0, 0, 1, 1, 2], [0], [0]>} : vector<4x8x32xf32>, vector<4x32x8xf32>, vector<4x8x8xf32> -> vector<4x8x8xf32>
    %cst_19 = arith.constant dense<0.000000e+00> : vector<4x8x8xf32>
    %14 = tpu.matmul %12, %5, %cst_19 {dimension_numbers = #tpu.dot_dimension_numbers<[2], [1], [1], [2], [0, 0, 0, 1, 1, 2], [0], [0]>} : vector<4x8x32xf32>, vector<4x32x8xf32>, vector<4x8x8xf32> -> vector<4x8x8xf32>
    %cst_20 = arith.constant dense<0.000000e+00> : vector<4x8x8xf32>
    %15 = tpu.matmul %12, %7, %cst_20 {dimension_numbers = #tpu.dot_dimension_numbers<[2], [1], [1], [2], [0, 0, 0, 1, 1, 2], [0], [0]>} : vector<4x8x32xf32>, vector<4x32x8xf32>, vector<4x8x8xf32> -> vector<4x8x8xf32>
    %cst_21 = arith.constant dense<0.000000e+00> : vector<4x8x8xf32>
    %16 = tpu.matmul %13, %14, %cst_21 {dimension_numbers = #tpu.dot_dimension_numbers<[2], [2], [1], [1], [0, 0, 0, 1, 1, 1], [0], [0]>} : vector<4x8x8xf32>, vector<4x8x8xf32>, vector<4x8x8xf32> -> vector<4x8x8xf32>
    %17 = vector.shape_cast %1 : vector<8x8xf32> to vector<1x8x8xf32>
    %18 = vector.broadcast %17 : vector<1x8x8xf32> to vector<4x8x8xf32>
    %19 = arith.mulf %16, %18 : vector<4x8x8xf32>
    %cst_22 = arith.constant dense<0xFF800000> : vector<4x8xf32>
    %20 = vector.multi_reduction <maximumf>, %19, %cst_22 [2] : vector<4x8x8xf32> to vector<4x8xf32>
    %21 = vector.shape_cast %20 : vector<4x8xf32> to vector<4x8x1xf32>
    %22 = vector.broadcast %21 : vector<4x8x1xf32> to vector<4x8x8xf32>
    %23 = arith.subf %19, %22 : vector<4x8x8xf32>
    %24 = math.exp %23 : vector<4x8x8xf32>
    %cst_23 = arith.constant dense<0.000000e+00> : vector<4x8xf32>
    %25 = vector.multi_reduction <add>, %24, %cst_23 [2] : vector<4x8x8xf32> to vector<4x8xf32>
    %26 = vector.shape_cast %25 : vector<4x8xf32> to vector<4x8x1xf32>
    %27 = tpu.reciprocal %26 : vector<4x8x1xf32> -> vector<4x8x1xf32>
    %cst_24 = arith.constant dense<0.000000e+00> : vector<4x8x8xf32>
    %28 = tpu.matmul %24, %15, %cst_24 {dimension_numbers = #tpu.dot_dimension_numbers<[2], [1], [1], [2], [0, 0, 0, 1, 1, 2], [0], [0]>} : vector<4x8x8xf32>, vector<4x8x8xf32>, vector<4x8x8xf32> -> vector<4x8x8xf32>
    %29 = vector.broadcast %27 : vector<4x8x1xf32> to vector<4x8x8xf32>
    %30 = arith.mulf %28, %29 : vector<4x8x8xf32>
    %cst_25 = arith.constant dense<0.000000e+00> : vector<4x8x32xf32>
    %31 = tpu.matmul %30, %9, %cst_25 {dimension_numbers = #tpu.dot_dimension_numbers<[2], [1], [1], [2], [0, 0, 0, 1, 1, 2], [0], [0]>} : vector<4x8x8xf32>, vector<4x8x32xf32>, vector<4x8x32xf32> -> vector<4x8x32xf32>
    %cst_26 = arith.constant dense<0.000000e+00> : vector<8x32xf32>
    %32 = vector.multi_reduction <add>, %31, %cst_26 [0] : vector<4x8x32xf32> to vector<8x32xf32>
    %c1 = arith.constant 1 : index
    %c0_27 = arith.constant 0 : index
    %c0_28 = arith.constant 0 : index
    %c0_29 = arith.constant 0 : index
    %33 = vector.load %arg2[%c1, %c0_27, %c0_28, %c0_29] : memref<2x4x32x8xf32, #tpu.memory_space<vmem>>, vector<1x4x32x8xf32>
    %34 = vector.shape_cast %33 : vector<1x4x32x8xf32> to vector<4x32x8xf32>
    %c1_30 = arith.constant 1 : index
    %c0_31 = arith.constant 0 : index
    %c0_32 = arith.constant 0 : index
    %c0_33 = arith.constant 0 : index
    %35 = vector.load %arg3[%c1_30, %c0_31, %c0_32, %c0_33] : memref<2x4x32x8xf32, #tpu.memory_space<vmem>>, vector<1x4x32x8xf32>
    %36 = vector.shape_cast %35 : vector<1x4x32x8xf32> to vector<4x32x8xf32>
    %c1_34 = arith.constant 1 : index
    %c0_35 = arith.constant 0 : index
    %c0_36 = arith.constant 0 : index
    %c0_37 = arith.constant 0 : index
    %37 = vector.load %arg4[%c1_34, %c0_35, %c0_36, %c0_37] : memref<2x4x32x8xf32, #tpu.memory_space<vmem>>, vector<1x4x32x8xf32>
    %38 = vector.shape_cast %37 : vector<1x4x32x8xf32> to vector<4x32x8xf32>
    %c1_38 = arith.constant 1 : index
    %c0_39 = arith.constant 0 : index
    %c0_40 = arith.constant 0 : index
    %c0_41 = arith.constant 0 : index
    %39 = vector.load %arg5[%c1_38, %c0_39, %c0_40, %c0_41] : memref<2x4x8x32xf32, #tpu.memory_space<vmem>>, vector<1x4x8x32xf32>
    %40 = vector.shape_cast %39 : vector<1x4x8x32xf32> to vector<4x8x32xf32>
    %41 = vector.shape_cast %32 : vector<8x32xf32> to vector<1x8x32xf32>
    %42 = vector.shape_cast %41 : vector<1x8x32xf32> to vector<1x8x32xf32>
    %43 = vector.broadcast %42 : vector<1x8x32xf32> to vector<4x8x32xf32>
    %cst_42 = arith.constant dense<0.000000e+00> : vector<4x8x8xf32>
    %44 = tpu.matmul %43, %34, %cst_42 {dimension_numbers = #tpu.dot_dimension_numbers<[2], [1], [1], [2], [0, 0, 0, 1, 1, 2], [0], [0]>} : vector<4x8x32xf32>, vector<4x32x8xf32>, vector<4x8x8xf32> -> vector<4x8x8xf32>
    %cst_43 = arith.constant dense<0.000000e+00> : vector<4x8x8xf32>
    %45 = tpu.matmul %43, %36, %cst_43 {dimension_numbers = #tpu.dot_dimension_numbers<[2], [1], [1], [2], [0, 0, 0, 1, 1, 2], [0], [0]>} : vector<4x8x32xf32>, vector<4x32x8xf32>, vector<4x8x8xf32> -> vector<4x8x8xf32>
    %cst_44 = arith.constant dense<0.000000e+00> : vector<4x8x8xf32>
    %46 = tpu.matmul %43, %38, %cst_44 {dimension_numbers = #tpu.dot_dimension_numbers<[2], [1], [1], [2], [0, 0, 0, 1, 1, 2], [0], [0]>} : vector<4x8x32xf32>, vector<4x32x8xf32>, vector<4x8x8xf32> -> vector<4x8x8xf32>
    %cst_45 = arith.constant dense<0.000000e+00> : vector<4x8x8xf32>
    %47 = tpu.matmul %44, %45, %cst_45 {dimension_numbers = #tpu.dot_dimension_numbers<[2], [2], [1], [1], [0, 0, 0, 1, 1, 1], [0], [0]>} : vector<4x8x8xf32>, vector<4x8x8xf32>, vector<4x8x8xf32> -> vector<4x8x8xf32>
    %48 = vector.shape_cast %1 : vector<8x8xf32> to vector<1x8x8xf32>
    %49 = vector.broadcast %48 : vector<1x8x8xf32> to vector<4x8x8xf32>
    %50 = arith.mulf %47, %49 : vector<4x8x8xf32>
    %cst_46 = arith.constant dense<0xFF800000> : vector<4x8xf32>
    %51 = vector.multi_reduction <maximumf>, %50, %cst_46 [2] : vector<4x8x8xf32> to vector<4x8xf32>
    %52 = vector.shape_cast %51 : vector<4x8xf32> to vector<4x8x1xf32>
    %53 = vector.broadcast %52 : vector<4x8x1xf32> to vector<4x8x8xf32>
    %54 = arith.subf %50, %53 : vector<4x8x8xf32>
    %55 = math.exp %54 : vector<4x8x8xf32>
    %cst_47 = arith.constant dense<0.000000e+00> : vector<4x8xf32>
    %56 = vector.multi_reduction <add>, %55, %cst_47 [2] : vector<4x8x8xf32> to vector<4x8xf32>
    %57 = vector.shape_cast %56 : vector<4x8xf32> to vector<4x8x1xf32>
    %58 = tpu.reciprocal %57 : vector<4x8x1xf32> -> vector<4x8x1xf32>
    %cst_48 = arith.constant dense<0.000000e+00> : vector<4x8x8xf32>
    %59 = tpu.matmul %55, %46, %cst_48 {dimension_numbers = #tpu.dot_dimension_numbers<[2], [1], [1], [2], [0, 0, 0, 1, 1, 2], [0], [0]>} : vector<4x8x8xf32>, vector<4x8x8xf32>, vector<4x8x8xf32> -> vector<4x8x8xf32>
    %60 = vector.broadcast %58 : vector<4x8x1xf32> to vector<4x8x8xf32>
    %61 = arith.mulf %59, %60 : vector<4x8x8xf32>
    %cst_49 = arith.constant dense<0.000000e+00> : vector<4x8x32xf32>
    %62 = tpu.matmul %61, %40, %cst_49 {dimension_numbers = #tpu.dot_dimension_numbers<[2], [1], [1], [2], [0, 0, 0, 1, 1, 2], [0], [0]>} : vector<4x8x8xf32>, vector<4x8x32xf32>, vector<4x8x32xf32> -> vector<4x8x32xf32>
    %cst_50 = arith.constant dense<0.000000e+00> : vector<8x32xf32>
    %63 = vector.multi_reduction <add>, %62, %cst_50 [0] : vector<4x8x32xf32> to vector<8x32xf32>
    %c0_51 = arith.constant 0 : index
    %c0_52 = arith.constant 0 : index
    %64 = vector.load %arg7[%c0_51, %c0_52] : memref<32x128xf32, #tpu.memory_space<vmem>>, vector<32x128xf32>
    %cst_53 = arith.constant dense<0.000000e+00> : vector<8x128xf32>
    %65 = tpu.matmul %63, %64, %cst_53 {dimension_numbers = #tpu.dot_dimension_numbers<[1], [0], [0], [1], [0, 0, 1, 1], [], []>} : vector<8x32xf32>, vector<32x128xf32>, vector<8x128xf32> -> vector<8x128xf32>
    %c0_54 = arith.constant 0 : index
    %c0_55 = arith.constant 0 : index
    %66 = vector.load %arg8[%c0_54, %c0_55] : memref<1x128xf32, #tpu.memory_space<vmem>>, vector<1x128xf32>
    %67 = vector.broadcast %66 : vector<1x128xf32> to vector<8x128xf32>
    %68 = arith.addf %65, %67 : vector<8x128xf32>
    %c0_56 = arith.constant 0 : index
    %c0_57 = arith.constant 0 : index
    %69 = vector.load %arg9[%c0_56, %c0_57] : memref<8x128xf32, #tpu.memory_space<vmem>>, vector<8x128xf32>
    tpu.vector_store %arg9[%c0_56, %c0_57], %68 {strides = array<i32>} : memref<8x128xf32, #tpu.memory_space<vmem>>, vector<8x128xf32>,
    return
  }
  func.func @transform_0(%arg0: i32) -> (i32, i32) {
    %c0_i32 = arith.constant 0 : i32
    %c0_i32_0 = arith.constant 0 : i32
    return %arg0, %c0_i32 : i32, i32
  }
  func.func @transform_1(%arg0: i32) -> (i32, i32, i32, i32) {
    %c0_i32 = arith.constant 0 : i32
    %c0_i32_0 = arith.constant 0 : i32
    %c0_i32_1 = arith.constant 0 : i32
    %c0_i32_2 = arith.constant 0 : i32
    %c0_i32_3 = arith.constant 0 : i32
    return %c0_i32, %c0_i32_0, %c0_i32_1, %c0_i32_2 : i32, i32, i32, i32
  }
  func.func @transform_2(%arg0: i32) -> (i32, i32, i32, i32) {
    %c0_i32 = arith.constant 0 : i32
    %c0_i32_0 = arith.constant 0 : i32
    %c0_i32_1 = arith.constant 0 : i32
    %c0_i32_2 = arith.constant 0 : i32
    %c0_i32_3 = arith.constant 0 : i32
    return %c0_i32, %c0_i32_0, %c0_i32_1, %c0_i32_2 : i32, i32, i32, i32
  }
  func.func @transform_3(%arg0: i32) -> (i32, i32, i32, i32) {
    %c0_i32 = arith.constant 0 : i32
    %c0_i32_0 = arith.constant 0 : i32
    %c0_i32_1 = arith.constant 0 : i32
    %c0_i32_2 = arith.constant 0 : i32
    %c0_i32_3 = arith.constant 0 : i32
    return %c0_i32, %c0_i32_0, %c0_i32_1, %c0_i32_2 : i32, i32, i32, i32
  }
  func.func @transform_4(%arg0: i32) -> (i32, i32, i32, i32) {
    %c0_i32 = arith.constant 0 : i32
    %c0_i32_0 = arith.constant 0 : i32
    %c0_i32_1 = arith.constant 0 : i32
    %c0_i32_2 = arith.constant 0 : i32
    %c0_i32_3 = arith.constant 0 : i32
    return %c0_i32, %c0_i32_0, %c0_i32_1, %c0_i32_2 : i32, i32, i32, i32
  }
  func.func @transform_5(%arg0: i32) -> (i32, i32) {
    %c0_i32 = arith.constant 0 : i32
    %c0_i32_0 = arith.constant 0 : i32
    %c0_i32_1 = arith.constant 0 : i32
    return %c0_i32, %c0_i32_0 : i32, i32
  }
  func.func @transform_6(%arg0: i32) -> (i32, i32) {
    %c0_i32 = arith.constant 0 : i32
    %c0_i32_0 = arith.constant 0 : i32
    %c0_i32_1 = arith.constant 0 : i32
    return %c0_i32, %c0_i32_0 : i32, i32
  }
  func.func @transform_7(%arg0: i32) -> (i32, i32) {
    %c0_i32 = arith.constant 0 : i32
    %c0_i32_0 = arith.constant 0 : i32
    %c0_i32_1 = arith.constant 0 : i32
    return %c0_i32, %c0_i32_0 : i32, i32
  }
  func.func @transform_8(%arg0: i32) -> (i32, i32) {
    %c0_i32 = arith.constant 0 : i32
    %c0_i32_0 = arith.constant 0 : i32
    return %arg0, %c0_i32 : i32, i32
  }
}

</mosaic_0001>

<llo_original>
// kernel: _lambda_.1
$region0: #{_lambda_.1}
  #allocation0 [shape = 'u32[]', space=smem, size = 0x4, offset = 0x4, fixed_abs, tag = 'smem constant byte address 0x4 - core index']
  #allocation1 [shape = 'u32[144,128]{1,0:T(1,128)}', space=vmem, size = 0x12000, scoped, tag = 'internal scratch']
  %s0 = inlined_call_operand.vmem [shape: f32[16,32], index: 0, kind: input, shape index: {}]
  %s1 = inlined_call_operand.vmem [shape: f32[2,4,32,8], index: 1, kind: input, shape index: {}]
  %s2 = inlined_call_operand.vmem [shape: f32[2,4,32,8], index: 2, kind: input, shape index: {}]
  %s3 = inlined_call_operand.vmem [shape: f32[2,4,32,8], index: 3, kind: input, shape index: {}]
  %s4 = inlined_call_operand.vmem [shape: f32[2,4,8,32], index: 4, kind: input, shape index: {}]
  %s5 = inlined_call_operand.vmem [shape: f32[8,8], index: 5, kind: input, shape index: {}]
  %s6 = inlined_call_operand.vmem [shape: f32[32,128], index: 6, kind: input, shape index: {}]
  %s7 = inlined_call_operand.vmem [shape: f32[1,128], index: 7, kind: input, shape index: {}]
  %s8 = inlined_call_operand.vmem [shape: f32[16,128], index: 8, kind: output, shape index: {}]
  %s9 = sld [smem:[#allocation0]]
  $region65: #{_lambda_.1} parent=0
    _
  %s11 = ssub.s32 1, %s9
  %s12 = scalar_select 0, %s11, %s9
  loop: start=0, step=1, limit=4
  $region2: #{_lambda_.1} parent=0 // loop_pre_header
    _
  $region3: #{_lambda_.1} parent=0 // loop_header
    %s14 = sphi 0, %s18
    %p15 = scmp.ge.s32.totalorder %s14, 4
    %s24 = sphi 0, %s26
    %s27 = sphi 0, %s24
    %s28 = sphi 0, %s27
    %s44 = sphi 0, %s28
    %s48 = sphi 0, %s48
    %s50 = sphi 0, %s48
    %s51 = sphi 0, %s50
    %s65 = sphi 0, %s51
    %s69 = sphi 0, %s69
    %s71 = sphi 0, %s69
    %s72 = sphi 0, %s71
    %s86 = sphi 0, %s72
    %s90 = sphi 0, %s90
    %s92 = sphi 0, %s90
    %s93 = sphi 0, %s92
    %s107 = sphi 0, %s93
    %s111 = sphi 0, %s111
    %s113 = sphi 0, %s111
    %s114 = sphi 0, %s113
    %s128 = sphi 0, %s114
    %s132 = sphi 0, %s132
    %s134 = sphi 0, %s132
    %s135 = sphi 0, %s134
    %s149 = sphi 0, %s135
    %s153 = sphi 0, %s153
    %s155 = sphi 0, %s153
    %s156 = sphi 0, %s155
    %s170 = sphi 0, %s156
    %s174 = sphi 0, %s174
    %s176 = sphi 0, %s174
    %s177 = sphi 0, %s176
    %s191 = sphi 0, %s177
    %s197 = sphi 0, %s199
    %s200 = sphi 0, %s197
    %s201 = sphi 0, %s200
    %s217 = sphi 0, %s201
  $region4: #{_lambda_.1} parent=0 // loop_header_branch
    %17 = sbr.rel (%p15) target = $region8
  $region5: #{_lambda_.1} parent=0 // loop_body
    %s19 = ssub.s32 %s14, 1
    %s20 = ssub.s32 %s14, 2
    %s21 = sadd.s32 %s14, 1
    %s22 = ssub.s32 %s14, %s21
    %p23 = scmp.eq.s32.totalorder %s22, 0
    %s25 = sadd.s32 %s24, 1
    %s26 = scalar_select %p23, %s24, %s25
    %p29 = pneg %p23
    %p30 = scmp.eq.s32.totalorder %s14, 1
    %p31 = por %p29, %p30
    %p32 = scmp.ne.s32.totalorder %s24, %s27
    %p33 = scmp.eq.s32.totalorder %s14, 0
    %p34 = por %p32, %p33
    %p35 = scmp.ne.s32.totalorder %s24, %s27
    %p36 = scmp.eq.s32.totalorder %s19, 1
    %p37 = por %p35, %p36
    %p38 = scmp.ne.s32.totalorder %s27, %s28
    %p39 = scmp.eq.s32.totalorder %s19, 0
    %p40 = por %p38, %p39
    %p41 = scmp.ne.s32.totalorder %s27, %s28
    %p42 = scmp.eq.s32.totalorder %s20, 1
    %p43 = por %p41, %p42
    %p45 = scmp.ne.s32.totalorder %s28, %s44
    %p46 = scmp.eq.s32.totalorder %s20, 0
    %p47 = por %p45, %p46
    %s49 = sadd.s32 %s48, 1
    %p52 = scmp.eq.s32.totalorder %s14, 1
    %p53 = scmp.ne.s32.totalorder %s48, %s50
    %p54 = scmp.eq.s32.totalorder %s14, 0
    %p55 = por %p53, %p54
    %p56 = scmp.ne.s32.totalorder %s48, %s50
    %p57 = scmp.eq.s32.totalorder %s19, 1
    %p58 = por %p56, %p57
    %p59 = scmp.ne.s32.totalorder %s50, %s51
    %p60 = scmp.eq.s32.totalorder %s19, 0
    %p61 = por %p59, %p60
    %p62 = scmp.ne.s32.totalorder %s50, %s51
    %p63 = scmp.eq.s32.totalorder %s20, 1
    %p64 = por %p62, %p63
    %p66 = scmp.ne.s32.totalorder %s51, %s65
    %p67 = scmp.eq.s32.totalorder %s20, 0
    %p68 = por %p66, %p67
    %s70 = sadd.s32 %s69, 1
    %p73 = scmp.eq.s32.totalorder %s14, 1
    %p74 = scmp.ne.s32.totalorder %s69, %s71
    %p75 = scmp.eq.s32.totalorder %s14, 0
    %p76 = por %p74, %p75
    %p77 = scmp.ne.s32.totalorder %s69, %s71
    %p78 = scmp.eq.s32.totalorder %s19, 1
    %p79 = por %p77, %p78
    %p80 = scmp.ne.s32.totalorder %s71, %s72
    %p81 = scmp.eq.s32.totalorder %s19, 0
    %p82 = por %p80, %p81
    %p83 = scmp.ne.s32.totalorder %s71, %s72
    %p84 = scmp.eq.s32.totalorder %s20, 1
    %p85 = por %p83, %p84
    %p87 = scmp.ne.s32.totalorder %s72, %s86
    %p88 = scmp.eq.s32.totalorder %s20, 0
    %p89 = por %p87, %p88
    %s91 = sadd.s32 %s90, 1
    %p94 = scmp.eq.s32.totalorder %s14, 1
    %p95 = scmp.ne.s32.totalorder %s90, %s92
    %p96 = scmp.eq.s32.totalorder %s14, 0
    %p97 = por %p95, %p96
    %p98 = scmp.ne.s32.totalorder %s90, %s92
    %p99 = scmp.eq.s32.totalorder %s19, 1
    %p100 = por %p98, %p99
    %p101 = scmp.ne.s32.totalorder %s92, %s93
    %p102 = scmp.eq.s32.totalorder %s19, 0
    %p103 = por %p101, %p102
    %p104 = scmp.ne.s32.totalorder %s92, %s93
    %p105 = scmp.eq.s32.totalorder %s20, 1
    %p106 = por %p104, %p105
    %p108 = scmp.ne.s32.totalorder %s93, %s107
    %p109 = scmp.eq.s32.totalorder %s20, 0
    %p110 = por %p108, %p109
    %s112 = sadd.s32 %s111, 1
    %p115 = scmp.eq.s32.totalorder %s14, 1
    %p116 = scmp.ne.s32.totalorder %s111, %s113
    %p117 = scmp.eq.s32.totalorder %s14, 0
    %p118 = por %p116, %p117
    %p119 = scmp.ne.s32.totalorder %s111, %s113
    %p120 = scmp.eq.s32.totalorder %s19, 1
    %p121 = por %p119, %p120
    %p122 = scmp.ne.s32.totalorder %s113, %s114
    %p123 = scmp.eq.s32.totalorder %s19, 0
    %p124 = por %p122, %p123
    %p125 = scmp.ne.s32.totalorder %s113, %s114
    %p126 = scmp.eq.s32.totalorder %s20, 1
    %p127 = por %p125, %p126
    %p129 = scmp.ne.s32.totalorder %s114, %s128
    %p130 = scmp.eq.s32.totalorder %s20, 0
    %p131 = por %p129, %p130
    %s133 = sadd.s32 %s132, 1
    %p136 = scmp.eq.s32.totalorder %s14, 1
    %p137 = scmp.ne.s32.totalorder %s132, %s134
    %p138 = scmp.eq.s32.totalorder %s14, 0
    %p139 = por %p137, %p138
    %p140 = scmp.ne.s32.totalorder %s132, %s134
    %p141 = scmp.eq.s32.totalorder %s19, 1
    %p142 = por %p140, %p141
    %p143 = scmp.ne.s32.totalorder %s134, %s135
    %p144 = scmp.eq.s32.totalorder %s19, 0
    %p145 = por %p143, %p144
    %p146 = scmp.ne.s32.totalorder %s134, %s135
    %p147 = scmp.eq.s32.totalorder %s20, 1
    %p148 = por %p146, %p147
    %p150 = scmp.ne.s32.totalorder %s135, %s149
    %p151 = scmp.eq.s32.totalorder %s20, 0
    %p152 = por %p150, %p151
    %s154 = sadd.s32 %s153, 1
    %p157 = scmp.eq.s32.totalorder %s14, 1
    %p158 = scmp.ne.s32.totalorder %s153, %s155
    %p159 = scmp.eq.s32.totalorder %s14, 0
    %p160 = por %p158, %p159
    %p161 = scmp.ne.s32.totalorder %s153, %s155
    %p162 = scmp.eq.s32.totalorder %s19, 1
    %p163 = por %p161, %p162
    %p164 = scmp.ne.s32.totalorder %s155, %s156
    %p165 = scmp.eq.s32.totalorder %s19, 0
    %p166 = por %p164, %p165
    %p167 = scmp.ne.s32.totalorder %s155, %s156
    %p168 = scmp.eq.s32.totalorder %s20, 1
    %p169 = por %p167, %p168
    %p171 = scmp.ne.s32.totalorder %s156, %s170
    %p172 = scmp.eq.s32.totalorder %s20, 0
    %p173 = por %p171, %p172
    %s175 = sadd.s32 %s174, 1
    %p178 = scmp.eq.s32.totalorder %s14, 1
    %p179 = scmp.ne.s32.totalorder %s174, %s176
    %p180 = scmp.eq.s32.totalorder %s14, 0
    %p181 = por %p179, %p180
    %p182 = scmp.ne.s32.totalorder %s174, %s176
    %p183 = scmp.eq.s32.totalorder %s19, 1
    %p184 = por %p182, %p183
    %p185 = scmp.ne.s32.totalorder %s176, %s177
    %p186 = scmp.eq.s32.totalorder %s19, 0
    %p187 = por %p185, %p186
    %p188 = scmp.ne.s32.totalorder %s176, %s177
    %p189 = scmp.eq.s32.totalorder %s20, 1
    %p190 = por %p188, %p189
    %p192 = scmp.ne.s32.totalorder %s177, %s191
    %p193 = scmp.eq.s32.totalorder %s20, 0
    %p194 = por %p192, %p193
    %s195 = ssub.s32 %s14, %s21
    %p196 = scmp.eq.s32.totalorder %s195, 0
    %s198 = sadd.s32 %s197, 1
    %s199 = scalar_select %p196, %s197, %s198
    %p202 = pneg %p196
    %p203 = scmp.eq.s32.totalorder %s14, 1
    %p204 = por %p202, %p203
    %p205 = scmp.ne.s32.totalorder %s197, %s200
    %p206 = scmp.eq.s32.totalorder %s14, 0
    %p207 = por %p205, %p206
    %p208 = scmp.ne.s32.totalorder %s197, %s200
    %p209 = scmp.eq.s32.totalorder %s19, 1
    %p210 = por %p208, %p209
    %p211 = scmp.ne.s32.totalorder %s200, %s201
    %p212 = scmp.eq.s32.totalorder %s19, 0
    %p213 = por %p211, %p212
    %p214 = scmp.ne.s32.totalorder %s200, %s201
    %p215 = scmp.eq.s32.totalorder %s20, 1
    %p216 = por %p214, %p215
    %p218 = scmp.ne.s32.totalorder %s201, %s217
    %p219 = scmp.eq.s32.totalorder %s20, 0
    %p220 = por %p218, %p219
    %p221 = scmp.le.s32.totalorder 1, %s14
    %p222 = scmp.lt.s32.totalorder %s14, 3
    %p223 = pnand %p221, %p222
    %p224 = pneg %p223
    // Predicated region
    $region9: #{_lambda_.1} parent=5 // pred_check
      _
    $region10: #{_lambda_.1} parent=5 // pred_check_branch
      %226 = sbr.rel (%p223) target = $region12
    $region11: #{_lambda_.1} parent=5 // pred_region
      %s227 = ssub.s32 %s14, 1
      // Predicated region
      $region13: #{_lambda_.1} parent=11 // pred_check
        %p228 = pneg %p61
      $region14: #{_lambda_.1} parent=11 // pred_check_branch
        %230 = sbr.rel (%p228) target = $region16
      $region15: #{_lambda_.1} parent=11 // pred_region
        _
      $region16: #{_lambda_.1} parent=11 // pred_fallthru
        _
      // Predicated region
      $region17: #{_lambda_.1} parent=11 // pred_check
        %p231 = pneg %p82
      $region18: #{_lambda_.1} parent=11 // pred_check_branch
        %233 = sbr.rel (%p231) target = $region20
      $region19: #{_lambda_.1} parent=11 // pred_region
        _
      $region20: #{_lambda_.1} parent=11 // pred_fallthru
        _
      // Predicated region
      $region21: #{_lambda_.1} parent=11 // pred_check
        %p234 = pneg %p103
      $region22: #{_lambda_.1} parent=11 // pred_check_branch
        %236 = sbr.rel (%p234) target = $region24
      $region23: #{_lambda_.1} parent=11 // pred_region
        _
      $region24: #{_lambda_.1} parent=11 // pred_fallthru
        _
      // Predicated region
      $region25: #{_lambda_.1} parent=11 // pred_check
        %p237 = pneg %p124
      $region26: #{_lambda_.1} parent=11 // pred_check_branch
        %239 = sbr.rel (%p237) target = $region28
      $region27: #{_lambda_.1} parent=11 // pred_region
        _
      $region28: #{_lambda_.1} parent=11 // pred_fallthru
        _
      // Predicated region
      $region29: #{_lambda_.1} parent=11 // pred_check
        %p240 = pneg %p145
      $region30: #{_lambda_.1} parent=11 // pred_check_branch
        %242 = sbr.rel (%p240) target = $region32
      $region31: #{_lambda_.1} parent=11 // pred_region
        _
      $region32: #{_lambda_.1} parent=11 // pred_fallthru
        _
      // Predicated region
      $region33: #{_lambda_.1} parent=11 // pred_check
        %p243 = pneg %p166
      $region34: #{_lambda_.1} parent=11 // pred_check_branch
        %245 = sbr.rel (%p243) target = $region36
      $region35: #{_lambda_.1} parent=11 // pred_region
        _
      $region36: #{_lambda_.1} parent=11 // pred_fallthru
        _
      // Predicated region
      $region37: #{_lambda_.1} parent=11 // pred_check
        %p246 = pneg %p187
      $region38: #{_lambda_.1} parent=11 // pred_check_branch
        %248 = sbr.rel (%p246) target = $region40
      $region39: #{_lambda_.1} parent=11 // pred_region
        _
      $region40: #{_lambda_.1} parent=11 // pred_fallthru
        _
    $region12: #{_lambda_.1} parent=5 // pred_fallthru
      _
    %p249 = scmp.lt.s32.totalorder %s14, 2
    // Predicated region
    $region41: #{_lambda_.1} parent=5 // pred_check
      %p250 = pneg %p249
    $region42: #{_lambda_.1} parent=5 // pred_check_branch
      %252 = sbr.rel (%p250) target = $region44
    $region43: #{_lambda_.1} parent=5 // pred_region
      // Predicated region
      $region45: #{_lambda_.1} parent=43 // pred_check
        %p253 = pneg %p34
      $region46: #{_lambda_.1} parent=43 // pred_check_branch
        %255 = sbr.rel (%p253) target = $region48
      $region47: #{_lambda_.1} parent=43 // pred_region
        %p256 = scmp.lt.s32.totalorder %s14, 1
        %s257 = scalar_select %p256, %s14, 1
        %s258 = smul.addr %s257, 8
        %s259 = scalar_lea.vmem %s0, %s258
      $region48: #{_lambda_.1} parent=43 // pred_fallthru
        _
    $region44: #{_lambda_.1} parent=5 // pred_fallthru
      _
    %p260 = scmp.le.s32.totalorder 1, %s14
    %p261 = scmp.lt.s32.totalorder %s14, 3
    %p262 = pnand %p260, %p261
    %p263 = pneg %p262
    // Predicated region
    $region49: #{_lambda_.1} parent=5 // pred_check
      _
    $region50: #{_lambda_.1} parent=5 // pred_check_branch
      %265 = sbr.rel (%p262) target = $region52
    $region51: #{_lambda_.1} parent=5 // pred_region
      %s266 = ssub.s32 %s14, 1
      %p267 = scmp.lt.s32.totalorder %s19, 1
      %s268 = scalar_select %p267, %s19, 1
      %s269 = smul.addr %s268, 8
      %s270 = scalar_lea.vmem %s0, %s269
      %p271 = pneg %p40
      %p272 = pneg %p37
      %p273 = pneg %p61
      %p274 = pneg %p58
      %p275 = pneg %p82
      %p276 = pneg %p79
      %p277 = pneg %p103
      %p278 = pneg %p100
      %p279 = pneg %p124
      %p280 = pneg %p121
      %p281 = pneg %p145
      %p282 = pneg %p142
      %p283 = pneg %p166
      %p284 = pneg %p163
      %p285 = pneg %p187
      %p286 = pneg %p184
      %p287 = pneg %p213
      %p288 = pneg %p210
      %p289 = scmp.lt.s32.totalorder %s19, 1
      %s290 = scalar_select %p289, %s19, 1
      %s291 = smul.addr %s290, 8
      %s292 = scalar_lea.vmem %s8, %s291
      %p293 = scmp.lt.s32.totalorder %s19, 1
      %s294 = scalar_select %p293, %s19, 1
      %s295 = smul.addr %s294, 8
      %s296 = scalar_lea.vmem %s0, %s295
      %p297 = scmp.lt.s32.totalorder %s19, 1
      %s298 = scalar_select %p297, %s19, 1
      %s299 = smul.addr %s298, 8
      %s300 = scalar_lea.vmem %s8, %s299
      %v301 = vld [vmem:[%s296] sm:$0xff]
      %v302 = vld [vmem:[%s5] sm:$0xff]
      %v303 = vld [vmem:[%s1] sm:$0xff]
      %v304 = vld [vmem:[%s1 + $0x8] sm:$0xff]
      %v305 = vld [vmem:[%s1 + $0x10] sm:$0xff]
      %v306 = vld [vmem:[%s1 + $0x18] sm:$0xff]
      %v307 = vld [vmem:[%s1 + $0x20] sm:$0xff]
      %v308 = vld [vmem:[%s1 + $0x28] sm:$0xff]
      %v309 = vld [vmem:[%s1 + $0x30] sm:$0xff]
      %v310 = vld [vmem:[%s1 + $0x38] sm:$0xff]
      %v311 = vld [vmem:[%s1 + $0x40] sm:$0xff]
      %v312 = vld [vmem:[%s1 + $0x48] sm:$0xff]
      %v313 = vld [vmem:[%s1 + $0x50] sm:$0xff]
      %v314 = vld [vmem:[%s1 + $0x58] sm:$0xff]
      %v315 = vld [vmem:[%s1 + $0x60] sm:$0xff]
      %v316 = vld [vmem:[%s1 + $0x68] sm:$0xff]
      %v317 = vld [vmem:[%s1 + $0x70] sm:$0xff]
      %v318 = vld [vmem:[%s1 + $0x78] sm:$0xff]
      %v319 = vld [vmem:[%s2] sm:$0xff]
      %v320 = vld [vmem:[%s2 + $0x8] sm:$0xff]
      %v321 = vld [vmem:[%s2 + $0x10] sm:$0xff]
      %v322 = vld [vmem:[%s2 + $0x18] sm:$0xff]
      %v323 = vld [vmem:[%s2 + $0x20] sm:$0xff]
      %v324 = vld [vmem:[%s2 + $0x28] sm:$0xff]
      %v325 = vld [vmem:[%s2 + $0x30] sm:$0xff]
      %v326 = vld [vmem:[%s2 + $0x38] sm:$0xff]
      %v327 = vld [vmem:[%s2 + $0x40] sm:$0xff]
      %v328 = vld [vmem:[%s2 + $0x48] sm:$0xff]
      %v329 = vld [vmem:[%s2 + $0x50] sm:$0xff]
      %v330 = vld [vmem:[%s2 + $0x58] sm:$0xff]
      %v331 = vld [vmem:[%s2 + $0x60] sm:$0xff]
      %v332 = vld [vmem:[%s2 + $0x68] sm:$0xff]
      %v333 = vld [vmem:[%s2 + $0x70] sm:$0xff]
      %v334 = vld [vmem:[%s2 + $0x78] sm:$0xff]
      %v335 = vld [vmem:[%s3] sm:$0xff]
      %v336 = vld [vmem:[%s3 + $0x8] sm:$0xff]
      %v337 = vld [vmem:[%s3 + $0x10] sm:$0xff]
      %v338 = vld [vmem:[%s3 + $0x18] sm:$0xff]
      %v339 = vld [vmem:[%s3 + $0x20] sm:$0xff]
      %v340 = vld [vmem:[%s3 + $0x28] sm:$0xff]
      %v341 = vld [vmem:[%s3 + $0x30] sm:$0xff]
      %v342 = vld [vmem:[%s3 + $0x38] sm:$0xff]
      %v343 = vld [vmem:[%s3 + $0x40] sm:$0xff]
      %v344 = vld [vmem:[%s3 + $0x48] sm:$0xff]
      %v345 = vld [vmem:[%s3 + $0x50] sm:$0xff]
      %v346 = vld [vmem:[%s3 + $0x58] sm:$0xff]
      %v347 = vld [vmem:[%s3 + $0x60] sm:$0xff]
      %v348 = vld [vmem:[%s3 + $0x68] sm:$0xff]
      %v349 = vld [vmem:[%s3 + $0x70] sm:$0xff]
      %v350 = vld [vmem:[%s3 + $0x78] sm:$0xff]
      %v351 = vld [vmem:[%s4] sm:$0xff]
      %v352 = vld [vmem:[%s4 + $0x8] sm:$0xff]
      %v353 = vld [vmem:[%s4 + $0x10] sm:$0xff]
      %v354 = vld [vmem:[%s4 + $0x18] sm:$0xff]
      %vm355 = vcmask 261120
      %v357 = vsel %vm355, %v301, 0
      %359 = vmatprep.subr.mxu0 0.0
      %360 = vmatpush1.msra.mxu0 %v303
      %361 = vmatprep.subr.mxu0 0.0
      %362 = vmatpush1.msra.mxu0 %v304
      %363 = vmatprep.subr.mxu0 0.0
      %364 = vmatpush1.msra.mxu0 %v305
      %365 = vmatprep.subr.mxu0 0.0
      %366 = vmatpush1.msra.mxu0 %v306
      %367 = vmatprep.subr.mxu0 0.0
      %368 = vmatpush1.msra.mxu0 0.0
      %369 = vmatprep.subr.mxu0 0.0
      %370 = vmatpush1.msra.mxu0 0.0
      %371 = vmatprep.subr.mxu0 0.0
      %372 = vmatpush1.msra.mxu0 0.0
      %373 = vmatprep.subr.mxu0 0.0
      %374 = vmatpush1.msra.mxu0 0.0
      %375 = vmatprep.subr.mxu0 0.0
      %376 = vmatpush1.msra.mxu0 0.0
      %377 = vmatprep.subr.mxu0 0.0
      %378 = vmatpush1.msra.mxu0 0.0
      %379 = vmatprep.subr.mxu0 0.0
      %380 = vmatpush1.msra.mxu0 0.0
      %381 = vmatprep.subr.mxu0 0.0
      %382 = vmatpush1.msra.mxu0 0.0
      %383 = vmatprep.subr.mxu0 0.0
      %384 = vmatpush1.msra.mxu0 0.0
      %385 = vmatprep.subr.mxu0 0.0
      %386 = vmatpush1.msra.mxu0 0.0
      %387 = vmatprep.subr.mxu0 0.0
      %388 = vmatpush1.msra.mxu0 0.0
      %389 = vmatprep.subr.mxu0 0.0
      %390 = vmatpush1.msra.mxu0 0.0
      %391 = vmatprep.subr.mxu0 0.0
      %392 = vmatpush1.msra.mxu0 0.0
      %393 = vmatprep.subr.mxu0 0.0
      %394 = vmatpush1.msra.mxu0 0.0
      %395 = vmatprep.subr.mxu0 0.0
      %396 = vmatpush1.msra.mxu0 0.0
      %397 = vmatprep.subr.mxu0 0.0
      %398 = vmatpush1.msra.mxu0 0.0
      %399 = vmatprep.subr.mxu0 0.0
      %400 = vmatpush1.msra.mxu0 0.0
      %401 = vmatprep.subr.mxu0 0.0
      %402 = vmatpush1.msra.mxu0 0.0
      %403 = vmatprep.subr.mxu0 0.0
      %404 = vmatpush1.msra.mxu0 0.0
      %405 = vmatprep.subr.mxu0 0.0
      %406 = vmatpush1.msra.mxu0 0.0
      %407 = vmatprep.subr.mxu0 0.0
      %408 = vmatpush1.msra.mxu0 0.0
      %409 = vmatprep.subr.mxu0 0.0
      %410 = vmatpush1.msra.mxu0 0.0
      %411 = vmatprep.subr.mxu0 0.0
      %412 = vmatpush1.msra.mxu0 0.0
      %413 = vmatprep.subr.mxu0 0.0
      %414 = vmatpush1.msra.mxu0 0.0
      %415 = vmatprep.subr.mxu0 0.0
      %416 = vmatpush1.msra.mxu0 0.0
      %417 = vmatprep.subr.mxu0 0.0
      %418 = vmatpush1.msra.mxu0 0.0
      %419 = vmatprep.subr.mxu0 0.0
      %420 = vmatpush1.msra.mxu0 0.0
      %421 = vmatprep.subr.mxu0 0.0
      %422 = vmatpush1.msra.mxu0 0.0
      %423 = vmatprep.mubr.f32.mxu0 0.0
      %424 = vmatmul.mubr.f32.gmra.mrb[0].mxu0 %v357
      %v425 = vpop.f32.mrb[0].mxu0
      %v426 = vadd.f32 0.0, %v425
      %v427 = vpop.f32.mrb[0].mxu0
      %428 = vdwg.mxu0
      %429 = vmatprep.subr.mxu0 0.0
      %430 = vmatpush1.msra.mxu0 %v307
      %431 = vmatprep.subr.mxu0 0.0
      %432 = vmatpush1.msra.mxu0 %v308
      %433 = vmatprep.subr.mxu0 0.0
      %434 = vmatpush1.msra.mxu0 %v309
      %435 = vmatprep.subr.mxu0 0.0
      %436 = vmatpush1.msra.mxu0 %v310
      %437 = vmatprep.subr.mxu0 0.0
      %438 = vmatpush1.msra.mxu0 0.0
      %439 = vmatprep.subr.mxu0 0.0
      %440 = vmatpush1.msra.mxu0 0.0
      %441 = vmatprep.subr.mxu0 0.0
      %442 = vmatpush1.msra.mxu0 0.0
      %443 = vmatprep.subr.mxu0 0.0
      %444 = vmatpush1.msra.mxu0 0.0
      %445 = vmatprep.subr.mxu0 0.0
      %446 = vmatpush1.msra.mxu0 0.0
      %447 = vmatprep.subr.mxu0 0.0
      %448 = vmatpush1.msra.mxu0 0.0
      %449 = vmatprep.subr.mxu0 0.0
      %450 = vmatpush1.msra.mxu0 0.0
      %451 = vmatprep.subr.mxu0 0.0
      %452 = vmatpush1.msra.mxu0 0.0
      %453 = vmatprep.subr.mxu0 0.0
      %454 = vmatpush1.msra.mxu0 0.0
      %455 = vmatprep.subr.mxu0 0.0
      %456 = vmatpush1.msra.mxu0 0.0
      %457 = vmatprep.subr.mxu0 0.0
      %458 = vmatpush1.msra.mxu0 0.0
      %459 = vmatprep.subr.mxu0 0.0
      %460 = vmatpush1.msra.mxu0 0.0
      %461 = vmatprep.subr.mxu0 0.0
      %462 = vmatpush1.msra.mxu0 0.0
      %463 = vmatprep.subr.mxu0 0.0
      %464 = vmatpush1.msra.mxu0 0.0
      %465 = vmatprep.subr.mxu0 0.0
      %466 = vmatpush1.msra.mxu0 0.0
      %467 = vmatprep.subr.mxu0 0.0
      %468 = vmatpush1.msra.mxu0 0.0
      %469 = vmatprep.subr.mxu0 0.0
      %470 = vmatpush1.msra.mxu0 0.0
      %471 = vmatprep.subr.mxu0 0.0
      %472 = vmatpush1.msra.mxu0 0.0
      %473 = vmatprep.subr.mxu0 0.0
      %474 = vmatpush1.msra.mxu0 0.0
      %475 = vmatprep.subr.mxu0 0.0
      %476 = vmatpush1.msra.mxu0 0.0
      %477 = vmatprep.subr.mxu0 0.0
      %478 = vmatpush1.msra.mxu0 0.0
      %479 = vmatprep.subr.mxu0 0.0
      %480 = vmatpush1.msra.mxu0 0.0
      %481 = vmatprep.subr.mxu0 0.0
      %482 = vmatpush1.msra.mxu0 0.0
      %483 = vmatprep.subr.mxu0 0.0
      %484 = vmatpush1.msra.mxu0 0.0
      %485 = vmatprep.subr.mxu0 0.0
      %486 = vmatpush1.msra.mxu0 0.0
      %487 = vmatprep.subr.mxu0 0.0
      %488 = vmatpush1.msra.mxu0 0.0
      %489 = vmatprep.subr.mxu0 0.0
      %490 = vmatpush1.msra.mxu0 0.0
      %491 = vmatprep.subr.mxu0 0.0
      %492 = vmatpush1.msra.mxu0 0.0
      %493 = vmatprep.mubr.f32.mxu0 0.0
      %494 = vmatmul.mubr.f32.gmra.mrb[0].mxu0 %v357
      %v495 = vpop.f32.mrb[0].mxu0
      %v496 = vadd.f32 0.0, %v495
      %v497 = vpop.f32.mrb[0].mxu0
      %498 = vdwg.mxu0
      %499 = vmatprep.subr.mxu0 0.0
      %500 = vmatpush1.msra.mxu0 %v311
      %501 = vmatprep.subr.mxu0 0.0
      %502 = vmatpush1.msra.mxu0 %v312
      %503 = vmatprep.subr.mxu0 0.0
      %504 = vmatpush1.msra.mxu0 %v313
      %505 = vmatprep.subr.mxu0 0.0
      %506 = vmatpush1.msra.mxu0 %v314
      %507 = vmatprep.subr.mxu0 0.0
      %508 = vmatpush1.msra.mxu0 0.0
      %509 = vmatprep.subr.mxu0 0.0
      %510 = vmatpush1.msra.mxu0 0.0
      %511 = vmatprep.subr.mxu0 0.0
      %512 = vmatpush1.msra.mxu0 0.0
      %513 = vmatprep.subr.mxu0 0.0
      %514 = vmatpush1.msra.mxu0 0.0
      %515 = vmatprep.subr.mxu0 0.0
      %516 = vmatpush1.msra.mxu0 0.0
      %517 = vmatprep.subr.mxu0 0.0
      %518 = vmatpush1.msra.mxu0 0.0
      %519 = vmatprep.subr.mxu0 0.0
      %520 = vmatpush1.msra.mxu0 0.0
      %521 = vmatprep.subr.mxu0 0.0
      %522 = vmatpush1.msra.mxu0 0.0
      %523 = vmatprep.subr.mxu0 0.0
      %524 = vmatpush1.msra.mxu0 0.0
      %525 = vmatprep.subr.mxu0 0.0
      %526 = vmatpush1.msra.mxu0 0.0
      %527 = vmatprep.subr.mxu0 0.0
      %528 = vmatpush1.msra.mxu0 0.0
      %529 = vmatprep.subr.mxu0 0.0
      %530 = vmatpush1.msra.mxu0 0.0
      %531 = vmatprep.subr.mxu0 0.0
      %532 = vmatpush1.msra.mxu0 0.0
      %533 = vmatprep.subr.mxu0 0.0
      %534 = vmatpush1.msra.mxu0 0.0
      %535 = vmatprep.subr.mxu0 0.0
      %536 = vmatpush1.msra.mxu0 0.0
      %537 = vmatprep.subr.mxu0 0.0
      %538 = vmatpush1.msra.mxu0 0.0
      %539 = vmatprep.subr.mxu0 0.0
      %540 = vmatpush1.msra.mxu0 0.0
      %541 = vmatprep.subr.mxu0 0.0
      %542 = vmatpush1.msra.mxu0 0.0
      %543 = vmatprep.subr.mxu0 0.0
      %544 = vmatpush1.msra.mxu0 0.0
      %545 = vmatprep.subr.mxu0 0.0
      %546 = vmatpush1.msra.mxu0 0.0
      %547 = vmatprep.subr.mxu0 0.0
      %548 = vmatpush1.msra.mxu0 0.0
      %549 = vmatprep.subr.mxu0 0.0
      %550 = vmatpush1.msra.mxu0 0.0
      %551 = vmatprep.subr.mxu0 0.0
      %552 = vmatpush1.msra.mxu0 0.0
      %553 = vmatprep.subr.mxu0 0.0
      %554 = vmatpush1.msra.mxu0 0.0
      %555 = vmatprep.subr.mxu0 0.0
      %556 = vmatpush1.msra.mxu0 0.0
      %557 = vmatprep.subr.mxu0 0.0
      %558 = vmatpush1.msra.mxu0 0.0
      %559 = vmatprep.subr.mxu0 0.0
      %560 = vmatpush1.msra.mxu0 0.0
      %561 = vmatprep.subr.mxu0 0.0
      %562 = vmatpush1.msra.mxu0 0.0
      %563 = vmatprep.mubr.f32.mxu0 0.0
      %564 = vmatmul.mubr.f32.gmra.mrb[0].mxu0 %v357
      %v565 = vpop.f32.mrb[0].mxu0
      %v566 = vadd.f32 0.0, %v565
      %v567 = vpop.f32.mrb[0].mxu0
      %568 = vdwg.mxu0
      %569 = vmatprep.subr.mxu0 0.0
      %570 = vmatpush1.msra.mxu0 %v315
      %571 = vmatprep.subr.mxu0 0.0
      %572 = vmatpush1.msra.mxu0 %v316
      %573 = vmatprep.subr.mxu0 0.0
      %574 = vmatpush1.msra.mxu0 %v317
      %575 = vmatprep.subr.mxu0 0.0
      %576 = vmatpush1.msra.mxu0 %v318
      %577 = vmatprep.subr.mxu0 0.0
      %578 = vmatpush1.msra.mxu0 0.0
      %579 = vmatprep.subr.mxu0 0.0
      %580 = vmatpush1.msra.mxu0 0.0
      %581 = vmatprep.subr.mxu0 0.0
      %582 = vmatpush1.msra.mxu0 0.0
      %583 = vmatprep.subr.mxu0 0.0
      %584 = vmatpush1.msra.mxu0 0.0
      %585 = vmatprep.subr.mxu0 0.0
      %586 = vmatpush1.msra.mxu0 0.0
      %587 = vmatprep.subr.mxu0 0.0
      %588 = vmatpush1.msra.mxu0 0.0
      %589 = vmatprep.subr.mxu0 0.0
      %590 = vmatpush1.msra.mxu0 0.0
      %591 = vmatprep.subr.mxu0 0.0
      %592 = vmatpush1.msra.mxu0 0.0
      %593 = vmatprep.subr.mxu0 0.0
      %594 = vmatpush1.msra.mxu0 0.0
      %595 = vmatprep.subr.mxu0 0.0
      %596 = vmatpush1.msra.mxu0 0.0
      %597 = vmatprep.subr.mxu0 0.0
      %598 = vmatpush1.msra.mxu0 0.0
      %599 = vmatprep.subr.mxu0 0.0
      %600 = vmatpush1.msra.mxu0 0.0
      %601 = vmatprep.subr.mxu0 0.0
      %602 = vmatpush1.msra.mxu0 0.0
      %603 = vmatprep.subr.mxu0 0.0
      %604 = vmatpush1.msra.mxu0 0.0
      %605 = vmatprep.subr.mxu0 0.0
      %606 = vmatpush1.msra.mxu0 0.0
      %607 = vmatprep.subr.mxu0 0.0
      %608 = vmatpush1.msra.mxu0 0.0
      %609 = vmatprep.subr.mxu0 0.0
      %610 = vmatpush1.msra.mxu0 0.0
      %611 = vmatprep.subr.mxu0 0.0
      %612 = vmatpush1.msra.mxu0 0.0
      %613 = vmatprep.subr.mxu0 0.0
      %614 = vmatpush1.msra.mxu0 0.0
      %615 = vmatprep.subr.mxu0 0.0
      %616 = vmatpush1.msra.mxu0 0.0
      %617 = vmatprep.subr.mxu0 0.0
      %618 = vmatpush1.msra.mxu0 0.0
      %619 = vmatprep.subr.mxu0 0.0
      %620 = vmatpush1.msra.mxu0 0.0
      %621 = vmatprep.subr.mxu0 0.0
      %622 = vmatpush1.msra.mxu0 0.0
      %623 = vmatprep.subr.mxu0 0.0
      %624 = vmatpush1.msra.mxu0 0.0
      %625 = vmatprep.subr.mxu0 0.0
      %626 = vmatpush1.msra.mxu0 0.0
      %627 = vmatprep.subr.mxu0 0.0
      %628 = vmatpush1.msra.mxu0 0.0
      %629 = vmatprep.subr.mxu0 0.0
      %630 = vmatpush1.msra.mxu0 0.0
      %631 = vmatprep.subr.mxu0 0.0
      %632 = vmatpush1.msra.mxu0 0.0
      %633 = vmatprep.mubr.f32.mxu0 0.0
      %634 = vmatmul.mubr.f32.gmra.mrb[0].mxu0 %v357
      %v635 = vpop.f32.mrb[0].mxu0
      %v636 = vadd.f32 0.0, %v635
      %v637 = vpop.f32.mrb[0].mxu0
      %638 = vdwg.mxu0
      %639 = vmatprep.subr.mxu0 0.0
      %640 = vmatpush1.msra.mxu0 %v319
      %641 = vmatprep.subr.mxu0 0.0
      %642 = vmatpush1.msra.mxu0 %v320
      %643 = vmatprep.subr.mxu0 0.0
      %644 = vmatpush1.msra.mxu0 %v321
      %645 = vmatprep.subr.mxu0 0.0
      %646 = vmatpush1.msra.mxu0 %v322
      %647 = vmatprep.subr.mxu0 0.0
      %648 = vmatpush1.msra.mxu0 0.0
      %649 = vmatprep.subr.mxu0 0.0
      %650 = vmatpush1.msra.mxu0 0.0
      %651 = vmatprep.subr.mxu0 0.0
      %652 = vmatpush1.msra.mxu0 0.0
      %653 = vmatprep.subr.mxu0 0.0
      %654 = vmatpush1.msra.mxu0 0.0
      %655 = vmatprep.subr.mxu0 0.0
      %656 = vmatpush1.msra.mxu0 0.0
      %657 = vmatprep.subr.mxu0 0.0
      %658 = vmatpush1.msra.mxu0 0.0
      %659 = vmatprep.subr.mxu0 0.0
      %660 = vmatpush1.msra.mxu0 0.0
      %661 = vmatprep.subr.mxu0 0.0
      %662 = vmatpush1.msra.mxu0 0.0
      %663 = vmatprep.subr.mxu0 0.0
      %664 = vmatpush1.msra.mxu0 0.0
      %665 = vmatprep.subr.mxu0 0.0
      %666 = vmatpush1.msra.mxu0 0.0
      %667 = vmatprep.subr.mxu0 0.0
      %668 = vmatpush1.msra.mxu0 0.0
      %669 = vmatprep.subr.mxu0 0.0
      %670 = vmatpush1.msra.mxu0 0.0
      %671 = vmatprep.subr.mxu0 0.0
      %672 = vmatpush1.msra.mxu0 0.0
      %673 = vmatprep.subr.mxu0 0.0
      %674 = vmatpush1.msra.mxu0 0.0
      %675 = vmatprep.subr.mxu0 0.0
      %676 = vmatpush1.msra.mxu0 0.0
      %677 = vmatprep.subr.mxu0 0.0
      %678 = vmatpush1.msra.mxu0 0.0
      %679 = vmatprep.subr.mxu0 0.0
      %680 = vmatpush1.msra.mxu0 0.0
      %681 = vmatprep.subr.mxu0 0.0
      %682 = vmatpush1.msra.mxu0 0.0
      %683 = vmatprep.subr.mxu0 0.0
      %684 = vmatpush1.msra.mxu0 0.0
      %685 = vmatprep.subr.mxu0 0.0
      %686 = vmatpush1.msra.mxu0 0.0
      %687 = vmatprep.subr.mxu0 0.0
      %688 = vmatpush1.msra.mxu0 0.0
      %689 = vmatprep.subr.mxu0 0.0
      %690 = vmatpush1.msra.mxu0 0.0
      %691 = vmatprep.subr.mxu0 0.0
      %692 = vmatpush1.msra.mxu0 0.0
      %693 = vmatprep.subr.mxu0 0.0
      %694 = vmatpush1.msra.mxu0 0.0
      %695 = vmatprep.subr.mxu0 0.0
      %696 = vmatpush1.msra.mxu0 0.0
      %697 = vmatprep.subr.mxu0 0.0
      %698 = vmatpush1.msra.mxu0 0.0
      %699 = vmatprep.subr.mxu0 0.0
      %700 = vmatpush1.msra.mxu0 0.0
      %701 = vmatprep.subr.mxu0 0.0
      %702 = vmatpush1.msra.mxu0 0.0
      %703 = vmatprep.mubr.f32.mxu0 0.0
      %704 = vmatmul.mubr.f32.gmra.mrb[0].mxu0 %v357
      %v705 = vpop.f32.mrb[0].mxu0
      %v706 = vadd.f32 0.0, %v705
      %v707 = vpop.f32.mrb[0].mxu0
      %708 = vdwg.mxu0
      %709 = vmatprep.subr.mxu0 0.0
      %710 = vmatpush1.msra.mxu0 %v323
      %711 = vmatprep.subr.mxu0 0.0
      %712 = vmatpush1.msra.mxu0 %v324
      %713 = vmatprep.subr.mxu0 0.0
      %714 = vmatpush1.msra.mxu0 %v325
      %715 = vmatprep.subr.mxu0 0.0
      %716 = vmatpush1.msra.mxu0 %v326
      %717 = vmatprep.subr.mxu0 0.0
      %718 = vmatpush1.msra.mxu0 0.0
      %719 = vmatprep.subr.mxu0 0.0
      %720 = vmatpush1.msra.mxu0 0.0
      %721 = vmatprep.subr.mxu0 0.0
      %722 = vmatpush1.msra.mxu0 0.0
      %723 = vmatprep.subr.mxu0 0.0
      %724 = vmatpush1.msra.mxu0 0.0
      %725 = vmatprep.subr.mxu0 0.0
      %726 = vmatpush1.msra.mxu0 0.0
      %727 = vmatprep.subr.mxu0 0.0
      %728 = vmatpush1.msra.mxu0 0.0
      %729 = vmatprep.subr.mxu0 0.0
      %730 = vmatpush1.msra.mxu0 0.0
      %731 = vmatprep.subr.mxu0 0.0
      %732 = vmatpush1.msra.mxu0 0.0
      %733 = vmatprep.subr.mxu0 0.0
      %734 = vmatpush1.msra.mxu0 0.0
      %735 = vmatprep.subr.mxu0 0.0
      %736 = vmatpush1.msra.mxu0 0.0
      %737 = vmatprep.subr.mxu0 0.0
      %738 = vmatpush1.msra.mxu0 0.0
      %739 = vmatprep.subr.mxu0 0.0
      %740 = vmatpush1.msra.mxu0 0.0
      %741 = vmatprep.subr.mxu0 0.0
      %742 = vmatpush1.msra.mxu0 0.0
      %743 = vmatprep.subr.mxu0 0.0
      %744 = vmatpush1.msra.mxu0 0.0
      %745 = vmatprep.subr.mxu0 0.0
      %746 = vmatpush1.msra.mxu0 0.0
      %747 = vmatprep.subr.mxu0 0.0
      %748 = vmatpush1.msra.mxu0 0.0
      %749 = vmatprep.subr.mxu0 0.0
      %750 = vmatpush1.msra.mxu0 0.0
      %751 = vmatprep.subr.mxu0 0.0
      %752 = vmatpush1.msra.mxu0 0.0
      %753 = vmatprep.subr.mxu0 0.0
      %754 = vmatpush1.msra.mxu0 0.0
      %755 = vmatprep.subr.mxu0 0.0
      %756 = vmatpush1.msra.mxu0 0.0
      %757 = vmatprep.subr.mxu0 0.0
      %758 = vmatpush1.msra.mxu0 0.0
      %759 = vmatprep.subr.mxu0 0.0
      %760 = vmatpush1.msra.mxu0 0.0
      %761 = vmatprep.subr.mxu0 0.0
      %762 = vmatpush1.msra.mxu0 0.0
      %763 = vmatprep.subr.mxu0 0.0
      %764 = vmatpush1.msra.mxu0 0.0
      %765 = vmatprep.subr.mxu0 0.0
      %766 = vmatpush1.msra.mxu0 0.0
      %767 = vmatprep.subr.mxu0 0.0
      %768 = vmatpush1.msra.mxu0 0.0
      %769 = vmatprep.subr.mxu0 0.0
      %770 = vmatpush1.msra.mxu0 0.0
      %771 = vmatprep.subr.mxu0 0.0
      %772 = vmatpush1.msra.mxu0 0.0
      %773 = vmatprep.mubr.f32.mxu0 0.0
      %774 = vmatmul.mubr.f32.gmra.mrb[0].mxu0 %v357
      %v775 = vpop.f32.mrb[0].mxu0
      %v776 = vadd.f32 0.0, %v775
      %v777 = vpop.f32.mrb[0].mxu0
      %778 = vdwg.mxu0
      %779 = vmatprep.subr.mxu0 0.0
      %780 = vmatpush1.msra.mxu0 %v327
      %781 = vmatprep.subr.mxu0 0.0
      %782 = vmatpush1.msra.mxu0 %v328
      %783 = vmatprep.subr.mxu0 0.0
      %784 = vmatpush1.msra.mxu0 %v329
      %785 = vmatprep.subr.mxu0 0.0
      %786 = vmatpush1.msra.mxu0 %v330
      %787 = vmatprep.subr.mxu0 0.0
      %788 = vmatpush1.msra.mxu0 0.0
      %789 = vmatprep.subr.mxu0 0.0
      %790 = vmatpush1.msra.mxu0 0.0
      %791 = vmatprep.subr.mxu0 0.0
      %792 = vmatpush1.msra.mxu0 0.0
      %793 = vmatprep.subr.mxu0 0.0
      %794 = vmatpush1.msra.mxu0 0.0
      %795 = vmatprep.subr.mxu0 0.0
      %796 = vmatpush1.msra.mxu0 0.0
      %797 = vmatprep.subr.mxu0 0.0
      %798 = vmatpush1.msra.mxu0 0.0
      %799 = vmatprep.subr.mxu0 0.0
      %800 = vmatpush1.msra.mxu0 0.0
      %801 = vmatprep.subr.mxu0 0.0
      %802 = vmatpush1.msra.mxu0 0.0
      %803 = vmatprep.subr.mxu0 0.0
      %804 = vmatpush1.msra.mxu0 0.0
      %805 = vmatprep.subr.mxu0 0.0
      %806 = vmatpush1.msra.mxu0 0.0
      %807 = vmatprep.subr.mxu0 0.0
      %808 = vmatpush1.msra.mxu0 0.0
      %809 = vmatprep.subr.mxu0 0.0
      %810 = vmatpush1.msra.mxu0 0.0
      %811 = vmatprep.subr.mxu0 0.0
      %812 = vmatpush1.msra.mxu0 0.0
      %813 = vmatprep.subr.mxu0 0.0
      %814 = vmatpush1.msra.mxu0 0.0
      %815 = vmatprep.subr.mxu0 0.0
      %816 = vmatpush1.msra.mxu0 0.0
      %817 = vmatprep.subr.mxu0 0.0
      %818 = vmatpush1.msra.mxu0 0.0
      %819 = vmatprep.subr.mxu0 0.0
      %820 = vmatpush1.msra.mxu0 0.0
      %821 = vmatprep.subr.mxu0 0.0
      %822 = vmatpush1.msra.mxu0 0.0
      %823 = vmatprep.subr.mxu0 0.0
      %824 = vmatpush1.msra.mxu0 0.0
      %825 = vmatprep.subr.mxu0 0.0
      %826 = vmatpush1.msra.mxu0 0.0
      %827 = vmatprep.subr.mxu0 0.0
      %828 = vmatpush1.msra.mxu0 0.0
      %829 = vmatprep.subr.mxu0 0.0
      %830 = vmatpush1.msra.mxu0 0.0
      %831 = vmatprep.subr.mxu0 0.0
      %832 = vmatpush1.msra.mxu0 0.0
      %833 = vmatprep.subr.mxu0 0.0
      %834 = vmatpush1.msra.mxu0 0.0
      %835 = vmatprep.subr.mxu0 0.0
      %836 = vmatpush1.msra.mxu0 0.0
      %837 = vmatprep.subr.mxu0 0.0
      %838 = vmatpush1.msra.mxu0 0.0
      %839 = vmatprep.subr.mxu0 0.0
      %840 = vmatpush1.msra.mxu0 0.0
      %841 = vmatprep.subr.mxu0 0.0
      %842 = vmatpush1.msra.mxu0 0.0
      %843 = vmatprep.mubr.f32.mxu0 0.0
      %844 = vmatmul.mubr.f32.gmra.mrb[0].mxu0 %v357
      %v845 = vpop.f32.mrb[0].mxu0
      %v846 = vadd.f32 0.0, %v845
      %v847 = vpop.f32.mrb[0].mxu0
      %848 = vdwg.mxu0
      %849 = vmatprep.subr.mxu0 0.0
      %850 = vmatpush1.msra.mxu0 %v331
      %851 = vmatprep.subr.mxu0 0.0
      %852 = vmatpush1.msra.mxu0 %v332
      %853 = vmatprep.subr.mxu0 0.0
      %854 = vmatpush1.msra.mxu0 %v333
      %855 = vmatprep.subr.mxu0 0.0
      %856 = vmatpush1.msra.mxu0 %v334
      %857 = vmatprep.subr.mxu0 0.0
      %858 = vmatpush1.msra.mxu0 0.0
      %859 = vmatprep.subr.mxu0 0.0
      %860 = vmatpush1.msra.mxu0 0.0
      %861 = vmatprep.subr.mxu0 0.0
      %862 = vmatpush1.msra.mxu0 0.0
      %863 = vmatprep.subr.mxu0 0.0
      %864 = vmatpush1.msra.mxu0 0.0
      %865 = vmatprep.subr.mxu0 0.0
      %866 = vmatpush1.msra.mxu0 0.0
      %867 = vmatprep.subr.mxu0 0.0
      %868 = vmatpush1.msra.mxu0 0.0
      %869 = vmatprep.subr.mxu0 0.0
      %870 = vmatpush1.msra.mxu0 0.0
      %871 = vmatprep.subr.mxu0 0.0
      %872 = vmatpush1.msra.mxu0 0.0
      %873 = vmatprep.subr.mxu0 0.0
      %874 = vmatpush1.msra.mxu0 0.0
      %875 = vmatprep.subr.mxu0 0.0
      %876 = vmatpush1.msra.mxu0 0.0
      %877 = vmatprep.subr.mxu0 0.0
      %878 = vmatpush1.msra.mxu0 0.0
      %879 = vmatprep.subr.mxu0 0.0
      %880 = vmatpush1.msra.mxu0 0.0
      %881 = vmatprep.subr.mxu0 0.0
      %882 = vmatpush1.msra.mxu0 0.0
      %883 = vmatprep.subr.mxu0 0.0
      %884 = vmatpush1.msra.mxu0 0.0
      %885 = vmatprep.subr.mxu0 0.0
      %886 = vmatpush1.msra.mxu0 0.0
      %887 = vmatprep.subr.mxu0 0.0
      %888 = vmatpush1.msra.mxu0 0.0
      %889 = vmatprep.subr.mxu0 0.0
      %890 = vmatpush1.msra.mxu0 0.0
      %891 = vmatprep.subr.mxu0 0.0
      %892 = vmatpush1.msra.mxu0 0.0
      %893 = vmatprep.subr.mxu0 0.0
      %894 = vmatpush1.msra.mxu0 0.0
      %895 = vmatprep.subr.mxu0 0.0
      %896 = vmatpush1.msra.mxu0 0.0
      %897 = vmatprep.subr.mxu0 0.0
      %898 = vmatpush1.msra.mxu0 0.0
      %899 = vmatprep.subr.mxu0 0.0
      %900 = vmatpush1.msra.mxu0 0.0
      %901 = vmatprep.subr.mxu0 0.0
      %902 = vmatpush1.msra.mxu0 0.0
      %903 = vmatprep.subr.mxu0 0.0
      %904 = vmatpush1.msra.mxu0 0.0
      %905 = vmatprep.subr.mxu0 0.0
      %906 = vmatpush1.msra.mxu0 0.0
      %907 = vmatprep.subr.mxu0 0.0
      %908 = vmatpush1.msra.mxu0 0.0
      %909 = vmatprep.subr.mxu0 0.0
      %910 = vmatpush1.msra.mxu0 0.0
      %911 = vmatprep.subr.mxu0 0.0
      %912 = vmatpush1.msra.mxu0 0.0
      %913 = vmatprep.mubr.f32.mxu0 0.0
      %914 = vmatmul.mubr.f32.gmra.mrb[0].mxu0 %v357
      %v915 = vpop.f32.mrb[0].mxu0
      %v916 = vadd.f32 0.0, %v915
      %v917 = vpop.f32.mrb[0].mxu0
      %918 = vdwg.mxu0
      %919 = vmatprep.subr.mxu0 0.0
      %920 = vmatpush1.msra.mxu0 %v335
      %921 = vmatprep.subr.mxu0 0.0
      %922 = vmatpush1.msra.mxu0 %v336
      %923 = vmatprep.subr.mxu0 0.0
      %924 = vmatpush1.msra.mxu0 %v337
      %925 = vmatprep.subr.mxu0 0.0
      %926 = vmatpush1.msra.mxu0 %v338
      %927 = vmatprep.subr.mxu0 0.0
      %928 = vmatpush1.msra.mxu0 0.0
      %929 = vmatprep.subr.mxu0 0.0
      %930 = vmatpush1.msra.mxu0 0.0
      %931 = vmatprep.subr.mxu0 0.0
      %932 = vmatpush1.msra.mxu0 0.0
      %933 = vmatprep.subr.mxu0 0.0
      %934 = vmatpush1.msra.mxu0 0.0
      %935 = vmatprep.subr.mxu0 0.0
      %936 = vmatpush1.msra.mxu0 0.0
      %937 = vmatprep.subr.mxu0 0.0
      %938 = vmatpush1.msra.mxu0 0.0
      %939 = vmatprep.subr.mxu0 0.0
      %940 = vmatpush1.msra.mxu0 0.0
      %941 = vmatprep.subr.mxu0 0.0
      %942 = vmatpush1.msra.mxu0 0.0
      %943 = vmatprep.subr.mxu0 0.0
      %944 = vmatpush1.msra.mxu0 0.0
      %945 = vmatprep.subr.mxu0 0.0
      %946 = vmatpush1.msra.mxu0 0.0
      %947 = vmatprep.subr.mxu0 0.0
      %948 = vmatpush1.msra.mxu0 0.0
      %949 = vmatprep.subr.mxu0 0.0
      %950 = vmatpush1.msra.mxu0 0.0
      %951 = vmatprep.subr.mxu0 0.0
      %952 = vmatpush1.msra.mxu0 0.0
      %953 = vmatprep.subr.mxu0 0.0
      %954 = vmatpush1.msra.mxu0 0.0
      %955 = vmatprep.subr.mxu0 0.0
      %956 = vmatpush1.msra.mxu0 0.0
      %957 = vmatprep.subr.mxu0 0.0
      %958 = vmatpush1.msra.mxu0 0.0
      %959 = vmatprep.subr.mxu0 0.0
      %960 = vmatpush1.msra.mxu0 0.0
      %961 = vmatprep.subr.mxu0 0.0
      %962 = vmatpush1.msra.mxu0 0.0
      %963 = vmatprep.subr.mxu0 0.0
      %964 = vmatpush1.msra.mxu0 0.0
      %965 = vmatprep.subr.mxu0 0.0
      %966 = vmatpush1.msra.mxu0 0.0
      %967 = vmatprep.subr.mxu0 0.0
      %968 = vmatpush1.msra.mxu0 0.0
      %969 = vmatprep.subr.mxu0 0.0
      %970 = vmatpush1.msra.mxu0 0.0
      %971 = vmatprep.subr.mxu0 0.0
      %972 = vmatpush1.msra.mxu0 0.0
      %973 = vmatprep.subr.mxu0 0.0
      %974 = vmatpush1.msra.mxu0 0.0
      %975 = vmatprep.subr.mxu0 0.0
      %976 = vmatpush1.msra.mxu0 0.0
      %977 = vmatprep.subr.mxu0 0.0
      %978 = vmatpush1.msra.mxu0 0.0
      %979 = vmatprep.subr.mxu0 0.0
      %980 = vmatpush1.msra.mxu0 0.0
      %981 = vmatprep.subr.mxu0 0.0
      %982 = vmatpush1.msra.mxu0 0.0
      %983 = vmatprep.mubr.f32.mxu0 0.0
      %984 = vmatmul.mubr.f32.gmra.mrb[0].mxu0 %v357
      %v985 = vpop.f32.mrb[0].mxu0
      %v986 = vadd.f32 0.0, %v985
      %v987 = vpop.f32.mrb[0].mxu0
      %988 = vdwg.mxu0
      %989 = vmatprep.subr.mxu0 0.0
      %990 = vmatpush1.msra.mxu0 %v339
      %991 = vmatprep.subr.mxu0 0.0
      %992 = vmatpush1.msra.mxu0 %v340
      %993 = vmatprep.subr.mxu0 0.0
      %994 = vmatpush1.msra.mxu0 %v341
      %995 = vmatprep.subr.mxu0 0.0
      %996 = vmatpush1.msra.mxu0 %v342
      %997 = vmatprep.subr.mxu0 0.0
      %998 = vmatpush1.msra.mxu0 0.0
      %999 = vmatprep.subr.mxu0 0.0
      %1000 = vmatpush1.msra.mxu0 0.0
      %1001 = vmatprep.subr.mxu0 0.0
      %1002 = vmatpush1.msra.mxu0 0.0
      %1003 = vmatprep.subr.mxu0 0.0
      %1004 = vmatpush1.msra.mxu0 0.0
      %1005 = vmatprep.subr.mxu0 0.0
      %1006 = vmatpush1.msra.mxu0 0.0
      %1007 = vmatprep.subr.mxu0 0.0
      %1008 = vmatpush1.msra.mxu0 0.0
      %1009 = vmatprep.subr.mxu0 0.0
      %1010 = vmatpush1.msra.mxu0 0.0
      %1011 = vmatprep.subr.mxu0 0.0
      %1012 = vmatpush1.msra.mxu0 0.0
      %1013 = vmatprep.subr.mxu0 0.0
      %1014 = vmatpush1.msra.mxu0 0.0
      %1015 = vmatprep.subr.mxu0 0.0
      %1016 = vmatpush1.msra.mxu0 0.0
      %1017 = vmatprep.subr.mxu0 0.0
      %1018 = vmatpush1.msra.mxu0 0.0
      %1019 = vmatprep.subr.mxu0 0.0
      %1020 = vmatpush1.msra.mxu0 0.0
      %1021 = vmatprep.subr.mxu0 0.0
      %1022 = vmatpush1.msra.mxu0 0.0
      %1023 = vmatprep.subr.mxu0 0.0
      %1024 = vmatpush1.msra.mxu0 0.0
      %1025 = vmatprep.subr.mxu0 0.0
      %1026 = vmatpush1.msra.mxu0 0.0
      %1027 = vmatprep.subr.mxu0 0.0
      %1028 = vmatpush1.msra.mxu0 0.0
      %1029 = vmatprep.subr.mxu0 0.0
      %1030 = vmatpush1.msra.mxu0 0.0
      %1031 = vmatprep.subr.mxu0 0.0
      %1032 = vmatpush1.msra.mxu0 0.0
      %1033 = vmatprep.subr.mxu0 0.0
      %1034 = vmatpush1.msra.mxu0 0.0
      %1035 = vmatprep.subr.mxu0 0.0
      %1036 = vmatpush1.msra.mxu0 0.0
      %1037 = vmatprep.subr.mxu0 0.0
      %1038 = vmatpush1.msra.mxu0 0.0
      %1039 = vmatprep.subr.mxu0 0.0
      %1040 = vmatpush1.msra.mxu0 0.0
      %1041 = vmatprep.subr.mxu0 0.0
      %1042 = vmatpush1.msra.mxu0 0.0
      %1043 = vmatprep.subr.mxu0 0.0
      %1044 = vmatpush1.msra.mxu0 0.0
      %1045 = vmatprep.subr.mxu0 0.0
      %1046 = vmatpush1.msra.mxu0 0.0
      %1047 = vmatprep.subr.mxu0 0.0
      %1048 = vmatpush1.msra.mxu0 0.0
      %1049 = vmatprep.subr.mxu0 0.0
      %1050 = vmatpush1.msra.mxu0 0.0
      %1051 = vmatprep.subr.mxu0 0.0
      %1052 = vmatpush1.msra.mxu0 0.0
      %1053 = vmatprep.mubr.f32.mxu0 0.0
      %1054 = vmatmul.mubr.f32.gmra.mrb[0].mxu0 %v357
      %v1055 = vpop.f32.mrb[0].mxu0
      %v1056 = vadd.f32 0.0, %v1055
      %v1057 = vpop.f32.mrb[0].mxu0
      %1058 = vdwg.mxu0
      %1059 = vmatprep.subr.mxu0 0.0
      %1060 = vmatpush1.msra.mxu0 %v343
      %1061 = vmatprep.subr.mxu0 0.0
      %1062 = vmatpush1.msra.mxu0 %v344
      %1063 = vmatprep.subr.mxu0 0.0
      %1064 = vmatpush1.msra.mxu0 %v345
      %1065 = vmatprep.subr.mxu0 0.0
      %1066 = vmatpush1.msra.mxu0 %v346
      %1067 = vmatprep.subr.mxu0 0.0
      %1068 = vmatpush1.msra.mxu0 0.0
      %1069 = vmatprep.subr.mxu0 0.0
      %1070 = vmatpush1.msra.mxu0 0.0
      %1071 = vmatprep.subr.mxu0 0.0
      %1072 = vmatpush1.msra.mxu0 0.0
      %1073 = vmatprep.subr.mxu0 0.0
      %1074 = vmatpush1.msra.mxu0 0.0
      %1075 = vmatprep.subr.mxu0 0.0
      %1076 = vmatpush1.msra.mxu0 0.0
      %1077 = vmatprep.subr.mxu0 0.0
      %1078 = vmatpush1.msra.mxu0 0.0
      %1079 = vmatprep.subr.mxu0 0.0
      %1080 = vmatpush1.msra.mxu0 0.0
      %1081 = vmatprep.subr.mxu0 0.0
      %1082 = vmatpush1.msra.mxu0 0.0
      %1083 = vmatprep.subr.mxu0 0.0
      %1084 = vmatpush1.msra.mxu0 0.0
      %1085 = vmatprep.subr.mxu0 0.0
      %1086 = vmatpush1.msra.mxu0 0.0
      %1087 = vmatprep.subr.mxu0 0.0
      %1088 = vmatpush1.msra.mxu0 0.0
      %1089 = vmatprep.subr.mxu0 0.0
      %1090 = vmatpush1.msra.mxu0 0.0
      %1091 = vmatprep.subr.mxu0 0.0
      %1092 = vmatpush1.msra.mxu0 0.0
      %1093 = vmatprep.subr.mxu0 0.0
      %1094 = vmatpush1.msra.mxu0 0.0
      %1095 = vmatprep.subr.mxu0 0.0
      %1096 = vmatpush1.msra.mxu0 0.0
      %1097 = vmatprep.subr.mxu0 0.0
      %1098 = vmatpush1.msra.mxu0 0.0
      %1099 = vmatprep.subr.mxu0 0.0
      %1100 = vmatpush1.msra.mxu0 0.0
      %1101 = vmatprep.subr.mxu0 0.0
      %1102 = vmatpush1.msra.mxu0 0.0
      %1103 = vmatprep.subr.mxu0 0.0
      %1104 = vmatpush1.msra.mxu0 0.0
      %1105 = vmatprep.subr.mxu0 0.0
      %1106 = vmatpush1.msra.mxu0 0.0
      %1107 = vmatprep.subr.mxu0 0.0
      %1108 = vmatpush1.msra.mxu0 0.0
      %1109 = vmatprep.subr.mxu0 0.0
      %1110 = vmatpush1.msra.mxu0 0.0
      %1111 = vmatprep.subr.mxu0 0.0
      %1112 = vmatpush1.msra.mxu0 0.0
      %1113 = vmatprep.subr.mxu0 0.0
      %1114 = vmatpush1.msra.mxu0 0.0
      %1115 = vmatprep.subr.mxu0 0.0
      %1116 = vmatpush1.msra.mxu0 0.0
      %1117 = vmatprep.subr.mxu0 0.0
      %1118 = vmatpush1.msra.mxu0 0.0
      %1119 = vmatprep.subr.mxu0 0.0
      %1120 = vmatpush1.msra.mxu0 0.0
      %1121 = vmatprep.subr.mxu0 0.0
      %1122 = vmatpush1.msra.mxu0 0.0
      %1123 = vmatprep.mubr.f32.mxu0 0.0
      %1124 = vmatmul.mubr.f32.gmra.mrb[0].mxu0 %v357
      %v1125 = vpop.f32.mrb[0].mxu0
      %v1126 = vadd.f32 0.0, %v1125
      %v1127 = vpop.f32.mrb[0].mxu0
      %1128 = vdwg.mxu0
      %1129 = vmatprep.subr.mxu0 0.0
      %1130 = vmatpush1.msra.mxu0 %v347
      %1131 = vmatprep.subr.mxu0 0.0
      %1132 = vmatpush1.msra.mxu0 %v348
      %1133 = vmatprep.subr.mxu0 0.0
      %1134 = vmatpush1.msra.mxu0 %v349
      %1135 = vmatprep.subr.mxu0 0.0
      %1136 = vmatpush1.msra.mxu0 %v350
      %1137 = vmatprep.subr.mxu0 0.0
      %1138 = vmatpush1.msra.mxu0 0.0
      %1139 = vmatprep.subr.mxu0 0.0
      %1140 = vmatpush1.msra.mxu0 0.0
      %1141 = vmatprep.subr.mxu0 0.0
      %1142 = vmatpush1.msra.mxu0 0.0
      %1143 = vmatprep.subr.mxu0 0.0
      %1144 = vmatpush1.msra.mxu0 0.0
      %1145 = vmatprep.subr.mxu0 0.0
      %1146 = vmatpush1.msra.mxu0 0.0
      %1147 = vmatprep.subr.mxu0 0.0
      %1148 = vmatpush1.msra.mxu0 0.0
      %1149 = vmatprep.subr.mxu0 0.0
      %1150 = vmatpush1.msra.mxu0 0.0
      %1151 = vmatprep.subr.mxu0 0.0
      %1152 = vmatpush1.msra.mxu0 0.0
      %1153 = vmatprep.subr.mxu0 0.0
      %1154 = vmatpush1.msra.mxu0 0.0
      %1155 = vmatprep.subr.mxu0 0.0
      %1156 = vmatpush1.msra.mxu0 0.0
      %1157 = vmatprep.subr.mxu0 0.0
      %1158 = vmatpush1.msra.mxu0 0.0
      %1159 = vmatprep.subr.mxu0 0.0
      %1160 = vmatpush1.msra.mxu0 0.0
      %1161 = vmatprep.subr.mxu0 0.0
      %1162 = vmatpush1.msra.mxu0 0.0
      %1163 = vmatprep.subr.mxu0 0.0
      %1164 = vmatpush1.msra.mxu0 0.0
      %1165 = vmatprep.subr.mxu0 0.0
      %1166 = vmatpush1.msra.mxu0 0.0
      %1167 = vmatprep.subr.mxu0 0.0
      %1168 = vmatpush1.msra.mxu0 0.0
      %1169 = vmatprep.subr.mxu0 0.0
      %1170 = vmatpush1.msra.mxu0 0.0
      %1171 = vmatprep.subr.mxu0 0.0
      %1172 = vmatpush1.msra.mxu0 0.0
      %1173 = vmatprep.subr.mxu0 0.0
      %1174 = vmatpush1.msra.mxu0 0.0
      %1175 = vmatprep.subr.mxu0 0.0
      %1176 = vmatpush1.msra.mxu0 0.0
      %1177 = vmatprep.subr.mxu0 0.0
      %1178 = vmatpush1.msra.mxu0 0.0
      %1179 = vmatprep.subr.mxu0 0.0
      %1180 = vmatpush1.msra.mxu0 0.0
      %1181 = vmatprep.subr.mxu0 0.0
      %1182 = vmatpush1.msra.mxu0 0.0
      %1183 = vmatprep.subr.mxu0 0.0
      %1184 = vmatpush1.msra.mxu0 0.0
      %1185 = vmatprep.subr.mxu0 0.0
      %1186 = vmatpush1.msra.mxu0 0.0
      %1187 = vmatprep.subr.mxu0 0.0
      %1188 = vmatpush1.msra.mxu0 0.0
      %1189 = vmatprep.subr.mxu0 0.0
      %1190 = vmatpush1.msra.mxu0 0.0
      %1191 = vmatprep.subr.mxu0 0.0
      %1192 = vmatpush1.msra.mxu0 0.0
      %1193 = vmatprep.mubr.f32.mxu0 0.0
      %1194 = vmatmul.mubr.f32.gmra.mrb[0].mxu0 %v357
      %v1195 = vpop.f32.mrb[0].mxu0
      %v1196 = vadd.f32 0.0, %v1195
      %v1197 = vpop.f32.mrb[0].mxu0
      %1198 = vdwg.mxu0
      %vm1199 = vcmask 64512
      %v1201 = vsel %vm1199, %v426, 0
      %v1204 = vsel %vm1199, %v706, 0
      %1206 = vmatprep.subr.mxu0 0.0
      %1207 = vmatpush1.xpose.msra.mxu0 %v1204
      %1208 = vmatprep.subr.mxu0 0.0
      %1209 = vmatpush1.xpose.msra.mxu0 0.0
      %1210 = vmatprep.subr.mxu0 0.0
      %1211 = vmatpush1.xpose.msra.mxu0 0.0
      %1212 = vmatprep.subr.mxu0 0.0
      %1213 = vmatpush1.xpose.msra.mxu0 0.0
      %1214 = vmatprep.subr.mxu0 0.0
      %1215 = vmatpush1.xpose.msra.mxu0 0.0
      %1216 = vmatprep.subr.mxu0 0.0
      %1217 = vmatpush1.xpose.msra.mxu0 0.0
      %1218 = vmatprep.subr.mxu0 0.0
      %1219 = vmatpush1.xpose.msra.mxu0 0.0
      %1220 = vmatprep.subr.mxu0 0.0
      %1221 = vmatpush1.xpose.msra.mxu0 0.0
      %1222 = vmatprep.subr.mxu0 0.0
      %1223 = vmatpush1.xpose.msra.mxu0 0.0
      %1224 = vmatprep.subr.mxu0 0.0
      %1225 = vmatpush1.xpose.msra.mxu0 0.0
      %1226 = vmatprep.subr.mxu0 0.0
      %1227 = vmatpush1.xpose.msra.mxu0 0.0
      %1228 = vmatprep.subr.mxu0 0.0
      %1229 = vmatpush1.xpose.msra.mxu0 0.0
      %1230 = vmatprep.subr.mxu0 0.0
      %1231 = vmatpush1.xpose.msra.mxu0 0.0
      %1232 = vmatprep.subr.mxu0 0.0
      %1233 = vmatpush1.xpose.msra.mxu0 0.0
      %1234 = vmatprep.subr.mxu0 0.0
      %1235 = vmatpush1.xpose.msra.mxu0 0.0
      %1236 = vmatprep.subr.mxu0 0.0
      %1237 = vmatpush1.xpose.msra.mxu0 0.0
      %1238 = vmatprep.subr.mxu0 0.0
      %1239 = vmatpush1.xpose.msra.mxu0 0.0
      %1240 = vmatprep.subr.mxu0 0.0
      %1241 = vmatpush1.xpose.msra.mxu0 0.0
      %1242 = vmatprep.subr.mxu0 0.0
      %1243 = vmatpush1.xpose.msra.mxu0 0.0
      %1244 = vmatprep.subr.mxu0 0.0
      %1245 = vmatpush1.xpose.msra.mxu0 0.0
      %1246 = vmatprep.subr.mxu0 0.0
      %1247 = vmatpush1.xpose.msra.mxu0 0.0
      %1248 = vmatprep.subr.mxu0 0.0
      %1249 = vmatpush1.xpose.msra.mxu0 0.0
      %1250 = vmatprep.subr.mxu0 0.0
      %1251 = vmatpush1.xpose.msra.mxu0 0.0
      %1252 = vmatprep.subr.mxu0 0.0
      %1253 = vmatpush1.xpose.msra.mxu0 0.0
      %1254 = vmatprep.subr.mxu0 0.0
      %1255 = vmatpush1.xpose.msra.mxu0 0.0
      %1256 = vmatprep.subr.mxu0 0.0
      %1257 = vmatpush1.xpose.msra.mxu0 0.0
      %1258 = vmatprep.subr.mxu0 0.0
      %1259 = vmatpush1.xpose.msra.mxu0 0.0
      %1260 = vmatprep.subr.mxu0 0.0
      %1261 = vmatpush1.xpose.msra.mxu0 0.0
      %1262 = vmatprep.subr.mxu0 0.0
      %1263 = vmatpush1.xpose.msra.mxu0 0.0
      %1264 = vmatprep.subr.mxu0 0.0
      %1265 = vmatpush1.xpose.msra.mxu0 0.0
      %1266 = vmatprep.subr.mxu0 0.0
      %1267 = vmatpush1.xpose.msra.mxu0 0.0
      %1268 = vmatprep.subr.mxu0 0.0
      %1269 = vmatpush1.xpose.msra.mxu0 0.0
      %1270 = vmatprep.mubr.f32.mxu0 0.0
      %1271 = vmatmul.mubr.f32.gmra.mrb[0].mxu0 %v1201
      %v1272 = vpop.f32.mrb[0].mxu0
      %v1273 = vadd.f32 0.0, %v1272
      %v1274 = vpop.f32.mrb[0].mxu0
      %1275 = vdwg.mxu0
      %v1277 = vsel %vm1199, %v496, 0
      %v1280 = vsel %vm1199, %v776, 0
      %1282 = vmatprep.subr.mxu0 0.0
      %1283 = vmatpush1.xpose.msra.mxu0 %v1280
      %1284 = vmatprep.subr.mxu0 0.0
      %1285 = vmatpush1.xpose.msra.mxu0 0.0
      %1286 = vmatprep.subr.mxu0 0.0
      %1287 = vmatpush1.xpose.msra.mxu0 0.0
      %1288 = vmatprep.subr.mxu0 0.0
      %1289 = vmatpush1.xpose.msra.mxu0 0.0
      %1290 = vmatprep.subr.mxu0 0.0
      %1291 = vmatpush1.xpose.msra.mxu0 0.0
      %1292 = vmatprep.subr.mxu0 0.0
      %1293 = vmatpush1.xpose.msra.mxu0 0.0
      %1294 = vmatprep.subr.mxu0 0.0
      %1295 = vmatpush1.xpose.msra.mxu0 0.0
      %1296 = vmatprep.subr.mxu0 0.0
      %1297 = vmatpush1.xpose.msra.mxu0 0.0
      %1298 = vmatprep.subr.mxu0 0.0
      %1299 = vmatpush1.xpose.msra.mxu0 0.0
      %1300 = vmatprep.subr.mxu0 0.0
      %1301 = vmatpush1.xpose.msra.mxu0 0.0
      %1302 = vmatprep.subr.mxu0 0.0
      %1303 = vmatpush1.xpose.msra.mxu0 0.0
      %1304 = vmatprep.subr.mxu0 0.0
      %1305 = vmatpush1.xpose.msra.mxu0 0.0
      %1306 = vmatprep.subr.mxu0 0.0
      %1307 = vmatpush1.xpose.msra.mxu0 0.0
      %1308 = vmatprep.subr.mxu0 0.0
      %1309 = vmatpush1.xpose.msra.mxu0 0.0
      %1310 = vmatprep.subr.mxu0 0.0
      %1311 = vmatpush1.xpose.msra.mxu0 0.0
      %1312 = vmatprep.subr.mxu0 0.0
      %1313 = vmatpush1.xpose.msra.mxu0 0.0
      %1314 = vmatprep.subr.mxu0 0.0
      %1315 = vmatpush1.xpose.msra.mxu0 0.0
      %1316 = vmatprep.subr.mxu0 0.0
      %1317 = vmatpush1.xpose.msra.mxu0 0.0
      %1318 = vmatprep.subr.mxu0 0.0
      %1319 = vmatpush1.xpose.msra.mxu0 0.0
      %1320 = vmatprep.subr.mxu0 0.0
      %1321 = vmatpush1.xpose.msra.mxu0 0.0
      %1322 = vmatprep.subr.mxu0 0.0
      %1323 = vmatpush1.xpose.msra.mxu0 0.0
      %1324 = vmatprep.subr.mxu0 0.0
      %1325 = vmatpush1.xpose.msra.mxu0 0.0
      %1326 = vmatprep.subr.mxu0 0.0
      %1327 = vmatpush1.xpose.msra.mxu0 0.0
      %1328 = vmatprep.subr.mxu0 0.0
      %1329 = vmatpush1.xpose.msra.mxu0 0.0
      %1330 = vmatprep.subr.mxu0 0.0
      %1331 = vmatpush1.xpose.msra.mxu0 0.0
      %1332 = vmatprep.subr.mxu0 0.0
      %1333 = vmatpush1.xpose.msra.mxu0 0.0
      %1334 = vmatprep.subr.mxu0 0.0
      %1335 = vmatpush1.xpose.msra.mxu0 0.0
      %1336 = vmatprep.subr.mxu0 0.0
      %1337 = vmatpush1.xpose.msra.mxu0 0.0
      %1338 = vmatprep.subr.mxu0 0.0
      %1339 = vmatpush1.xpose.msra.mxu0 0.0
      %1340 = vmatprep.subr.mxu0 0.0
      %1341 = vmatpush1.xpose.msra.mxu0 0.0
      %1342 = vmatprep.subr.mxu0 0.0
      %1343 = vmatpush1.xpose.msra.mxu0 0.0
      %1344 = vmatprep.subr.mxu0 0.0
      %1345 = vmatpush1.xpose.msra.mxu0 0.0
      %1346 = vmatprep.mubr.f32.mxu0 0.0
      %1347 = vmatmul.mubr.f32.gmra.mrb[0].mxu0 %v1277
      %v1348 = vpop.f32.mrb[0].mxu0
      %v1349 = vadd.f32 0.0, %v1348
      %v1350 = vpop.f32.mrb[0].mxu0
      %1351 = vdwg.mxu0
      %v1353 = vsel %vm1199, %v566, 0
      %v1356 = vsel %vm1199, %v846, 0
      %1358 = vmatprep.subr.mxu0 0.0
      %1359 = vmatpush1.xpose.msra.mxu0 %v1356
      %1360 = vmatprep.subr.mxu0 0.0
      %1361 = vmatpush1.xpose.msra.mxu0 0.0
      %1362 = vmatprep.subr.mxu0 0.0
      %1363 = vmatpush1.xpose.msra.mxu0 0.0
      %1364 = vmatprep.subr.mxu0 0.0
      %1365 = vmatpush1.xpose.msra.mxu0 0.0
      %1366 = vmatprep.subr.mxu0 0.0
      %1367 = vmatpush1.xpose.msra.mxu0 0.0
      %1368 = vmatprep.subr.mxu0 0.0
      %1369 = vmatpush1.xpose.msra.mxu0 0.0
      %1370 = vmatprep.subr.mxu0 0.0
      %1371 = vmatpush1.xpose.msra.mxu0 0.0
      %1372 = vmatprep.subr.mxu0 0.0
      %1373 = vmatpush1.xpose.msra.mxu0 0.0
      %1374 = vmatprep.subr.mxu0 0.0
      %1375 = vmatpush1.xpose.msra.mxu0 0.0
      %1376 = vmatprep.subr.mxu0 0.0
      %1377 = vmatpush1.xpose.msra.mxu0 0.0
      %1378 = vmatprep.subr.mxu0 0.0
      %1379 = vmatpush1.xpose.msra.mxu0 0.0
      %1380 = vmatprep.subr.mxu0 0.0
      %1381 = vmatpush1.xpose.msra.mxu0 0.0
      %1382 = vmatprep.subr.mxu0 0.0
      %1383 = vmatpush1.xpose.msra.mxu0 0.0
      %1384 = vmatprep.subr.mxu0 0.0
      %1385 = vmatpush1.xpose.msra.mxu0 0.0
      %1386 = vmatprep.subr.mxu0 0.0
      %1387 = vmatpush1.xpose.msra.mxu0 0.0
      %1388 = vmatprep.subr.mxu0 0.0
      %1389 = vmatpush1.xpose.msra.mxu0 0.0
      %1390 = vmatprep.subr.mxu0 0.0
      %1391 = vmatpush1.xpose.msra.mxu0 0.0
      %1392 = vmatprep.subr.mxu0 0.0
      %1393 = vmatpush1.xpose.msra.mxu0 0.0
      %1394 = vmatprep.subr.mxu0 0.0
      %1395 = vmatpush1.xpose.msra.mxu0 0.0
      %1396 = vmatprep.subr.mxu0 0.0
      %1397 = vmatpush1.xpose.msra.mxu0 0.0
      %1398 = vmatprep.subr.mxu0 0.0
      %1399 = vmatpush1.xpose.msra.mxu0 0.0
      %1400 = vmatprep.subr.mxu0 0.0
      %1401 = vmatpush1.xpose.msra.mxu0 0.0
      %1402 = vmatprep.subr.mxu0 0.0
      %1403 = vmatpush1.xpose.msra.mxu0 0.0
      %1404 = vmatprep.subr.mxu0 0.0
      %1405 = vmatpush1.xpose.msra.mxu0 0.0
      %1406 = vmatprep.subr.mxu0 0.0
      %1407 = vmatpush1.xpose.msra.mxu0 0.0
      %1408 = vmatprep.subr.mxu0 0.0
      %1409 = vmatpush1.xpose.msra.mxu0 0.0
      %1410 = vmatprep.subr.mxu0 0.0
      %1411 = vmatpush1.xpose.msra.mxu0 0.0
      %1412 = vmatprep.subr.mxu0 0.0
      %1413 = vmatpush1.xpose.msra.mxu0 0.0
      %1414 = vmatprep.subr.mxu0 0.0
      %1415 = vmatpush1.xpose.msra.mxu0 0.0
      %1416 = vmatprep.subr.mxu0 0.0
      %1417 = vmatpush1.xpose.msra.mxu0 0.0
      %1418 = vmatprep.subr.mxu0 0.0
      %1419 = vmatpush1.xpose.msra.mxu0 0.0
      %1420 = vmatprep.subr.mxu0 0.0
      %1421 = vmatpush1.xpose.msra.mxu0 0.0
      %1422 = vmatprep.mubr.f32.mxu0 0.0
      %1423 = vmatmul.mubr.f32.gmra.mrb[0].mxu0 %v1353
      %v1424 = vpop.f32.mrb[0].mxu0
      %v1425 = vadd.f32 0.0, %v1424
      %v1426 = vpop.f32.mrb[0].mxu0
      %1427 = vdwg.mxu0
      %v1429 = vsel %vm1199, %v636, 0
      %v1432 = vsel %vm1199, %v916, 0
      %1434 = vmatprep.subr.mxu0 0.0
      %1435 = vmatpush1.xpose.msra.mxu0 %v1432
      %1436 = vmatprep.subr.mxu0 0.0
      %1437 = vmatpush1.xpose.msra.mxu0 0.0
      %1438 = vmatprep.subr.mxu0 0.0
      %1439 = vmatpush1.xpose.msra.mxu0 0.0
      %1440 = vmatprep.subr.mxu0 0.0
      %1441 = vmatpush1.xpose.msra.mxu0 0.0
      %1442 = vmatprep.subr.mxu0 0.0
      %1443 = vmatpush1.xpose.msra.mxu0 0.0
      %1444 = vmatprep.subr.mxu0 0.0
      %1445 = vmatpush1.xpose.msra.mxu0 0.0
      %1446 = vmatprep.subr.mxu0 0.0
      %1447 = vmatpush1.xpose.msra.mxu0 0.0
      %1448 = vmatprep.subr.mxu0 0.0
      %1449 = vmatpush1.xpose.msra.mxu0 0.0
      %1450 = vmatprep.subr.mxu0 0.0
      %1451 = vmatpush1.xpose.msra.mxu0 0.0
      %1452 = vmatprep.subr.mxu0 0.0
      %1453 = vmatpush1.xpose.msra.mxu0 0.0
      %1454 = vmatprep.subr.mxu0 0.0
      %1455 = vmatpush1.xpose.msra.mxu0 0.0
      %1456 = vmatprep.subr.mxu0 0.0
      %1457 = vmatpush1.xpose.msra.mxu0 0.0
      %1458 = vmatprep.subr.mxu0 0.0
      %1459 = vmatpush1.xpose.msra.mxu0 0.0
      %1460 = vmatprep.subr.mxu0 0.0
      %1461 = vmatpush1.xpose.msra.mxu0 0.0
      %1462 = vmatprep.subr.mxu0 0.0
      %1463 = vmatpush1.xpose.msra.mxu0 0.0
      %1464 = vmatprep.subr.mxu0 0.0
      %1465 = vmatpush1.xpose.msra.mxu0 0.0
      %1466 = vmatprep.subr.mxu0 0.0
      %1467 = vmatpush1.xpose.msra.mxu0 0.0
      %1468 = vmatprep.subr.mxu0 0.0
      %1469 = vmatpush1.xpose.msra.mxu0 0.0
      %1470 = vmatprep.subr.mxu0 0.0
      %1471 = vmatpush1.xpose.msra.mxu0 0.0
      %1472 = vmatprep.subr.mxu0 0.0
      %1473 = vmatpush1.xpose.msra.mxu0 0.0
      %1474 = vmatprep.subr.mxu0 0.0
      %1475 = vmatpush1.xpose.msra.mxu0 0.0
      %1476 = vmatprep.subr.mxu0 0.0
      %1477 = vmatpush1.xpose.msra.mxu0 0.0
      %1478 = vmatprep.subr.mxu0 0.0
      %1479 = vmatpush1.xpose.msra.mxu0 0.0
      %1480 = vmatprep.subr.mxu0 0.0
      %1481 = vmatpush1.xpose.msra.mxu0 0.0
      %1482 = vmatprep.subr.mxu0 0.0
      %1483 = vmatpush1.xpose.msra.mxu0 0.0
      %1484 = vmatprep.subr.mxu0 0.0
      %1485 = vmatpush1.xpose.msra.mxu0 0.0
      %1486 = vmatprep.subr.mxu0 0.0
      %1487 = vmatpush1.xpose.msra.mxu0 0.0
      %1488 = vmatprep.subr.mxu0 0.0
      %1489 = vmatpush1.xpose.msra.mxu0 0.0
      %1490 = vmatprep.subr.mxu0 0.0
      %1491 = vmatpush1.xpose.msra.mxu0 0.0
      %1492 = vmatprep.subr.mxu0 0.0
      %1493 = vmatpush1.xpose.msra.mxu0 0.0
      %1494 = vmatprep.subr.mxu0 0.0
      %1495 = vmatpush1.xpose.msra.mxu0 0.0
      %1496 = vmatprep.subr.mxu0 0.0
      %1497 = vmatpush1.xpose.msra.mxu0 0.0
      %1498 = vmatprep.mubr.f32.mxu0 0.0
      %1499 = vmatmul.mubr.f32.gmra.mrb[0].mxu0 %v1429
      %v1500 = vpop.f32.mrb[0].mxu0
      %v1501 = vadd.f32 0.0, %v1500
      %v1502 = vpop.f32.mrb[0].mxu0
      %1503 = vdwg.mxu0
      %v1504 = vmul.f32 %v1273, %v302
      %v1505 = vmul.f32 %v1349, %v302
      %v1506 = vmul.f32 %v1425, %v302
      %v1507 = vmul.f32 %v1501, %v302
      %v1508 = vsel %vm1199, %v1504, -inf
      %1509 = vmax.xlane.f32.xlu0 %v1508
      %v1510 = vpop.xlane.xlu0 %1509
      %v1511 = vsel %vm1199, %v1505, -inf
      %1512 = vmax.xlane.f32.xlu0 %v1511
      %v1513 = vpop.xlane.xlu0 %1512
      %v1514 = vsel %vm1199, %v1506, -inf
      %1515 = vmax.xlane.f32.xlu0 %v1514
      %v1516 = vpop.xlane.xlu0 %1515
      %v1517 = vsel %vm1199, %v1507, -inf
      %1518 = vmax.xlane.f32.xlu0 %v1517
      %v1519 = vpop.xlane.xlu0 %1518
      %v1520 = vsub.f32 %v1504, %v1510
      %v1521 = vsub.f32 %v1505, %v1513
      %v1522 = vsub.f32 %v1506, %v1516
      %v1523 = vsub.f32 %v1507, %v1519
      %v1524 = vmul.f32 %v1520, 1.442695
      %v1525 = vpow.pop %v1524
      %v1526 = vmul.f32 %v1521, 1.442695
      %v1527 = vpow.pop %v1526
      %v1528 = vmul.f32 %v1522, 1.442695
      %v1529 = vpow.pop %v1528
      %v1530 = vmul.f32 %v1523, 1.442695
      %v1531 = vpow.pop %v1530
      %v1532 = vsel %vm1199, %v1525, 0.0
      %1533 = vadd.xlane.f32.xlu0 %v1532
      %v1534 = vpop.xlane.xlu0 %1533
      %v1535 = vsel %vm1199, %v1527, 0.0
      %1536 = vadd.xlane.f32.xlu0 %v1535
      %v1537 = vpop.xlane.xlu0 %1536
      %v1538 = vsel %vm1199, %v1529, 0.0
      %1539 = vadd.xlane.f32.xlu0 %v1538
      %v1540 = vpop.xlane.xlu0 %1539
      %v1541 = vsel %vm1199, %v1531, 0.0
      %1542 = vadd.xlane.f32.xlu0 %v1541
      %v1543 = vpop.xlane.xlu0 %1542
      %v1544 = vrcp.pop %v1534
      %v1545 = vrcp.pop %v1537
      %v1546 = vrcp.pop %v1540
      %v1547 = vrcp.pop %v1543
      %v1549 = vsel %vm1199, %v1525, 0
      %1551 = vmatprep.subr.mxu0 0.0
      %1552 = vmatpush1.msra.mxu0 %v986
      %1553 = vmatprep.subr.mxu0 0.0
      %1554 = vmatpush1.msra.mxu0 0.0
      %1555 = vmatprep.subr.mxu0 0.0
      %1556 = vmatpush1.msra.mxu0 0.0
      %1557 = vmatprep.subr.mxu0 0.0
      %1558 = vmatpush1.msra.mxu0 0.0
      %1559 = vmatprep.subr.mxu0 0.0
      %1560 = vmatpush1.msra.mxu0 0.0
      %1561 = vmatprep.subr.mxu0 0.0
      %1562 = vmatpush1.msra.mxu0 0.0
      %1563 = vmatprep.subr.mxu0 0.0
      %1564 = vmatpush1.msra.mxu0 0.0
      %1565 = vmatprep.subr.mxu0 0.0
      %1566 = vmatpush1.msra.mxu0 0.0
      %1567 = vmatprep.subr.mxu0 0.0
      %1568 = vmatpush1.msra.mxu0 0.0
      %1569 = vmatprep.subr.mxu0 0.0
      %1570 = vmatpush1.msra.mxu0 0.0
      %1571 = vmatprep.subr.mxu0 0.0
      %1572 = vmatpush1.msra.mxu0 0.0
      %1573 = vmatprep.subr.mxu0 0.0
      %1574 = vmatpush1.msra.mxu0 0.0
      %1575 = vmatprep.subr.mxu0 0.0
      %1576 = vmatpush1.msra.mxu0 0.0
      %1577 = vmatprep.subr.mxu0 0.0
      %1578 = vmatpush1.msra.mxu0 0.0
      %1579 = vmatprep.subr.mxu0 0.0
      %1580 = vmatpush1.msra.mxu0 0.0
      %1581 = vmatprep.subr.mxu0 0.0
      %1582 = vmatpush1.msra.mxu0 0.0
      %1583 = vmatprep.subr.mxu0 0.0
      %1584 = vmatpush1.msra.mxu0 0.0
      %1585 = vmatprep.subr.mxu0 0.0
      %1586 = vmatpush1.msra.mxu0 0.0
      %1587 = vmatprep.subr.mxu0 0.0
      %1588 = vmatpush1.msra.mxu0 0.0
      %1589 = vmatprep.subr.mxu0 0.0
      %1590 = vmatpush1.msra.mxu0 0.0
      %1591 = vmatprep.subr.mxu0 0.0
      %1592 = vmatpush1.msra.mxu0 0.0
      %1593 = vmatprep.subr.mxu0 0.0
      %1594 = vmatpush1.msra.mxu0 0.0
      %1595 = vmatprep.subr.mxu0 0.0
      %1596 = vmatpush1.msra.mxu0 0.0
      %1597 = vmatprep.subr.mxu0 0.0
      %1598 = vmatpush1.msra.mxu0 0.0
      %1599 = vmatprep.subr.mxu0 0.0
      %1600 = vmatpush1.msra.mxu0 0.0
      %1601 = vmatprep.subr.mxu0 0.0
      %1602 = vmatpush1.msra.mxu0 0.0
      %1603 = vmatprep.subr.mxu0 0.0
      %1604 = vmatpush1.msra.mxu0 0.0
      %1605 = vmatprep.subr.mxu0 0.0
      %1606 = vmatpush1.msra.mxu0 0.0
      %1607 = vmatprep.subr.mxu0 0.0
      %1608 = vmatpush1.msra.mxu0 0.0
      %1609 = vmatprep.subr.mxu0 0.0
      %1610 = vmatpush1.msra.mxu0 0.0
      %1611 = vmatprep.subr.mxu0 0.0
      %1612 = vmatpush1.msra.mxu0 0.0
      %1613 = vmatprep.subr.mxu0 0.0
      %1614 = vmatpush1.msra.mxu0 0.0
      %1615 = vmatprep.mubr.f32.mxu0 0.0
      %1616 = vmatmul.mubr.f32.gmra.mrb[0].mxu0 %v1549
      %v1617 = vpop.f32.mrb[0].mxu0
      %v1618 = vadd.f32 0.0, %v1617
      %v1619 = vpop.f32.mrb[0].mxu0
      %1620 = vdwg.mxu0
      %v1622 = vsel %vm1199, %v1527, 0
      %1624 = vmatprep.subr.mxu0 0.0
      %1625 = vmatpush1.msra.mxu0 %v1056
      %1626 = vmatprep.subr.mxu0 0.0
      %1627 = vmatpush1.msra.mxu0 0.0
      %1628 = vmatprep.subr.mxu0 0.0
      %1629 = vmatpush1.msra.mxu0 0.0
      %1630 = vmatprep.subr.mxu0 0.0
      %1631 = vmatpush1.msra.mxu0 0.0
      %1632 = vmatprep.subr.mxu0 0.0
      %1633 = vmatpush1.msra.mxu0 0.0
      %1634 = vmatprep.subr.mxu0 0.0
      %1635 = vmatpush1.msra.mxu0 0.0
      %1636 = vmatprep.subr.mxu0 0.0
      %1637 = vmatpush1.msra.mxu0 0.0
      %1638 = vmatprep.subr.mxu0 0.0
      %1639 = vmatpush1.msra.mxu0 0.0
      %1640 = vmatprep.subr.mxu0 0.0
      %1641 = vmatpush1.msra.mxu0 0.0
      %1642 = vmatprep.subr.mxu0 0.0
      %1643 = vmatpush1.msra.mxu0 0.0
      %1644 = vmatprep.subr.mxu0 0.0
      %1645 = vmatpush1.msra.mxu0 0.0
      %1646 = vmatprep.subr.mxu0 0.0
      %1647 = vmatpush1.msra.mxu0 0.0
      %1648 = vmatprep.subr.mxu0 0.0
      %1649 = vmatpush1.msra.mxu0 0.0
      %1650 = vmatprep.subr.mxu0 0.0
      %1651 = vmatpush1.msra.mxu0 0.0
      %1652 = vmatprep.subr.mxu0 0.0
      %1653 = vmatpush1.msra.mxu0 0.0
      %1654 = vmatprep.subr.mxu0 0.0
      %1655 = vmatpush1.msra.mxu0 0.0
      %1656 = vmatprep.subr.mxu0 0.0
      %1657 = vmatpush1.msra.mxu0 0.0
      %1658 = vmatprep.subr.mxu0 0.0
      %1659 = vmatpush1.msra.mxu0 0.0
      %1660 = vmatprep.subr.mxu0 0.0
      %1661 = vmatpush1.msra.mxu0 0.0
      %1662 = vmatprep.subr.mxu0 0.0
      %1663 = vmatpush1.msra.mxu0 0.0
      %1664 = vmatprep.subr.mxu0 0.0
      %1665 = vmatpush1.msra.mxu0 0.0
      %1666 = vmatprep.subr.mxu0 0.0
      %1667 = vmatpush1.msra.mxu0 0.0
      %1668 = vmatprep.subr.mxu0 0.0
      %1669 = vmatpush1.msra.mxu0 0.0
      %1670 = vmatprep.subr.mxu0 0.0
      %1671 = vmatpush1.msra.mxu0 0.0
      %1672 = vmatprep.subr.mxu0 0.0
      %1673 = vmatpush1.msra.mxu0 0.0
      %1674 = vmatprep.subr.mxu0 0.0
      %1675 = vmatpush1.msra.mxu0 0.0
      %1676 = vmatprep.subr.mxu0 0.0
      %1677 = vmatpush1.msra.mxu0 0.0
      %1678 = vmatprep.subr.mxu0 0.0
      %1679 = vmatpush1.msra.mxu0 0.0
      %1680 = vmatprep.subr.mxu0 0.0
      %1681 = vmatpush1.msra.mxu0 0.0
      %1682 = vmatprep.subr.mxu0 0.0
      %1683 = vmatpush1.msra.mxu0 0.0
      %1684 = vmatprep.subr.mxu0 0.0
      %1685 = vmatpush1.msra.mxu0 0.0
      %1686 = vmatprep.subr.mxu0 0.0
      %1687 = vmatpush1.msra.mxu0 0.0
      %1688 = vmatprep.mubr.f32.mxu0 0.0
      %1689 = vmatmul.mubr.f32.gmra.mrb[0].mxu0 %v1622
      %v1690 = vpop.f32.mrb[0].mxu0
      %v1691 = vadd.f32 0.0, %v1690
      %v1692 = vpop.f32.mrb[0].mxu0
      %1693 = vdwg.mxu0
      %v1695 = vsel %vm1199, %v1529, 0
      %1697 = vmatprep.subr.mxu0 0.0
      %1698 = vmatpush1.msra.mxu0 %v1126
      %1699 = vmatprep.subr.mxu0 0.0
      %1700 = vmatpush1.msra.mxu0 0.0
      %1701 = vmatprep.subr.mxu0 0.0
      %1702 = vmatpush1.msra.mxu0 0.0
      %1703 = vmatprep.subr.mxu0 0.0
      %1704 = vmatpush1.msra.mxu0 0.0
      %1705 = vmatprep.subr.mxu0 0.0
      %1706 = vmatpush1.msra.mxu0 0.0
      %1707 = vmatprep.subr.mxu0 0.0
      %1708 = vmatpush1.msra.mxu0 0.0
      %1709 = vmatprep.subr.mxu0 0.0
      %1710 = vmatpush1.msra.mxu0 0.0
      %1711 = vmatprep.subr.mxu0 0.0
      %1712 = vmatpush1.msra.mxu0 0.0
      %1713 = vmatprep.subr.mxu0 0.0
      %1714 = vmatpush1.msra.mxu0 0.0
      %1715 = vmatprep.subr.mxu0 0.0
      %1716 = vmatpush1.msra.mxu0 0.0
      %1717 = vmatprep.subr.mxu0 0.0
      %1718 = vmatpush1.msra.mxu0 0.0
      %1719 = vmatprep.subr.mxu0 0.0
      %1720 = vmatpush1.msra.mxu0 0.0
      %1721 = vmatprep.subr.mxu0 0.0
      %1722 = vmatpush1.msra.mxu0 0.0
      %1723 = vmatprep.subr.mxu0 0.0
      %1724 = vmatpush1.msra.mxu0 0.0
      %1725 = vmatprep.subr.mxu0 0.0
      %1726 = vmatpush1.msra.mxu0 0.0
      %1727 = vmatprep.subr.mxu0 0.0
      %1728 = vmatpush1.msra.mxu0 0.0
      %1729 = vmatprep.subr.mxu0 0.0
      %1730 = vmatpush1.msra.mxu0 0.0
      %1731 = vmatprep.subr.mxu0 0.0
      %1732 = vmatpush1.msra.mxu0 0.0
      %1733 = vmatprep.subr.mxu0 0.0
      %1734 = vmatpush1.msra.mxu0 0.0
      %1735 = vmatprep.subr.mxu0 0.0
      %1736 = vmatpush1.msra.mxu0 0.0
      %1737 = vmatprep.subr.mxu0 0.0
      %1738 = vmatpush1.msra.mxu0 0.0
      %1739 = vmatprep.subr.mxu0 0.0
      %1740 = vmatpush1.msra.mxu0 0.0
      %1741 = vmatprep.subr.mxu0 0.0
      %1742 = vmatpush1.msra.mxu0 0.0
      %1743 = vmatprep.subr.mxu0 0.0
      %1744 = vmatpush1.msra.mxu0 0.0
      %1745 = vmatprep.subr.mxu0 0.0
      %1746 = vmatpush1.msra.mxu0 0.0
      %1747 = vmatprep.subr.mxu0 0.0
      %1748 = vmatpush1.msra.mxu0 0.0
      %1749 = vmatprep.subr.mxu0 0.0
      %1750 = vmatpush1.msra.mxu0 0.0
      %1751 = vmatprep.subr.mxu0 0.0
      %1752 = vmatpush1.msra.mxu0 0.0
      %1753 = vmatprep.subr.mxu0 0.0
      %1754 = vmatpush1.msra.mxu0 0.0
      %1755 = vmatprep.subr.mxu0 0.0
      %1756 = vmatpush1.msra.mxu0 0.0
      %1757 = vmatprep.subr.mxu0 0.0
      %1758 = vmatpush1.msra.mxu0 0.0
      %1759 = vmatprep.subr.mxu0 0.0
      %1760 = vmatpush1.msra.mxu0 0.0
      %1761 = vmatprep.mubr.f32.mxu0 0.0
      %1762 = vmatmul.mubr.f32.gmra.mrb[0].mxu0 %v1695
      %v1763 = vpop.f32.mrb[0].mxu0
      %v1764 = vadd.f32 0.0, %v1763
      %v1765 = vpop.f32.mrb[0].mxu0
      %1766 = vdwg.mxu0
      %v1768 = vsel %vm1199, %v1531, 0
      %1770 = vmatprep.subr.mxu0 0.0
      %1771 = vmatpush1.msra.mxu0 %v1196
      %1772 = vmatprep.subr.mxu0 0.0
      %1773 = vmatpush1.msra.mxu0 0.0
      %1774 = vmatprep.subr.mxu0 0.0
      %1775 = vmatpush1.msra.mxu0 0.0
      %1776 = vmatprep.subr.mxu0 0.0
      %1777 = vmatpush1.msra.mxu0 0.0
      %1778 = vmatprep.subr.mxu0 0.0
      %1779 = vmatpush1.msra.mxu0 0.0
      %1780 = vmatprep.subr.mxu0 0.0
      %1781 = vmatpush1.msra.mxu0 0.0
      %1782 = vmatprep.subr.mxu0 0.0
      %1783 = vmatpush1.msra.mxu0 0.0
      %1784 = vmatprep.subr.mxu0 0.0
      %1785 = vmatpush1.msra.mxu0 0.0
      %1786 = vmatprep.subr.mxu0 0.0
      %1787 = vmatpush1.msra.mxu0 0.0
      %1788 = vmatprep.subr.mxu0 0.0
      %1789 = vmatpush1.msra.mxu0 0.0
      %1790 = vmatprep.subr.mxu0 0.0
      %1791 = vmatpush1.msra.mxu0 0.0
      %1792 = vmatprep.subr.mxu0 0.0
      %1793 = vmatpush1.msra.mxu0 0.0
      %1794 = vmatprep.subr.mxu0 0.0
      %1795 = vmatpush1.msra.mxu0 0.0
      %1796 = vmatprep.subr.mxu0 0.0
      %1797 = vmatpush1.msra.mxu0 0.0
      %1798 = vmatprep.subr.mxu0 0.0
      %1799 = vmatpush1.msra.mxu0 0.0
      %1800 = vmatprep.subr.mxu0 0.0
      %1801 = vmatpush1.msra.mxu0 0.0
      %1802 = vmatprep.subr.mxu0 0.0
      %1803 = vmatpush1.msra.mxu0 0.0
      %1804 = vmatprep.subr.mxu0 0.0
      %1805 = vmatpush1.msra.mxu0 0.0
      %1806 = vmatprep.subr.mxu0 0.0
      %1807 = vmatpush1.msra.mxu0 0.0
      %1808 = vmatprep.subr.mxu0 0.0
      %1809 = vmatpush1.msra.mxu0 0.0
      %1810 = vmatprep.subr.mxu0 0.0
      %1811 = vmatpush1.msra.mxu0 0.0
      %1812 = vmatprep.subr.mxu0 0.0
      %1813 = vmatpush1.msra.mxu0 0.0
      %1814 = vmatprep.subr.mxu0 0.0
      %1815 = vmatpush1.msra.mxu0 0.0
      %1816 = vmatprep.subr.mxu0 0.0
      %1817 = vmatpush1.msra.mxu0 0.0
      %1818 = vmatprep.subr.mxu0 0.0
      %1819 = vmatpush1.msra.mxu0 0.0
      %1820 = vmatprep.subr.mxu0 0.0
      %1821 = vmatpush1.msra.mxu0 0.0
      %1822 = vmatprep.subr.mxu0 0.0
      %1823 = vmatpush1.msra.mxu0 0.0
      %1824 = vmatprep.subr.mxu0 0.0
      %1825 = vmatpush1.msra.mxu0 0.0
      %1826 = vmatprep.subr.mxu0 0.0
      %1827 = vmatpush1.msra.mxu0 0.0
      %1828 = vmatprep.subr.mxu0 0.0
      %1829 = vmatpush1.msra.mxu0 0.0
      %1830 = vmatprep.subr.mxu0 0.0
      %1831 = vmatpush1.msra.mxu0 0.0
      %1832 = vmatprep.subr.mxu0 0.0
      %1833 = vmatpush1.msra.mxu0 0.0
      %1834 = vmatprep.mubr.f32.mxu0 0.0
      %1835 = vmatmul.mubr.f32.gmra.mrb[0].mxu0 %v1768
      %v1836 = vpop.f32.mrb[0].mxu0
      %v1837 = vadd.f32 0.0, %v1836
      %v1838 = vpop.f32.mrb[0].mxu0
      %1839 = vdwg.mxu0
      %v1840 = vmul.f32 %v1618, %v1544
      %v1841 = vmul.f32 %v1691, %v1545
      %v1842 = vmul.f32 %v1764, %v1546
      %v1843 = vmul.f32 %v1837, %v1547
      %v1845 = vsel %vm1199, %v1840, 0
      %1847 = vmatprep.subr.mxu0 0.0
      %1848 = vmatpush1.msra.mxu0 %v351
      %1849 = vmatprep.subr.mxu0 0.0
      %1850 = vmatpush1.msra.mxu0 0.0
      %1851 = vmatprep.subr.mxu0 0.0
      %1852 = vmatpush1.msra.mxu0 0.0
      %1853 = vmatprep.subr.mxu0 0.0
      %1854 = vmatpush1.msra.mxu0 0.0
      %1855 = vmatprep.subr.mxu0 0.0
      %1856 = vmatpush1.msra.mxu0 0.0
      %1857 = vmatprep.subr.mxu0 0.0
      %1858 = vmatpush1.msra.mxu0 0.0
      %1859 = vmatprep.subr.mxu0 0.0
      %1860 = vmatpush1.msra.mxu0 0.0
      %1861 = vmatprep.subr.mxu0 0.0
      %1862 = vmatpush1.msra.mxu0 0.0
      %1863 = vmatprep.subr.mxu0 0.0
      %1864 = vmatpush1.msra.mxu0 0.0
      %1865 = vmatprep.subr.mxu0 0.0
      %1866 = vmatpush1.msra.mxu0 0.0
      %1867 = vmatprep.subr.mxu0 0.0
      %1868 = vmatpush1.msra.mxu0 0.0
      %1869 = vmatprep.subr.mxu0 0.0
      %1870 = vmatpush1.msra.mxu0 0.0
      %1871 = vmatprep.subr.mxu0 0.0
      %1872 = vmatpush1.msra.mxu0 0.0
      %1873 = vmatprep.subr.mxu0 0.0
      %1874 = vmatpush1.msra.mxu0 0.0
      %1875 = vmatprep.subr.mxu0 0.0
      %1876 = vmatpush1.msra.mxu0 0.0
      %1877 = vmatprep.subr.mxu0 0.0
      %1878 = vmatpush1.msra.mxu0 0.0
      %1879 = vmatprep.subr.mxu0 0.0
      %1880 = vmatpush1.msra.mxu0 0.0
      %1881 = vmatprep.subr.mxu0 0.0
      %1882 = vmatpush1.msra.mxu0 0.0
      %1883 = vmatprep.subr.mxu0 0.0
      %1884 = vmatpush1.msra.mxu0 0.0
      %1885 = vmatprep.subr.mxu0 0.0
      %1886 = vmatpush1.msra.mxu0 0.0
      %1887 = vmatprep.subr.mxu0 0.0
      %1888 = vmatpush1.msra.mxu0 0.0
      %1889 = vmatprep.subr.mxu0 0.0
      %1890 = vmatpush1.msra.mxu0 0.0
      %1891 = vmatprep.subr.mxu0 0.0
      %1892 = vmatpush1.msra.mxu0 0.0
      %1893 = vmatprep.subr.mxu0 0.0
      %1894 = vmatpush1.msra.mxu0 0.0
      %1895 = vmatprep.subr.mxu0 0.0
      %1896 = vmatpush1.msra.mxu0 0.0
      %1897 = vmatprep.subr.mxu0 0.0
      %1898 = vmatpush1.msra.mxu0 0.0
      %1899 = vmatprep.subr.mxu0 0.0
      %1900 = vmatpush1.msra.mxu0 0.0
      %1901 = vmatprep.subr.mxu0 0.0
      %1902 = vmatpush1.msra.mxu0 0.0
      %1903 = vmatprep.subr.mxu0 0.0
      %1904 = vmatpush1.msra.mxu0 0.0
      %1905 = vmatprep.subr.mxu0 0.0
      %1906 = vmatpush1.msra.mxu0 0.0
      %1907 = vmatprep.subr.mxu0 0.0
      %1908 = vmatpush1.msra.mxu0 0.0
      %1909 = vmatprep.subr.mxu0 0.0
      %1910 = vmatpush1.msra.mxu0 0.0
      %1911 = vmatprep.mubr.f32.mxu0 0.0
      %1912 = vmatmul.mubr.f32.gmra.mrb[0].mxu0 %v1845
      %v1913 = vpop.f32.mrb[0].mxu0
      %v1914 = vadd.f32 0.0, %v1913
      %v1915 = vpop.f32.mrb[0].mxu0
      %1916 = vdwg.mxu0
      %v1918 = vsel %vm1199, %v1841, 0
      %1920 = vmatprep.subr.mxu0 0.0
      %1921 = vmatpush1.msra.mxu0 %v352
      %1922 = vmatprep.subr.mxu0 0.0
      %1923 = vmatpush1.msra.mxu0 0.0
      %1924 = vmatprep.subr.mxu0 0.0
      %1925 = vmatpush1.msra.mxu0 0.0
      %1926 = vmatprep.subr.mxu0 0.0
      %1927 = vmatpush1.msra.mxu0 0.0
      %1928 = vmatprep.subr.mxu0 0.0
      %1929 = vmatpush1.msra.mxu0 0.0
      %1930 = vmatprep.subr.mxu0 0.0
      %1931 = vmatpush1.msra.mxu0 0.0
      %1932 = vmatprep.subr.mxu0 0.0
      %1933 = vmatpush1.msra.mxu0 0.0
      %1934 = vmatprep.subr.mxu0 0.0
      %1935 = vmatpush1.msra.mxu0 0.0
      %1936 = vmatprep.subr.mxu0 0.0
      %1937 = vmatpush1.msra.mxu0 0.0
      %1938 = vmatprep.subr.mxu0 0.0
      %1939 = vmatpush1.msra.mxu0 0.0
      %1940 = vmatprep.subr.mxu0 0.0
      %1941 = vmatpush1.msra.mxu0 0.0
      %1942 = vmatprep.subr.mxu0 0.0
      %1943 = vmatpush1.msra.mxu0 0.0
      %1944 = vmatprep.subr.mxu0 0.0
      %1945 = vmatpush1.msra.mxu0 0.0
      %1946 = vmatprep.subr.mxu0 0.0
      %1947 = vmatpush1.msra.mxu0 0.0
      %1948 = vmatprep.subr.mxu0 0.0
      %1949 = vmatpush1.msra.mxu0 0.0
      %1950 = vmatprep.subr.mxu0 0.0
      %1951 = vmatpush1.msra.mxu0 0.0
      %1952 = vmatprep.subr.mxu0 0.0
      %1953 = vmatpush1.msra.mxu0 0.0
      %1954 = vmatprep.subr.mxu0 0.0
      %1955 = vmatpush1.msra.mxu0 0.0
      %1956 = vmatprep.subr.mxu0 0.0
      %1957 = vmatpush1.msra.mxu0 0.0
      %1958 = vmatprep.subr.mxu0 0.0
      %1959 = vmatpush1.msra.mxu0 0.0
      %1960 = vmatprep.subr.mxu0 0.0
      %1961 = vmatpush1.msra.mxu0 0.0
      %1962 = vmatprep.subr.mxu0 0.0
      %1963 = vmatpush1.msra.mxu0 0.0
      %1964 = vmatprep.subr.mxu0 0.0
      %1965 = vmatpush1.msra.mxu0 0.0
      %1966 = vmatprep.subr.mxu0 0.0
      %1967 = vmatpush1.msra.mxu0 0.0
      %1968 = vmatprep.subr.mxu0 0.0
      %1969 = vmatpush1.msra.mxu0 0.0
      %1970 = vmatprep.subr.mxu0 0.0
      %1971 = vmatpush1.msra.mxu0 0.0
      %1972 = vmatprep.subr.mxu0 0.0
      %1973 = vmatpush1.msra.mxu0 0.0
      %1974 = vmatprep.subr.mxu0 0.0
      %1975 = vmatpush1.msra.mxu0 0.0
      %1976 = vmatprep.subr.mxu0 0.0
      %1977 = vmatpush1.msra.mxu0 0.0
      %1978 = vmatprep.subr.mxu0 0.0
      %1979 = vmatpush1.msra.mxu0 0.0
      %1980 = vmatprep.subr.mxu0 0.0
      %1981 = vmatpush1.msra.mxu0 0.0
      %1982 = vmatprep.subr.mxu0 0.0
      %1983 = vmatpush1.msra.mxu0 0.0
      %1984 = vmatprep.mubr.f32.mxu0 0.0
      %1985 = vmatmul.mubr.f32.gmra.mrb[0].mxu0 %v1918
      %v1986 = vpop.f32.mrb[0].mxu0
      %v1987 = vadd.f32 0.0, %v1986
      %v1988 = vpop.f32.mrb[0].mxu0
      %1989 = vdwg.mxu0
      %v1991 = vsel %vm1199, %v1842, 0
      %1993 = vmatprep.subr.mxu0 0.0
      %1994 = vmatpush1.msra.mxu0 %v353
      %1995 = vmatprep.subr.mxu0 0.0
      %1996 = vmatpush1.msra.mxu0 0.0
      %1997 = vmatprep.subr.mxu0 0.0
      %1998 = vmatpush1.msra.mxu0 0.0
      %1999 = vmatprep.subr.mxu0 0.0
      %2000 = vmatpush1.msra.mxu0 0.0
      %2001 = vmatprep.subr.mxu0 0.0
      %2002 = vmatpush1.msra.mxu0 0.0
      %2003 = vmatprep.subr.mxu0 0.0
      %2004 = vmatpush1.msra.mxu0 0.0
      %2005 = vmatprep.subr.mxu0 0.0
      %2006 = vmatpush1.msra.mxu0 0.0
      %2007 = vmatprep.subr.mxu0 0.0
      %2008 = vmatpush1.msra.mxu0 0.0
      %2009 = vmatprep.subr.mxu0 0.0
      %2010 = vmatpush1.msra.mxu0 0.0
      %2011 = vmatprep.subr.mxu0 0.0
      %2012 = vmatpush1.msra.mxu0 0.0
      %2013 = vmatprep.subr.mxu0 0.0
      %2014 = vmatpush1.msra.mxu0 0.0
      %2015 = vmatprep.subr.mxu0 0.0
      %2016 = vmatpush1.msra.mxu0 0.0
      %2017 = vmatprep.subr.mxu0 0.0
      %2018 = vmatpush1.msra.mxu0 0.0
      %2019 = vmatprep.subr.mxu0 0.0
      %2020 = vmatpush1.msra.mxu0 0.0
      %2021 = vmatprep.subr.mxu0 0.0
      %2022 = vmatpush1.msra.mxu0 0.0
      %2023 = vmatprep.subr.mxu0 0.0
      %2024 = vmatpush1.msra.mxu0 0.0
      %2025 = vmatprep.subr.mxu0 0.0
      %2026 = vmatpush1.msra.mxu0 0.0
      %2027 = vmatprep.subr.mxu0 0.0
      %2028 = vmatpush1.msra.mxu0 0.0
      %2029 = vmatprep.subr.mxu0 0.0
      %2030 = vmatpush1.msra.mxu0 0.0
      %2031 = vmatprep.subr.mxu0 0.0
      %2032 = vmatpush1.msra.mxu0 0.0
      %2033 = vmatprep.subr.mxu0 0.0
      %2034 = vmatpush1.msra.mxu0 0.0
      %2035 = vmatprep.subr.mxu0 0.0
      %2036 = vmatpush1.msra.mxu0 0.0
      %2037 = vmatprep.subr.mxu0 0.0
      %2038 = vmatpush1.msra.mxu0 0.0
      %2039 = vmatprep.subr.mxu0 0.0
      %2040 = vmatpush1.msra.mxu0 0.0
      %2041 = vmatprep.subr.mxu0 0.0
      %2042 = vmatpush1.msra.mxu0 0.0
      %2043 = vmatprep.subr.mxu0 0.0
      %2044 = vmatpush1.msra.mxu0 0.0
      %2045 = vmatprep.subr.mxu0 0.0
      %2046 = vmatpush1.msra.mxu0 0.0
      %2047 = vmatprep.subr.mxu0 0.0
      %2048 = vmatpush1.msra.mxu0 0.0
      %2049 = vmatprep.subr.mxu0 0.0
      %2050 = vmatpush1.msra.mxu0 0.0
      %2051 = vmatprep.subr.mxu0 0.0
      %2052 = vmatpush1.msra.mxu0 0.0
      %2053 = vmatprep.subr.mxu0 0.0
      %2054 = vmatpush1.msra.mxu0 0.0
      %2055 = vmatprep.subr.mxu0 0.0
      %2056 = vmatpush1.msra.mxu0 0.0
      %2057 = vmatprep.mubr.f32.mxu0 0.0
      %2058 = vmatmul.mubr.f32.gmra.mrb[0].mxu0 %v1991
      %v2059 = vpop.f32.mrb[0].mxu0
      %v2060 = vadd.f32 0.0, %v2059
      %v2061 = vpop.f32.mrb[0].mxu0
      %2062 = vdwg.mxu0
      %v2064 = vsel %vm1199, %v1843, 0
      %2066 = vmatprep.subr.mxu0 0.0
      %2067 = vmatpush1.msra.mxu0 %v354
      %2068 = vmatprep.subr.mxu0 0.0
      %2069 = vmatpush1.msra.mxu0 0.0
      %2070 = vmatprep.subr.mxu0 0.0
      %2071 = vmatpush1.msra.mxu0 0.0
      %2072 = vmatprep.subr.mxu0 0.0
      %2073 = vmatpush1.msra.mxu0 0.0
      %2074 = vmatprep.subr.mxu0 0.0
      %2075 = vmatpush1.msra.mxu0 0.0
      %2076 = vmatprep.subr.mxu0 0.0
      %2077 = vmatpush1.msra.mxu0 0.0
      %2078 = vmatprep.subr.mxu0 0.0
      %2079 = vmatpush1.msra.mxu0 0.0
      %2080 = vmatprep.subr.mxu0 0.0
      %2081 = vmatpush1.msra.mxu0 0.0
      %2082 = vmatprep.subr.mxu0 0.0
      %2083 = vmatpush1.msra.mxu0 0.0
      %2084 = vmatprep.subr.mxu0 0.0
      %2085 = vmatpush1.msra.mxu0 0.0
      %2086 = vmatprep.subr.mxu0 0.0
      %2087 = vmatpush1.msra.mxu0 0.0
      %2088 = vmatprep.subr.mxu0 0.0
      %2089 = vmatpush1.msra.mxu0 0.0
      %2090 = vmatprep.subr.mxu0 0.0
      %2091 = vmatpush1.msra.mxu0 0.0
      %2092 = vmatprep.subr.mxu0 0.0
      %2093 = vmatpush1.msra.mxu0 0.0
      %2094 = vmatprep.subr.mxu0 0.0
      %2095 = vmatpush1.msra.mxu0 0.0
      %2096 = vmatprep.subr.mxu0 0.0
      %2097 = vmatpush1.msra.mxu0 0.0
      %2098 = vmatprep.subr.mxu0 0.0
      %2099 = vmatpush1.msra.mxu0 0.0
      %2100 = vmatprep.subr.mxu0 0.0
      %2101 = vmatpush1.msra.mxu0 0.0
      %2102 = vmatprep.subr.mxu0 0.0
      %2103 = vmatpush1.msra.mxu0 0.0
      %2104 = vmatprep.subr.mxu0 0.0
      %2105 = vmatpush1.msra.mxu0 0.0
      %2106 = vmatprep.subr.mxu0 0.0
      %2107 = vmatpush1.msra.mxu0 0.0
      %2108 = vmatprep.subr.mxu0 0.0
      %2109 = vmatpush1.msra.mxu0 0.0
      %2110 = vmatprep.subr.mxu0 0.0
      %2111 = vmatpush1.msra.mxu0 0.0
      %2112 = vmatprep.subr.mxu0 0.0
      %2113 = vmatpush1.msra.mxu0 0.0
      %2114 = vmatprep.subr.mxu0 0.0
      %2115 = vmatpush1.msra.mxu0 0.0
      %2116 = vmatprep.subr.mxu0 0.0
      %2117 = vmatpush1.msra.mxu0 0.0
      %2118 = vmatprep.subr.mxu0 0.0
      %2119 = vmatpush1.msra.mxu0 0.0
      %2120 = vmatprep.subr.mxu0 0.0
      %2121 = vmatpush1.msra.mxu0 0.0
      %2122 = vmatprep.subr.mxu0 0.0
      %2123 = vmatpush1.msra.mxu0 0.0
      %2124 = vmatprep.subr.mxu0 0.0
      %2125 = vmatpush1.msra.mxu0 0.0
      %2126 = vmatprep.subr.mxu0 0.0
      %2127 = vmatpush1.msra.mxu0 0.0
      %2128 = vmatprep.subr.mxu0 0.0
      %2129 = vmatpush1.msra.mxu0 0.0
      %2130 = vmatprep.mubr.f32.mxu0 0.0
      %2131 = vmatmul.mubr.f32.gmra.mrb[0].mxu0 %v2064
      %v2132 = vpop.f32.mrb[0].mxu0
      %v2133 = vadd.f32 0.0, %v2132
      %v2134 = vpop.f32.mrb[0].mxu0
      %2135 = vdwg.mxu0
      %v2136 = vsel %vm355, %v1914, 0.0
      %v2137 = vsel %vm355, %v1987, 0.0
      %v2138 = vadd.f32 %v2136, %v2137
      %v2139 = vsel %vm355, %v2060, 0.0
      %v2140 = vadd.f32 %v2138, %v2139
      %v2141 = vsel %vm355, %v2133, 0.0
      %v2142 = vadd.f32 %v2140, %v2141
      %s2143 = scalar_lea.vmem %s1, 128
      %v2144 = vld [vmem:[%s2143] sm:$0xff]
      %v2145 = vld [vmem:[%s2143 + $0x8] sm:$0xff]
      %v2146 = vld [vmem:[%s2143 + $0x10] sm:$0xff]
      %v2147 = vld [vmem:[%s2143 + $0x18] sm:$0xff]
      %v2148 = vld [vmem:[%s2143 + $0x20] sm:$0xff]
      %v2149 = vld [vmem:[%s2143 + $0x28] sm:$0xff]
      %v2150 = vld [vmem:[%s2143 + $0x30] sm:$0xff]
      %v2151 = vld [vmem:[%s2143 + $0x38] sm:$0xff]
      %v2152 = vld [vmem:[%s2143 + $0x40] sm:$0xff]
      %v2153 = vld [vmem:[%s2143 + $0x48] sm:$0xff]
      %v2154 = vld [vmem:[%s2143 + $0x50] sm:$0xff]
      %v2155 = vld [vmem:[%s2143 + $0x58] sm:$0xff]
      %v2156 = vld [vmem:[%s2143 + $0x60] sm:$0xff]
      %v2157 = vld [vmem:[%s2143 + $0x68] sm:$0xff]
      %v2158 = vld [vmem:[%s2143 + $0x70] sm:$0xff]
      %v2159 = vld [vmem:[%s2143 + $0x78] sm:$0xff]
      %s2160 = scalar_lea.vmem %s2, 128
      %v2161 = vld [vmem:[%s2160] sm:$0xff]
      %v2162 = vld [vmem:[%s2160 + $0x8] sm:$0xff]
      %v2163 = vld [vmem:[%s2160 + $0x10] sm:$0xff]
      %v2164 = vld [vmem:[%s2160 + $0x18] sm:$0xff]
      %v2165 = vld [vmem:[%s2160 + $0x20] sm:$0xff]
      %v2166 = vld [vmem:[%s2160 + $0x28] sm:$0xff]
      %v2167 = vld [vmem:[%s2160 + $0x30] sm:$0xff]
      %v2168 = vld [vmem:[%s2160 + $0x38] sm:$0xff]
      %v2169 = vld [vmem:[%s2160 + $0x40] sm:$0xff]
      %v2170 = vld [vmem:[%s2160 + $0x48] sm:$0xff]
      %v2171 = vld [vmem:[%s2160 + $0x50] sm:$0xff]
      %v2172 = vld [vmem:[%s2160 + $0x58] sm:$0xff]
      %v2173 = vld [vmem:[%s2160 + $0x60] sm:$0xff]
      %v2174 = vld [vmem:[%s2160 + $0x68] sm:$0xff]
      %v2175 = vld [vmem:[%s2160 + $0x70] sm:$0xff]
      %v2176 = vld [vmem:[%s2160 + $0x78] sm:$0xff]
      %s2177 = scalar_lea.vmem %s3, 128
      %v2178 = vld [vmem:[%s2177] sm:$0xff]
      %v2179 = vld [vmem:[%s2177 + $0x8] sm:$0xff]
      %v2180 = vld [vmem:[%s2177 + $0x10] sm:$0xff]
      %v2181 = vld [vmem:[%s2177 + $0x18] sm:$0xff]
      %v2182 = vld [vmem:[%s2177 + $0x20] sm:$0xff]
      %v2183 = vld [vmem:[%s2177 + $0x28] sm:$0xff]
      %v2184 = vld [vmem:[%s2177 + $0x30] sm:$0xff]
      %v2185 = vld [vmem:[%s2177 + $0x38] sm:$0xff]
      %v2186 = vld [vmem:[%s2177 + $0x40] sm:$0xff]
      %v2187 = vld [vmem:[%s2177 + $0x48] sm:$0xff]
      %v2188 = vld [vmem:[%s2177 + $0x50] sm:$0xff]
      %v2189 = vld [vmem:[%s2177 + $0x58] sm:$0xff]
      %v2190 = vld [vmem:[%s2177 + $0x60] sm:$0xff]
      %v2191 = vld [vmem:[%s2177 + $0x68] sm:$0xff]
      %v2192 = vld [vmem:[%s2177 + $0x70] sm:$0xff]
      %v2193 = vld [vmem:[%s2177 + $0x78] sm:$0xff]
      %s2194 = scalar_lea.vmem %s4, 32
      %v2195 = vld [vmem:[%s2194] sm:$0xff]
      %v2196 = vld [vmem:[%s2194 + $0x8] sm:$0xff]
      %v2197 = vld [vmem:[%s2194 + $0x10] sm:$0xff]
      %v2198 = vld [vmem:[%s2194 + $0x18] sm:$0xff]
      %v2200 = vsel %vm355, %v2142, 0
      %2202 = vmatprep.subr.mxu0 0.0
      %2203 = vmatpush1.msra.mxu0 %v2144
      %2204 = vmatprep.subr.mxu0 0.0
      %2205 = vmatpush1.msra.mxu0 %v2145
      %2206 = vmatprep.subr.mxu0 0.0
      %2207 = vmatpush1.msra.mxu0 %v2146
      %2208 = vmatprep.subr.mxu0 0.0
      %2209 = vmatpush1.msra.mxu0 %v2147
      %2210 = vmatprep.subr.mxu0 0.0
      %2211 = vmatpush1.msra.mxu0 0.0
      %2212 = vmatprep.subr.mxu0 0.0
      %2213 = vmatpush1.msra.mxu0 0.0
      %2214 = vmatprep.subr.mxu0 0.0
      %2215 = vmatpush1.msra.mxu0 0.0
      %2216 = vmatprep.subr.mxu0 0.0
      %2217 = vmatpush1.msra.mxu0 0.0
      %2218 = vmatprep.subr.mxu0 0.0
      %2219 = vmatpush1.msra.mxu0 0.0
      %2220 = vmatprep.subr.mxu0 0.0
      %2221 = vmatpush1.msra.mxu0 0.0
      %2222 = vmatprep.subr.mxu0 0.0
      %2223 = vmatpush1.msra.mxu0 0.0
      %2224 = vmatprep.subr.mxu0 0.0
      %2225 = vmatpush1.msra.mxu0 0.0
      %2226 = vmatprep.subr.mxu0 0.0
      %2227 = vmatpush1.msra.mxu0 0.0
      %2228 = vmatprep.subr.mxu0 0.0
      %2229 = vmatpush1.msra.mxu0 0.0
      %2230 = vmatprep.subr.mxu0 0.0
      %2231 = vmatpush1.msra.mxu0 0.0
      %2232 = vmatprep.subr.mxu0 0.0
      %2233 = vmatpush1.msra.mxu0 0.0
      %2234 = vmatprep.subr.mxu0 0.0
      %2235 = vmatpush1.msra.mxu0 0.0
      %2236 = vmatprep.subr.mxu0 0.0
      %2237 = vmatpush1.msra.mxu0 0.0
      %2238 = vmatprep.subr.mxu0 0.0
      %2239 = vmatpush1.msra.mxu0 0.0
      %2240 = vmatprep.subr.mxu0 0.0
      %2241 = vmatpush1.msra.mxu0 0.0
      %2242 = vmatprep.subr.mxu0 0.0
      %2243 = vmatpush1.msra.mxu0 0.0
      %2244 = vmatprep.subr.mxu0 0.0
      %2245 = vmatpush1.msra.mxu0 0.0
      %2246 = vmatprep.subr.mxu0 0.0
      %2247 = vmatpush1.msra.mxu0 0.0
      %2248 = vmatprep.subr.mxu0 0.0
      %2249 = vmatpush1.msra.mxu0 0.0
      %2250 = vmatprep.subr.mxu0 0.0
      %2251 = vmatpush1.msra.mxu0 0.0
      %2252 = vmatprep.subr.mxu0 0.0
      %2253 = vmatpush1.msra.mxu0 0.0
      %2254 = vmatprep.subr.mxu0 0.0
      %2255 = vmatpush1.msra.mxu0 0.0
      %2256 = vmatprep.subr.mxu0 0.0
      %2257 = vmatpush1.msra.mxu0 0.0
      %2258 = vmatprep.subr.mxu0 0.0
      %2259 = vmatpush1.msra.mxu0 0.0
      %2260 = vmatprep.subr.mxu0 0.0
      %2261 = vmatpush1.msra.mxu0 0.0
      %2262 = vmatprep.subr.mxu0 0.0
      %2263 = vmatpush1.msra.mxu0 0.0
      %2264 = vmatprep.subr.mxu0 0.0
      %2265 = vmatpush1.msra.mxu0 0.0
      %2266 = vmatprep.mubr.f32.mxu0 0.0
      %2267 = vmatmul.mubr.f32.gmra.mrb[0].mxu0 %v2200
      %v2268 = vpop.f32.mrb[0].mxu0
      %v2269 = vadd.f32 0.0, %v2268
      %v2270 = vpop.f32.mrb[0].mxu0
      %2271 = vdwg.mxu0
      %2272 = vmatprep.subr.mxu0 0.0
      %2273 = vmatpush1.msra.mxu0 %v2148
      %2274 = vmatprep.subr.mxu0 0.0
      %2275 = vmatpush1.msra.mxu0 %v2149
      %2276 = vmatprep.subr.mxu0 0.0
      %2277 = vmatpush1.msra.mxu0 %v2150
      %2278 = vmatprep.subr.mxu0 0.0
      %2279 = vmatpush1.msra.mxu0 %v2151
      %2280 = vmatprep.subr.mxu0 0.0
      %2281 = vmatpush1.msra.mxu0 0.0
      %2282 = vmatprep.subr.mxu0 0.0
      %2283 = vmatpush1.msra.mxu0 0.0
      %2284 = vmatprep.subr.mxu0 0.0
      %2285 = vmatpush1.msra.mxu0 0.0
      %2286 = vmatprep.subr.mxu0 0.0
      %2287 = vmatpush1.msra.mxu0 0.0
      %2288 = vmatprep.subr.mxu0 0.0
      %2289 = vmatpush1.msra.mxu0 0.0
      %2290 = vmatprep.subr.mxu0 0.0
      %2291 = vmatpush1.msra.mxu0 0.0
      %2292 = vmatprep.subr.mxu0 0.0
      %2293 = vmatpush1.msra.mxu0 0.0
      %2294 = vmatprep.subr.mxu0 0.0
      %2295 = vmatpush1.msra.mxu0 0.0
      %2296 = vmatprep.subr.mxu0 0.0
      %2297 = vmatpush1.msra.mxu0 0.0
      %2298 = vmatprep.subr.mxu0 0.0
      %2299 = vmatpush1.msra.mxu0 0.0
      %2300 = vmatprep.subr.mxu0 0.0
      %2301 = vmatpush1.msra.mxu0 0.0
      %2302 = vmatprep.subr.mxu0 0.0
      %2303 = vmatpush1.msra.mxu0 0.0
      %2304 = vmatprep.subr.mxu0 0.0
      %2305 = vmatpush1.msra.mxu0 0.0
      %2306 = vmatprep.subr.mxu0 0.0
      %2307 = vmatpush1.msra.mxu0 0.0
      %2308 = vmatprep.subr.mxu0 0.0
      %2309 = vmatpush1.msra.mxu0 0.0
      %2310 = vmatprep.subr.mxu0 0.0
      %2311 = vmatpush1.msra.mxu0 0.0
      %2312 = vmatprep.subr.mxu0 0.0
      %2313 = vmatpush1.msra.mxu0 0.0
      %2314 = vmatprep.subr.mxu0 0.0
      %2315 = vmatpush1.msra.mxu0 0.0
      %2316 = vmatprep.subr.mxu0 0.0
      %2317 = vmatpush1.msra.mxu0 0.0
      %2318 = vmatprep.subr.mxu0 0.0
      %2319 = vmatpush1.msra.mxu0 0.0
      %2320 = vmatprep.subr.mxu0 0.0
      %2321 = vmatpush1.msra.mxu0 0.0
      %2322 = vmatprep.subr.mxu0 0.0
      %2323 = vmatpush1.msra.mxu0 0.0
      %2324 = vmatprep.subr.mxu0 0.0
      %2325 = vmatpush1.msra.mxu0 0.0
      %2326 = vmatprep.subr.mxu0 0.0
      %2327 = vmatpush1.msra.mxu0 0.0
      %2328 = vmatprep.subr.mxu0 0.0
      %2329 = vmatpush1.msra.mxu0 0.0
      %2330 = vmatprep.subr.mxu0 0.0
      %2331 = vmatpush1.msra.mxu0 0.0
      %2332 = vmatprep.subr.mxu0 0.0
      %2333 = vmatpush1.msra.mxu0 0.0
      %2334 = vmatprep.subr.mxu0 0.0
      %2335 = vmatpush1.msra.mxu0 0.0
      %2336 = vmatprep.mubr.f32.mxu0 0.0
      %2337 = vmatmul.mubr.f32.gmra.mrb[0].mxu0 %v2200
      %v2338 = vpop.f32.mrb[0].mxu0
      %v2339 = vadd.f32 0.0, %v2338
      %v2340 = vpop.f32.mrb[0].mxu0
      %2341 = vdwg.mxu0
      %2342 = vmatprep.subr.mxu0 0.0
      %2343 = vmatpush1.msra.mxu0 %v2152
      %2344 = vmatprep.subr.mxu0 0.0
      %2345 = vmatpush1.msra.mxu0 %v2153
      %2346 = vmatprep.subr.mxu0 0.0
      %2347 = vmatpush1.msra.mxu0 %v2154
      %2348 = vmatprep.subr.mxu0 0.0
      %2349 = vmatpush1.msra.mxu0 %v2155
      %2350 = vmatprep.subr.mxu0 0.0
      %2351 = vmatpush1.msra.mxu0 0.0
      %2352 = vmatprep.subr.mxu0 0.0
      %2353 = vmatpush1.msra.mxu0 0.0
      %2354 = vmatprep.subr.mxu0 0.0
      %2355 = vmatpush1.msra.mxu0 0.0
      %2356 = vmatprep.subr.mxu0 0.0
      %2357 = vmatpush1.msra.mxu0 0.0
      %2358 = vmatprep.subr.mxu0 0.0
      %2359 = vmatpush1.msra.mxu0 0.0
      %2360 = vmatprep.subr.mxu0 0.0
      %2361 = vmatpush1.msra.mxu0 0.0
      %2362 = vmatprep.subr.mxu0 0.0
      %2363 = vmatpush1.msra.mxu0 0.0
      %2364 = vmatprep.subr.mxu0 0.0
      %2365 = vmatpush1.msra.mxu0 0.0
      %2366 = vmatprep.subr.mxu0 0.0
      %2367 = vmatpush1.msra.mxu0 0.0
      %2368 = vmatprep.subr.mxu0 0.0
      %2369 = vmatpush1.msra.mxu0 0.0
      %2370 = vmatprep.subr.mxu0 0.0
      %2371 = vmatpush1.msra.mxu0 0.0
      %2372 = vmatprep.subr.mxu0 0.0
      %2373 = vmatpush1.msra.mxu0 0.0
      %2374 = vmatprep.subr.mxu0 0.0
      %2375 = vmatpush1.msra.mxu0 0.0
      %2376 = vmatprep.subr.mxu0 0.0
      %2377 = vmatpush1.msra.mxu0 0.0
      %2378 = vmatprep.subr.mxu0 0.0
      %2379 = vmatpush1.msra.mxu0 0.0
      %2380 = vmatprep.subr.mxu0 0.0
      %2381 = vmatpush1.msra.mxu0 0.0
      %2382 = vmatprep.subr.mxu0 0.0
      %2383 = vmatpush1.msra.mxu0 0.0
      %2384 = vmatprep.subr.mxu0 0.0
      %2385 = vmatpush1.msra.mxu0 0.0
      %2386 = vmatprep.subr.mxu0 0.0
      %2387 = vmatpush1.msra.mxu0 0.0
      %2388 = vmatprep.subr.mxu0 0.0
      %2389 = vmatpush1.msra.mxu0 0.0
      %2390 = vmatprep.subr.mxu0 0.0
      %2391 = vmatpush1.msra.mxu0 0.0
      %2392 = vmatprep.subr.mxu0 0.0
      %2393 = vmatpush1.msra.mxu0 0.0
      %2394 = vmatprep.subr.mxu0 0.0
      %2395 = vmatpush1.msra.mxu0 0.0
      %2396 = vmatprep.subr.mxu0 0.0
      %2397 = vmatpush1.msra.mxu0 0.0
      %2398 = vmatprep.subr.mxu0 0.0
      %2399 = vmatpush1.msra.mxu0 0.0
      %2400 = vmatprep.subr.mxu0 0.0
      %2401 = vmatpush1.msra.mxu0 0.0
      %2402 = vmatprep.subr.mxu0 0.0
      %2403 = vmatpush1.msra.mxu0 0.0
      %2404 = vmatprep.subr.mxu0 0.0
      %2405 = vmatpush1.msra.mxu0 0.0
      %2406 = vmatprep.mubr.f32.mxu0 0.0
      %2407 = vmatmul.mubr.f32.gmra.mrb[0].mxu0 %v2200
      %v2408 = vpop.f32.mrb[0].mxu0
      %v2409 = vadd.f32 0.0, %v2408
      %v2410 = vpop.f32.mrb[0].mxu0
      %2411 = vdwg.mxu0
      %2412 = vmatprep.subr.mxu0 0.0
      %2413 = vmatpush1.msra.mxu0 %v2156
      %2414 = vmatprep.subr.mxu0 0.0
      %2415 = vmatpush1.msra.mxu0 %v2157
      %2416 = vmatprep.subr.mxu0 0.0
      %2417 = vmatpush1.msra.mxu0 %v2158
      %2418 = vmatprep.subr.mxu0 0.0
      %2419 = vmatpush1.msra.mxu0 %v2159
      %2420 = vmatprep.subr.mxu0 0.0
      %2421 = vmatpush1.msra.mxu0 0.0
      %2422 = vmatprep.subr.mxu0 0.0
      %2423 = vmatpush1.msra.mxu0 0.0
      %2424 = vmatprep.subr.mxu0 0.0
      %2425 = vmatpush1.msra.mxu0 0.0
      %2426 = vmatprep.subr.mxu0 0.0
      %2427 = vmatpush1.msra.mxu0 0.0
      %2428 = vmatprep.subr.mxu0 0.0
      %2429 = vmatpush1.msra.mxu0 0.0
      %2430 = vmatprep.subr.mxu0 0.0
      %2431 = vmatpush1.msra.mxu0 0.0
      %2432 = vmatprep.subr.mxu0 0.0
      %2433 = vmatpush1.msra.mxu0 0.0
      %2434 = vmatprep.subr.mxu0 0.0
      %2435 = vmatpush1.msra.mxu0 0.0
      %2436 = vmatprep.subr.mxu0 0.0
      %2437 = vmatpush1.msra.mxu0 0.0
      %2438 = vmatprep.subr.mxu0 0.0
      %2439 = vmatpush1.msra.mxu0 0.0
      %2440 = vmatprep.subr.mxu0 0.0
      %2441 = vmatpush1.msra.mxu0 0.0
      %2442 = vmatprep.subr.mxu0 0.0
      %2443 = vmatpush1.msra.mxu0 0.0
      %2444 = vmatprep.subr.mxu0 0.0
      %2445 = vmatpush1.msra.mxu0 0.0
      %2446 = vmatprep.subr.mxu0 0.0
      %2447 = vmatpush1.msra.mxu0 0.0
      %2448 = vmatprep.subr.mxu0 0.0
      %2449 = vmatpush1.msra.mxu0 0.0
      %2450 = vmatprep.subr.mxu0 0.0
      %2451 = vmatpush1.msra.mxu0 0.0
      %2452 = vmatprep.subr.mxu0 0.0
      %2453 = vmatpush1.msra.mxu0 0.0
      %2454 = vmatprep.subr.mxu0 0.0
      %2455 = vmatpush1.msra.mxu0 0.0
      %2456 = vmatprep.subr.mxu0 0.0
      %2457 = vmatpush1.msra.mxu0 0.0
      %2458 = vmatprep.subr.mxu0 0.0
      %2459 = vmatpush1.msra.mxu0 0.0
      %2460 = vmatprep.subr.mxu0 0.0
      %2461 = vmatpush1.msra.mxu0 0.0
      %2462 = vmatprep.subr.mxu0 0.0
      %2463 = vmatpush1.msra.mxu0 0.0
      %2464 = vmatprep.subr.mxu0 0.0
      %2465 = vmatpush1.msra.mxu0 0.0
      %2466 = vmatprep.subr.mxu0 0.0
      %2467 = vmatpush1.msra.mxu0 0.0
      %2468 = vmatprep.subr.mxu0 0.0
      %2469 = vmatpush1.msra.mxu0 0.0
      %2470 = vmatprep.subr.mxu0 0.0
      %2471 = vmatpush1.msra.mxu0 0.0
      %2472 = vmatprep.subr.mxu0 0.0
      %2473 = vmatpush1.msra.mxu0 0.0
      %2474 = vmatprep.subr.mxu0 0.0
      %2475 = vmatpush1.msra.mxu0 0.0
      %2476 = vmatprep.mubr.f32.mxu0 0.0
      %2477 = vmatmul.mubr.f32.gmra.mrb[0].mxu0 %v2200
      %v2478 = vpop.f32.mrb[0].mxu0
      %v2479 = vadd.f32 0.0, %v2478
      %v2480 = vpop.f32.mrb[0].mxu0
      %2481 = vdwg.mxu0
      %2482 = vmatprep.subr.mxu0 0.0
      %2483 = vmatpush1.msra.mxu0 %v2161
      %2484 = vmatprep.subr.mxu0 0.0
      %2485 = vmatpush1.msra.mxu0 %v2162
      %2486 = vmatprep.subr.mxu0 0.0
      %2487 = vmatpush1.msra.mxu0 %v2163
      %2488 = vmatprep.subr.mxu0 0.0
      %2489 = vmatpush1.msra.mxu0 %v2164
      %2490 = vmatprep.subr.mxu0 0.0
      %2491 = vmatpush1.msra.mxu0 0.0
      %2492 = vmatprep.subr.mxu0 0.0
      %2493 = vmatpush1.msra.mxu0 0.0
      %2494 = vmatprep.subr.mxu0 0.0
      %2495 = vmatpush1.msra.mxu0 0.0
      %2496 = vmatprep.subr.mxu0 0.0
      %2497 = vmatpush1.msra.mxu0 0.0
      %2498 = vmatprep.subr.mxu0 0.0
      %2499 = vmatpush1.msra.mxu0 0.0
      %2500 = vmatprep.subr.mxu0 0.0
      %2501 = vmatpush1.msra.mxu0 0.0
      %2502 = vmatprep.subr.mxu0 0.0
      %2503 = vmatpush1.msra.mxu0 0.0
      %2504 = vmatprep.subr.mxu0 0.0
      %2505 = vmatpush1.msra.mxu0 0.0
      %2506 = vmatprep.subr.mxu0 0.0
      %2507 = vmatpush1.msra.mxu0 0.0
      %2508 = vmatprep.subr.mxu0 0.0
      %2509 = vmatpush1.msra.mxu0 0.0
      %2510 = vmatprep.subr.mxu0 0.0
      %2511 = vmatpush1.msra.mxu0 0.0
      %2512 = vmatprep.subr.mxu0 0.0
      %2513 = vmatpush1.msra.mxu0 0.0
      %2514 = vmatprep.subr.mxu0 0.0
      %2515 = vmatpush1.msra.mxu0 0.0
      %2516 = vmatprep.subr.mxu0 0.0
      %2517 = vmatpush1.msra.mxu0 0.0
      %2518 = vmatprep.subr.mxu0 0.0
      %2519 = vmatpush1.msra.mxu0 0.0
      %2520 = vmatprep.subr.mxu0 0.0
      %2521 = vmatpush1.msra.mxu0 0.0
      %2522 = vmatprep.subr.mxu0 0.0
      %2523 = vmatpush1.msra.mxu0 0.0
      %2524 = vmatprep.subr.mxu0 0.0
      %2525 = vmatpush1.msra.mxu0 0.0
      %2526 = vmatprep.subr.mxu0 0.0
      %2527 = vmatpush1.msra.mxu0 0.0
      %2528 = vmatprep.subr.mxu0 0.0
      %2529 = vmatpush1.msra.mxu0 0.0
      %2530 = vmatprep.subr.mxu0 0.0
      %2531 = vmatpush1.msra.mxu0 0.0
      %2532 = vmatprep.subr.mxu0 0.0
      %2533 = vmatpush1.msra.mxu0 0.0
      %2534 = vmatprep.subr.mxu0 0.0
      %2535 = vmatpush1.msra.mxu0 0.0
      %2536 = vmatprep.subr.mxu0 0.0
      %2537 = vmatpush1.msra.mxu0 0.0
      %2538 = vmatprep.subr.mxu0 0.0
      %2539 = vmatpush1.msra.mxu0 0.0
      %2540 = vmatprep.subr.mxu0 0.0
      %2541 = vmatpush1.msra.mxu0 0.0
      %2542 = vmatprep.subr.mxu0 0.0
      %2543 = vmatpush1.msra.mxu0 0.0
      %2544 = vmatprep.subr.mxu0 0.0
      %2545 = vmatpush1.msra.mxu0 0.0
      %2546 = vmatprep.mubr.f32.mxu0 0.0
      %2547 = vmatmul.mubr.f32.gmra.mrb[0].mxu0 %v2200
      %v2548 = vpop.f32.mrb[0].mxu0
      %v2549 = vadd.f32 0.0, %v2548
      %v2550 = vpop.f32.mrb[0].mxu0
      %2551 = vdwg.mxu0
      %2552 = vmatprep.subr.mxu0 0.0
      %2553 = vmatpush1.msra.mxu0 %v2165
      %2554 = vmatprep.subr.mxu0 0.0
      %2555 = vmatpush1.msra.mxu0 %v2166
      %2556 = vmatprep.subr.mxu0 0.0
      %2557 = vmatpush1.msra.mxu0 %v2167
      %2558 = vmatprep.subr.mxu0 0.0
      %2559 = vmatpush1.msra.mxu0 %v2168
      %2560 = vmatprep.subr.mxu0 0.0
      %2561 = vmatpush1.msra.mxu0 0.0
      %2562 = vmatprep.subr.mxu0 0.0
      %2563 = vmatpush1.msra.mxu0 0.0
      %2564 = vmatprep.subr.mxu0 0.0
      %2565 = vmatpush1.msra.mxu0 0.0
      %2566 = vmatprep.subr.mxu0 0.0
      %2567 = vmatpush1.msra.mxu0 0.0
      %2568 = vmatprep.subr.mxu0 0.0
      %2569 = vmatpush1.msra.mxu0 0.0
      %2570 = vmatprep.subr.mxu0 0.0
      %2571 = vmatpush1.msra.mxu0 0.0
      %2572 = vmatprep.subr.mxu0 0.0
      %2573 = vmatpush1.msra.mxu0 0.0
      %2574 = vmatprep.subr.mxu0 0.0
      %2575 = vmatpush1.msra.mxu0 0.0
      %2576 = vmatprep.subr.mxu0 0.0
      %2577 = vmatpush1.msra.mxu0 0.0
      %2578 = vmatprep.subr.mxu0 0.0
      %2579 = vmatpush1.msra.mxu0 0.0
      %2580 = vmatprep.subr.mxu0 0.0
      %2581 = vmatpush1.msra.mxu0 0.0
      %2582 = vmatprep.subr.mxu0 0.0
      %2583 = vmatpush1.msra.mxu0 0.0
      %2584 = vmatprep.subr.mxu0 0.0
      %2585 = vmatpush1.msra.mxu0 0.0
      %2586 = vmatprep.subr.mxu0 0.0
      %2587 = vmatpush1.msra.mxu0 0.0
      %2588 = vmatprep.subr.mxu0 0.0
      %2589 = vmatpush1.msra.mxu0 0.0
      %2590 = vmatprep.subr.mxu0 0.0
      %2591 = vmatpush1.msra.mxu0 0.0
      %2592 = vmatprep.subr.mxu0 0.0
      %2593 = vmatpush1.msra.mxu0 0.0
      %2594 = vmatprep.subr.mxu0 0.0
      %2595 = vmatpush1.msra.mxu0 0.0
      %2596 = vmatprep.subr.mxu0 0.0
      %2597 = vmatpush1.msra.mxu0 0.0
      %2598 = vmatprep.subr.mxu0 0.0
      %2599 = vmatpush1.msra.mxu0 0.0
      %2600 = vmatprep.subr.mxu0 0.0
      %2601 = vmatpush1.msra.mxu0 0.0
      %2602 = vmatprep.subr.mxu0 0.0
      %2603 = vmatpush1.msra.mxu0 0.0
      %2604 = vmatprep.subr.mxu0 0.0
      %2605 = vmatpush1.msra.mxu0 0.0
      %2606 = vmatprep.subr.mxu0 0.0
      %2607 = vmatpush1.msra.mxu0 0.0
      %2608 = vmatprep.subr.mxu0 0.0
      %2609 = vmatpush1.msra.mxu0 0.0
      %2610 = vmatprep.subr.mxu0 0.0
      %2611 = vmatpush1.msra.mxu0 0.0
      %2612 = vmatprep.subr.mxu0 0.0
      %2613 = vmatpush1.msra.mxu0 0.0
      %2614 = vmatprep.subr.mxu0 0.0
      %2615 = vmatpush1.msra.mxu0 0.0
      %2616 = vmatprep.mubr.f32.mxu0 0.0
      %2617 = vmatmul.mubr.f32.gmra.mrb[0].mxu0 %v2200
      %v2618 = vpop.f32.mrb[0].mxu0
      %v2619 = vadd.f32 0.0, %v2618
      %v2620 = vpop.f32.mrb[0].mxu0
      %2621 = vdwg.mxu0
      %2622 = vmatprep.subr.mxu0 0.0
      %2623 = vmatpush1.msra.mxu0 %v2169
      %2624 = vmatprep.subr.mxu0 0.0
      %2625 = vmatpush1.msra.mxu0 %v2170
      %2626 = vmatprep.subr.mxu0 0.0
      %2627 = vmatpush1.msra.mxu0 %v2171
      %2628 = vmatprep.subr.mxu0 0.0
      %2629 = vmatpush1.msra.mxu0 %v2172
      %2630 = vmatprep.subr.mxu0 0.0
      %2631 = vmatpush1.msra.mxu0 0.0
      %2632 = vmatprep.subr.mxu0 0.0
      %2633 = vmatpush1.msra.mxu0 0.0
      %2634 = vmatprep.subr.mxu0 0.0
      %2635 = vmatpush1.msra.mxu0 0.0
      %2636 = vmatprep.subr.mxu0 0.0
      %2637 = vmatpush1.msra.mxu0 0.0
      %2638 = vmatprep.subr.mxu0 0.0
      %2639 = vmatpush1.msra.mxu0 0.0
      %2640 = vmatprep.subr.mxu0 0.0
      %2641 = vmatpush1.msra.mxu0 0.0
      %2642 = vmatprep.subr.mxu0 0.0
      %2643 = vmatpush1.msra.mxu0 0.0
      %2644 = vmatprep.subr.mxu0 0.0
      %2645 = vmatpush1.msra.mxu0 0.0
      %2646 = vmatprep.subr.mxu0 0.0
      %2647 = vmatpush1.msra.mxu0 0.0
      %2648 = vmatprep.subr.mxu0 0.0
      %2649 = vmatpush1.msra.mxu0 0.0
      %2650 = vmatprep.subr.mxu0 0.0
      %2651 = vmatpush1.msra.mxu0 0.0
      %2652 = vmatprep.subr.mxu0 0.0
      %2653 = vmatpush1.msra.mxu0 0.0
      %2654 = vmatprep.subr.mxu0 0.0
      %2655 = vmatpush1.msra.mxu0 0.0
      %2656 = vmatprep.subr.mxu0 0.0
      %2657 = vmatpush1.msra.mxu0 0.0
      %2658 = vmatprep.subr.mxu0 0.0
      %2659 = vmatpush1.msra.mxu0 0.0
      %2660 = vmatprep.subr.mxu0 0.0
      %2661 = vmatpush1.msra.mxu0 0.0
      %2662 = vmatprep.subr.mxu0 0.0
      %2663 = vmatpush1.msra.mxu0 0.0
      %2664 = vmatprep.subr.mxu0 0.0
      %2665 = vmatpush1.msra.mxu0 0.0
      %2666 = vmatprep.subr.mxu0 0.0
      %2667 = vmatpush1.msra.mxu0 0.0
      %2668 = vmatprep.subr.mxu0 0.0
      %2669 = vmatpush1.msra.mxu0 0.0
      %2670 = vmatprep.subr.mxu0 0.0
      %2671 = vmatpush1.msra.mxu0 0.0
      %2672 = vmatprep.subr.mxu0 0.0
      %2673 = vmatpush1.msra.mxu0 0.0
      %2674 = vmatprep.subr.mxu0 0.0
      %2675 = vmatpush1.msra.mxu0 0.0
      %2676 = vmatprep.subr.mxu0 0.0
      %2677 = vmatpush1.msra.mxu0 0.0
      %2678 = vmatprep.subr.mxu0 0.0
      %2679 = vmatpush1.msra.mxu0 0.0
      %2680 = vmatprep.subr.mxu0 0.0
      %2681 = vmatpush1.msra.mxu0 0.0
      %2682 = vmatprep.subr.mxu0 0.0
      %2683 = vmatpush1.msra.mxu0 0.0
      %2684 = vmatprep.subr.mxu0 0.0
      %2685 = vmatpush1.msra.mxu0 0.0
      %2686 = vmatprep.mubr.f32.mxu0 0.0
      %2687 = vmatmul.mubr.f32.gmra.mrb[0].mxu0 %v2200
      %v2688 = vpop.f32.mrb[0].mxu0
      %v2689 = vadd.f32 0.0, %v2688
      %v2690 = vpop.f32.mrb[0].mxu0
      %2691 = vdwg.mxu0
      %2692 = vmatprep.subr.mxu0 0.0
      %2693 = vmatpush1.msra.mxu0 %v2173
      %2694 = vmatprep.subr.mxu0 0.0
      %2695 = vmatpush1.msra.mxu0 %v2174
      %2696 = vmatprep.subr.mxu0 0.0
      %2697 = vmatpush1.msra.mxu0 %v2175
      %2698 = vmatprep.subr.mxu0 0.0
      %2699 = vmatpush1.msra.mxu0 %v2176
      %2700 = vmatprep.subr.mxu0 0.0
      %2701 = vmatpush1.msra.mxu0 0.0
      %2702 = vmatprep.subr.mxu0 0.0
      %2703 = vmatpush1.msra.mxu0 0.0
      %2704 = vmatprep.subr.mxu0 0.0
      %2705 = vmatpush1.msra.mxu0 0.0
      %2706 = vmatprep.subr.mxu0 0.0
      %2707 = vmatpush1.msra.mxu0 0.0
      %2708 = vmatprep.subr.mxu0 0.0
      %2709 = vmatpush1.msra.mxu0 0.0
      %2710 = vmatprep.subr.mxu0 0.0
      %2711 = vmatpush1.msra.mxu0 0.0
      %2712 = vmatprep.subr.mxu0 0.0
      %2713 = vmatpush1.msra.mxu0 0.0
      %2714 = vmatprep.subr.mxu0 0.0
      %2715 = vmatpush1.msra.mxu0 0.0
      %2716 = vmatprep.subr.mxu0 0.0
      %2717 = vmatpush1.msra.mxu0 0.0
      %2718 = vmatprep.subr.mxu0 0.0
      %2719 = vmatpush1.msra.mxu0 0.0
      %2720 = vmatprep.subr.mxu0 0.0
      %2721 = vmatpush1.msra.mxu0 0.0
      %2722 = vmatprep.subr.mxu0 0.0
      %2723 = vmatpush1.msra.mxu0 0.0
      %2724 = vmatprep.subr.mxu0 0.0
      %2725 = vmatpush1.msra.mxu0 0.0
      %2726 = vmatprep.subr.mxu0 0.0
      %2727 = vmatpush1.msra.mxu0 0.0
      %2728 = vmatprep.subr.mxu0 0.0
      %2729 = vmatpush1.msra.mxu0 0.0
      %2730 = vmatprep.subr.mxu0 0.0
      %2731 = vmatpush1.msra.mxu0 0.0
      %2732 = vmatprep.subr.mxu0 0.0
      %2733 = vmatpush1.msra.mxu0 0.0
      %2734 = vmatprep.subr.mxu0 0.0
      %2735 = vmatpush1.msra.mxu0 0.0
      %2736 = vmatprep.subr.mxu0 0.0
      %2737 = vmatpush1.msra.mxu0 0.0
      %2738 = vmatprep.subr.mxu0 0.0
      %2739 = vmatpush1.msra.mxu0 0.0
      %2740 = vmatprep.subr.mxu0 0.0
      %2741 = vmatpush1.msra.mxu0 0.0
      %2742 = vmatprep.subr.mxu0 0.0
      %2743 = vmatpush1.msra.mxu0 0.0
      %2744 = vmatprep.subr.mxu0 0.0
      %2745 = vmatpush1.msra.mxu0 0.0
      %2746 = vmatprep.subr.mxu0 0.0
      %2747 = vmatpush1.msra.mxu0 0.0
      %2748 = vmatprep.subr.mxu0 0.0
      %2749 = vmatpush1.msra.mxu0 0.0
      %2750 = vmatprep.subr.mxu0 0.0
      %2751 = vmatpush1.msra.mxu0 0.0
      %2752 = vmatprep.subr.mxu0 0.0
      %2753 = vmatpush1.msra.mxu0 0.0
      %2754 = vmatprep.subr.mxu0 0.0
      %2755 = vmatpush1.msra.mxu0 0.0
      %2756 = vmatprep.mubr.f32.mxu0 0.0
      %2757 = vmatmul.mubr.f32.gmra.mrb[0].mxu0 %v2200
      %v2758 = vpop.f32.mrb[0].mxu0
      %v2759 = vadd.f32 0.0, %v2758
      %v2760 = vpop.f32.mrb[0].mxu0
      %2761 = vdwg.mxu0
      %2762 = vmatprep.subr.mxu0 0.0
      %2763 = vmatpush1.msra.mxu0 %v2178
      %2764 = vmatprep.subr.mxu0 0.0
      %2765 = vmatpush1.msra.mxu0 %v2179
      %2766 = vmatprep.subr.mxu0 0.0
      %2767 = vmatpush1.msra.mxu0 %v2180
      %2768 = vmatprep.subr.mxu0 0.0
      %2769 = vmatpush1.msra.mxu0 %v2181
      %2770 = vmatprep.subr.mxu0 0.0
      %2771 = vmatpush1.msra.mxu0 0.0
      %2772 = vmatprep.subr.mxu0 0.0
      %2773 = vmatpush1.msra.mxu0 0.0
      %2774 = vmatprep.subr.mxu0 0.0
      %2775 = vmatpush1.msra.mxu0 0.0
      %2776 = vmatprep.subr.mxu0 0.0
      %2777 = vmatpush1.msra.mxu0 0.0
      %2778 = vmatprep.subr.mxu0 0.0
      %2779 = vmatpush1.msra.mxu0 0.0
      %2780 = vmatprep.subr.mxu0 0.0
      %2781 = vmatpush1.msra.mxu0 0.0
      %2782 = vmatprep.subr.mxu0 0.0
      %2783 = vmatpush1.msra.mxu0 0.0
      %2784 = vmatprep.subr.mxu0 0.0
      %2785 = vmatpush1.msra.mxu0 0.0
      %2786 = vmatprep.subr.mxu0 0.0
      %2787 = vmatpush1.msra.mxu0 0.0
      %2788 = vmatprep.subr.mxu0 0.0
      %2789 = vmatpush1.msra.mxu0 0.0
      %2790 = vmatprep.subr.mxu0 0.0
      %2791 = vmatpush1.msra.mxu0 0.0
      %2792 = vmatprep.subr.mxu0 0.0
      %2793 = vmatpush1.msra.mxu0 0.0
      %2794 = vmatprep.subr.mxu0 0.0
      %2795 = vmatpush1.msra.mxu0 0.0
      %2796 = vmatprep.subr.mxu0 0.0
      %2797 = vmatpush1.msra.mxu0 0.0
      %2798 = vmatprep.subr.mxu0 0.0
      %2799 = vmatpush1.msra.mxu0 0.0
      %2800 = vmatprep.subr.mxu0 0.0
      %2801 = vmatpush1.msra.mxu0 0.0
      %2802 = vmatprep.subr.mxu0 0.0
      %2803 = vmatpush1.msra.mxu0 0.0
      %2804 = vmatprep.subr.mxu0 0.0
      %2805 = vmatpush1.msra.mxu0 0.0
      %2806 = vmatprep.subr.mxu0 0.0
      %2807 = vmatpush1.msra.mxu0 0.0
      %2808 = vmatprep.subr.mxu0 0.0
      %2809 = vmatpush1.msra.mxu0 0.0
      %2810 = vmatprep.subr.mxu0 0.0
      %2811 = vmatpush1.msra.mxu0 0.0
      %2812 = vmatprep.subr.mxu0 0.0
      %2813 = vmatpush1.msra.mxu0 0.0
      %2814 = vmatprep.subr.mxu0 0.0
      %2815 = vmatpush1.msra.mxu0 0.0
      %2816 = vmatprep.subr.mxu0 0.0
      %2817 = vmatpush1.msra.mxu0 0.0
      %2818 = vmatprep.subr.mxu0 0.0
      %2819 = vmatpush1.msra.mxu0 0.0
      %2820 = vmatprep.subr.mxu0 0.0
      %2821 = vmatpush1.msra.mxu0 0.0
      %2822 = vmatprep.subr.mxu0 0.0
      %2823 = vmatpush1.msra.mxu0 0.0
      %2824 = vmatprep.subr.mxu0 0.0
      %2825 = vmatpush1.msra.mxu0 0.0
      %2826 = vmatprep.mubr.f32.mxu0 0.0
      %2827 = vmatmul.mubr.f32.gmra.mrb[0].mxu0 %v2200
      %v2828 = vpop.f32.mrb[0].mxu0
      %v2829 = vadd.f32 0.0, %v2828
      %v2830 = vpop.f32.mrb[0].mxu0
      %2831 = vdwg.mxu0
      %2832 = vmatprep.subr.mxu0 0.0
      %2833 = vmatpush1.msra.mxu0 %v2182
      %2834 = vmatprep.subr.mxu0 0.0
      %2835 = vmatpush1.msra.mxu0 %v2183
      %2836 = vmatprep.subr.mxu0 0.0
      %2837 = vmatpush1.msra.mxu0 %v2184
      %2838 = vmatprep.subr.mxu0 0.0
      %2839 = vmatpush1.msra.mxu0 %v2185
      %2840 = vmatprep.subr.mxu0 0.0
      %2841 = vmatpush1.msra.mxu0 0.0
      %2842 = vmatprep.subr.mxu0 0.0
      %2843 = vmatpush1.msra.mxu0 0.0
      %2844 = vmatprep.subr.mxu0 0.0
      %2845 = vmatpush1.msra.mxu0 0.0
      %2846 = vmatprep.subr.mxu0 0.0
      %2847 = vmatpush1.msra.mxu0 0.0
      %2848 = vmatprep.subr.mxu0 0.0
      %2849 = vmatpush1.msra.mxu0 0.0
      %2850 = vmatprep.subr.mxu0 0.0
      %2851 = vmatpush1.msra.mxu0 0.0
      %2852 = vmatprep.subr.mxu0 0.0
      %2853 = vmatpush1.msra.mxu0 0.0
      %2854 = vmatprep.subr.mxu0 0.0
      %2855 = vmatpush1.msra.mxu0 0.0
      %2856 = vmatprep.subr.mxu0 0.0
      %2857 = vmatpush1.msra.mxu0 0.0
      %2858 = vmatprep.subr.mxu0 0.0
      %2859 = vmatpush1.msra.mxu0 0.0
      %2860 = vmatprep.subr.mxu0 0.0
      %2861 = vmatpush1.msra.mxu0 0.0
      %2862 = vmatprep.subr.mxu0 0.0
      %2863 = vmatpush1.msra.mxu0 0.0
      %2864 = vmatprep.subr.mxu0 0.0
      %2865 = vmatpush1.msra.mxu0 0.0
      %2866 = vmatprep.subr.mxu0 0.0
      %2867 = vmatpush1.msra.mxu0 0.0
      %2868 = vmatprep.subr.mxu0 0.0
      %2869 = vmatpush1.msra.mxu0 0.0
      %2870 = vmatprep.subr.mxu0 0.0
      %2871 = vmatpush1.msra.mxu0 0.0
      %2872 = vmatprep.subr.mxu0 0.0
      %2873 = vmatpush1.msra.mxu0 0.0
      %2874 = vmatprep.subr.mxu0 0.0
      %2875 = vmatpush1.msra.mxu0 0.0
      %2876 = vmatprep.subr.mxu0 0.0
      %2877 = vmatpush1.msra.mxu0 0.0
      %2878 = vmatprep.subr.mxu0 0.0
      %2879 = vmatpush1.msra.mxu0 0.0
      %2880 = vmatprep.subr.mxu0 0.0
      %2881 = vmatpush1.msra.mxu0 0.0
      %2882 = vmatprep.subr.mxu0 0.0
      %2883 = vmatpush1.msra.mxu0 0.0
      %2884 = vmatprep.subr.mxu0 0.0
      %2885 = vmatpush1.msra.mxu0 0.0
      %2886 = vmatprep.subr.mxu0 0.0
      %2887 = vmatpush1.msra.mxu0 0.0
      %2888 = vmatprep.subr.mxu0 0.0
      %2889 = vmatpush1.msra.mxu0 0.0
      %2890 = vmatprep.subr.mxu0 0.0
      %2891 = vmatpush1.msra.mxu0 0.0
      %2892 = vmatprep.subr.mxu0 0.0
      %2893 = vmatpush1.msra.mxu0 0.0
      %2894 = vmatprep.subr.mxu0 0.0
      %2895 = vmatpush1.msra.mxu0 0.0
      %2896 = vmatprep.mubr.f32.mxu0 0.0
      %2897 = vmatmul.mubr.f32.gmra.mrb[0].mxu0 %v2200
      %v2898 = vpop.f32.mrb[0].mxu0
      %v2899 = vadd.f32 0.0, %v2898
      %v2900 = vpop.f32.mrb[0].mxu0
      %2901 = vdwg.mxu0
      %2902 = vmatprep.subr.mxu0 0.0
      %2903 = vmatpush1.msra.mxu0 %v2186
      %2904 = vmatprep.subr.mxu0 0.0
      %2905 = vmatpush1.msra.mxu0 %v2187
      %2906 = vmatprep.subr.mxu0 0.0
      %2907 = vmatpush1.msra.mxu0 %v2188
      %2908 = vmatprep.subr.mxu0 0.0
      %2909 = vmatpush1.msra.mxu0 %v2189
      %2910 = vmatprep.subr.mxu0 0.0
      %2911 = vmatpush1.msra.mxu0 0.0
      %2912 = vmatprep.subr.mxu0 0.0
      %2913 = vmatpush1.msra.mxu0 0.0
      %2914 = vmatprep.subr.mxu0 0.0
      %2915 = vmatpush1.msra.mxu0 0.0
      %2916 = vmatprep.subr.mxu0 0.0
      %2917 = vmatpush1.msra.mxu0 0.0
      %2918 = vmatprep.subr.mxu0 0.0
      %2919 = vmatpush1.msra.mxu0 0.0
      %2920 = vmatprep.subr.mxu0 0.0
      %2921 = vmatpush1.msra.mxu0 0.0
      %2922 = vmatprep.subr.mxu0 0.0
      %2923 = vmatpush1.msra.mxu0 0.0
      %2924 = vmatprep.subr.mxu0 0.0
      %2925 = vmatpush1.msra.mxu0 0.0
      %2926 = vmatprep.subr.mxu0 0.0
      %2927 = vmatpush1.msra.mxu0 0.0
      %2928 = vmatprep.subr.mxu0 0.0
      %2929 = vmatpush1.msra.mxu0 0.0
      %2930 = vmatprep.subr.mxu0 0.0
      %2931 = vmatpush1.msra.mxu0 0.0
      %2932 = vmatprep.subr.mxu0 0.0
      %2933 = vmatpush1.msra.mxu0 0.0
      %2934 = vmatprep.subr.mxu0 0.0
      %2935 = vmatpush1.msra.mxu0 0.0
      %2936 = vmatprep.subr.mxu0 0.0
      %2937 = vmatpush1.msra.mxu0 0.0
      %2938 = vmatprep.subr.mxu0 0.0
      %2939 = vmatpush1.msra.mxu0 0.0
      %2940 = vmatprep.subr.mxu0 0.0
      %2941 = vmatpush1.msra.mxu0 0.0
      %2942 = vmatprep.subr.mxu0 0.0
      %2943 = vmatpush1.msra.mxu0 0.0
      %2944 = vmatprep.subr.mxu0 0.0
      %2945 = vmatpush1.msra.mxu0 0.0
      %2946 = vmatprep.subr.mxu0 0.0
      %2947 = vmatpush1.msra.mxu0 0.0
      %2948 = vmatprep.subr.mxu0 0.0
      %2949 = vmatpush1.msra.mxu0 0.0
      %2950 = vmatprep.subr.mxu0 0.0
      %2951 = vmatpush1.msra.mxu0 0.0
      %2952 = vmatprep.subr.mxu0 0.0
      %2953 = vmatpush1.msra.mxu0 0.0
      %2954 = vmatprep.subr.mxu0 0.0
      %2955 = vmatpush1.msra.mxu0 0.0
      %2956 = vmatprep.subr.mxu0 0.0
      %2957 = vmatpush1.msra.mxu0 0.0
      %2958 = vmatprep.subr.mxu0 0.0
      %2959 = vmatpush1.msra.mxu0 0.0
      %2960 = vmatprep.subr.mxu0 0.0
      %2961 = vmatpush1.msra.mxu0 0.0
      %2962 = vmatprep.subr.mxu0 0.0
      %2963 = vmatpush1.msra.mxu0 0.0
      %2964 = vmatprep.subr.mxu0 0.0
      %2965 = vmatpush1.msra.mxu0 0.0
      %2966 = vmatprep.mubr.f32.mxu0 0.0
      %2967 = vmatmul.mubr.f32.gmra.mrb[0].mxu0 %v2200
      %v2968 = vpop.f32.mrb[0].mxu0
      %v2969 = vadd.f32 0.0, %v2968
      %v2970 = vpop.f32.mrb[0].mxu0
      %2971 = vdwg.mxu0
      %2972 = vmatprep.subr.mxu0 0.0
      %2973 = vmatpush1.msra.mxu0 %v2190
      %2974 = vmatprep.subr.mxu0 0.0
      %2975 = vmatpush1.msra.mxu0 %v2191
      %2976 = vmatprep.subr.mxu0 0.0
      %2977 = vmatpush1.msra.mxu0 %v2192
      %2978 = vmatprep.subr.mxu0 0.0
      %2979 = vmatpush1.msra.mxu0 %v2193
      %2980 = vmatprep.subr.mxu0 0.0
      %2981 = vmatpush1.msra.mxu0 0.0
      %2982 = vmatprep.subr.mxu0 0.0
      %2983 = vmatpush1.msra.mxu0 0.0
      %2984 = vmatprep.subr.mxu0 0.0
      %2985 = vmatpush1.msra.mxu0 0.0
      %2986 = vmatprep.subr.mxu0 0.0
      %2987 = vmatpush1.msra.mxu0 0.0
      %2988 = vmatprep.subr.mxu0 0.0
      %2989 = vmatpush1.msra.mxu0 0.0
      %2990 = vmatprep.subr.mxu0 0.0
      %2991 = vmatpush1.msra.mxu0 0.0
      %2992 = vmatprep.subr.mxu0 0.0
      %2993 = vmatpush1.msra.mxu0 0.0
      %2994 = vmatprep.subr.mxu0 0.0
      %2995 = vmatpush1.msra.mxu0 0.0
      %2996 = vmatprep.subr.mxu0 0.0
      %2997 = vmatpush1.msra.mxu0 0.0
      %2998 = vmatprep.subr.mxu0 0.0
      %2999 = vmatpush1.msra.mxu0 0.0
      %3000 = vmatprep.subr.mxu0 0.0
      %3001 = vmatpush1.msra.mxu0 0.0
      %3002 = vmatprep.subr.mxu0 0.0
      %3003 = vmatpush1.msra.mxu0 0.0
      %3004 = vmatprep.subr.mxu0 0.0
      %3005 = vmatpush1.msra.mxu0 0.0
      %3006 = vmatprep.subr.mxu0 0.0
      %3007 = vmatpush1.msra.mxu0 0.0
      %3008 = vmatprep.subr.mxu0 0.0
      %3009 = vmatpush1.msra.mxu0 0.0
      %3010 = vmatprep.subr.mxu0 0.0
      %3011 = vmatpush1.msra.mxu0 0.0
      %3012 = vmatprep.subr.mxu0 0.0
      %3013 = vmatpush1.msra.mxu0 0.0
      %3014 = vmatprep.subr.mxu0 0.0
      %3015 = vmatpush1.msra.mxu0 0.0
      %3016 = vmatprep.subr.mxu0 0.0
      %3017 = vmatpush1.msra.mxu0 0.0
      %3018 = vmatprep.subr.mxu0 0.0
      %3019 = vmatpush1.msra.mxu0 0.0
      %3020 = vmatprep.subr.mxu0 0.0
      %3021 = vmatpush1.msra.mxu0 0.0
      %3022 = vmatprep.subr.mxu0 0.0
      %3023 = vmatpush1.msra.mxu0 0.0
      %3024 = vmatprep.subr.mxu0 0.0
      %3025 = vmatpush1.msra.mxu0 0.0
      %3026 = vmatprep.subr.mxu0 0.0
      %3027 = vmatpush1.msra.mxu0 0.0
      %3028 = vmatprep.subr.mxu0 0.0
      %3029 = vmatpush1.msra.mxu0 0.0
      %3030 = vmatprep.subr.mxu0 0.0
      %3031 = vmatpush1.msra.mxu0 0.0
      %3032 = vmatprep.subr.mxu0 0.0
      %3033 = vmatpush1.msra.mxu0 0.0
      %3034 = vmatprep.subr.mxu0 0.0
      %3035 = vmatpush1.msra.mxu0 0.0
      %3036 = vmatprep.mubr.f32.mxu0 0.0
      %3037 = vmatmul.mubr.f32.gmra.mrb[0].mxu0 %v2200
      %v3038 = vpop.f32.mrb[0].mxu0
      %v3039 = vadd.f32 0.0, %v3038
      %v3040 = vpop.f32.mrb[0].mxu0
      %3041 = vdwg.mxu0
      %v3043 = vsel %vm1199, %v2269, 0
      %v3046 = vsel %vm1199, %v2549, 0
      %3048 = vmatprep.subr.mxu0 0.0
      %3049 = vmatpush1.xpose.msra.mxu0 %v3046
      %3050 = vmatprep.subr.mxu0 0.0
      %3051 = vmatpush1.xpose.msra.mxu0 0.0
      %3052 = vmatprep.subr.mxu0 0.0
      %3053 = vmatpush1.xpose.msra.mxu0 0.0
      %3054 = vmatprep.subr.mxu0 0.0
      %3055 = vmatpush1.xpose.msra.mxu0 0.0
      %3056 = vmatprep.subr.mxu0 0.0
      %3057 = vmatpush1.xpose.msra.mxu0 0.0
      %3058 = vmatprep.subr.mxu0 0.0
      %3059 = vmatpush1.xpose.msra.mxu0 0.0
      %3060 = vmatprep.subr.mxu0 0.0
      %3061 = vmatpush1.xpose.msra.mxu0 0.0
      %3062 = vmatprep.subr.mxu0 0.0
      %3063 = vmatpush1.xpose.msra.mxu0 0.0
      %3064 = vmatprep.subr.mxu0 0.0
      %3065 = vmatpush1.xpose.msra.mxu0 0.0
      %3066 = vmatprep.subr.mxu0 0.0
      %3067 = vmatpush1.xpose.msra.mxu0 0.0
      %3068 = vmatprep.subr.mxu0 0.0
      %3069 = vmatpush1.xpose.msra.mxu0 0.0
      %3070 = vmatprep.subr.mxu0 0.0
      %3071 = vmatpush1.xpose.msra.mxu0 0.0
      %3072 = vmatprep.subr.mxu0 0.0
      %3073 = vmatpush1.xpose.msra.mxu0 0.0
      %3074 = vmatprep.subr.mxu0 0.0
      %3075 = vmatpush1.xpose.msra.mxu0 0.0
      %3076 = vmatprep.subr.mxu0 0.0
      %3077 = vmatpush1.xpose.msra.mxu0 0.0
      %3078 = vmatprep.subr.mxu0 0.0
      %3079 = vmatpush1.xpose.msra.mxu0 0.0
      %3080 = vmatprep.subr.mxu0 0.0
      %3081 = vmatpush1.xpose.msra.mxu0 0.0
      %3082 = vmatprep.subr.mxu0 0.0
      %3083 = vmatpush1.xpose.msra.mxu0 0.0
      %3084 = vmatprep.subr.mxu0 0.0
      %3085 = vmatpush1.xpose.msra.mxu0 0.0
      %3086 = vmatprep.subr.mxu0 0.0
      %3087 = vmatpush1.xpose.msra.mxu0 0.0
      %3088 = vmatprep.subr.mxu0 0.0
      %3089 = vmatpush1.xpose.msra.mxu0 0.0
      %3090 = vmatprep.subr.mxu0 0.0
      %3091 = vmatpush1.xpose.msra.mxu0 0.0
      %3092 = vmatprep.subr.mxu0 0.0
      %3093 = vmatpush1.xpose.msra.mxu0 0.0
      %3094 = vmatprep.subr.mxu0 0.0
      %3095 = vmatpush1.xpose.msra.mxu0 0.0
      %3096 = vmatprep.subr.mxu0 0.0
      %3097 = vmatpush1.xpose.msra.mxu0 0.0
      %3098 = vmatprep.subr.mxu0 0.0
      %3099 = vmatpush1.xpose.msra.mxu0 0.0
      %3100 = vmatprep.subr.mxu0 0.0
      %3101 = vmatpush1.xpose.msra.mxu0 0.0
      %3102 = vmatprep.subr.mxu0 0.0
      %3103 = vmatpush1.xpose.msra.mxu0 0.0
      %3104 = vmatprep.subr.mxu0 0.0
      %3105 = vmatpush1.xpose.msra.mxu0 0.0
      %3106 = vmatprep.subr.mxu0 0.0
      %3107 = vmatpush1.xpose.msra.mxu0 0.0
      %3108 = vmatprep.subr.mxu0 0.0
      %3109 = vmatpush1.xpose.msra.mxu0 0.0
      %3110 = vmatprep.subr.mxu0 0.0
      %3111 = vmatpush1.xpose.msra.mxu0 0.0
      %3112 = vmatprep.mubr.f32.mxu0 0.0
      %3113 = vmatmul.mubr.f32.gmra.mrb[0].mxu0 %v3043
      %v3114 = vpop.f32.mrb[0].mxu0
      %v3115 = vadd.f32 0.0, %v3114
      %v3116 = vpop.f32.mrb[0].mxu0
      %3117 = vdwg.mxu0
      %v3119 = vsel %vm1199, %v2339, 0
      %v3122 = vsel %vm1199, %v2619, 0
      %3124 = vmatprep.subr.mxu0 0.0
      %3125 = vmatpush1.xpose.msra.mxu0 %v3122
      %3126 = vmatprep.subr.mxu0 0.0
      %3127 = vmatpush1.xpose.msra.mxu0 0.0
      %3128 = vmatprep.subr.mxu0 0.0
      %3129 = vmatpush1.xpose.msra.mxu0 0.0
      %3130 = vmatprep.subr.mxu0 0.0
      %3131 = vmatpush1.xpose.msra.mxu0 0.0
      %3132 = vmatprep.subr.mxu0 0.0
      %3133 = vmatpush1.xpose.msra.mxu0 0.0
      %3134 = vmatprep.subr.mxu0 0.0
      %3135 = vmatpush1.xpose.msra.mxu0 0.0
      %3136 = vmatprep.subr.mxu0 0.0
      %3137 = vmatpush1.xpose.msra.mxu0 0.0
      %3138 = vmatprep.subr.mxu0 0.0
      %3139 = vmatpush1.xpose.msra.mxu0 0.0
      %3140 = vmatprep.subr.mxu0 0.0
      %3141 = vmatpush1.xpose.msra.mxu0 0.0
      %3142 = vmatprep.subr.mxu0 0.0
      %3143 = vmatpush1.xpose.msra.mxu0 0.0
      %3144 = vmatprep.subr.mxu0 0.0
      %3145 = vmatpush1.xpose.msra.mxu0 0.0
      %3146 = vmatprep.subr.mxu0 0.0
      %3147 = vmatpush1.xpose.msra.mxu0 0.0
      %3148 = vmatprep.subr.mxu0 0.0
      %3149 = vmatpush1.xpose.msra.mxu0 0.0
      %3150 = vmatprep.subr.mxu0 0.0
      %3151 = vmatpush1.xpose.msra.mxu0 0.0
      %3152 = vmatprep.subr.mxu0 0.0
      %3153 = vmatpush1.xpose.msra.mxu0 0.0
      %3154 = vmatprep.subr.mxu0 0.0
      %3155 = vmatpush1.xpose.msra.mxu0 0.0
      %3156 = vmatprep.subr.mxu0 0.0
      %3157 = vmatpush1.xpose.msra.mxu0 0.0
      %3158 = vmatprep.subr.mxu0 0.0
      %3159 = vmatpush1.xpose.msra.mxu0 0.0
      %3160 = vmatprep.subr.mxu0 0.0
      %3161 = vmatpush1.xpose.msra.mxu0 0.0
      %3162 = vmatprep.subr.mxu0 0.0
      %3163 = vmatpush1.xpose.msra.mxu0 0.0
      %3164 = vmatprep.subr.mxu0 0.0
      %3165 = vmatpush1.xpose.msra.mxu0 0.0
      %3166 = vmatprep.subr.mxu0 0.0
      %3167 = vmatpush1.xpose.msra.mxu0 0.0
      %3168 = vmatprep.subr.mxu0 0.0
      %3169 = vmatpush1.xpose.msra.mxu0 0.0
      %3170 = vmatprep.subr.mxu0 0.0
      %3171 = vmatpush1.xpose.msra.mxu0 0.0
      %3172 = vmatprep.subr.mxu0 0.0
      %3173 = vmatpush1.xpose.msra.mxu0 0.0
      %3174 = vmatprep.subr.mxu0 0.0
      %3175 = vmatpush1.xpose.msra.mxu0 0.0
      %3176 = vmatprep.subr.mxu0 0.0
      %3177 = vmatpush1.xpose.msra.mxu0 0.0
      %3178 = vmatprep.subr.mxu0 0.0
      %3179 = vmatpush1.xpose.msra.mxu0 0.0
      %3180 = vmatprep.subr.mxu0 0.0
      %3181 = vmatpush1.xpose.msra.mxu0 0.0
      %3182 = vmatprep.subr.mxu0 0.0
      %3183 = vmatpush1.xpose.msra.mxu0 0.0
      %3184 = vmatprep.subr.mxu0 0.0
      %3185 = vmatpush1.xpose.msra.mxu0 0.0
      %3186 = vmatprep.subr.mxu0 0.0
      %3187 = vmatpush1.xpose.msra.mxu0 0.0
      %3188 = vmatprep.mubr.f32.mxu0 0.0
      %3189 = vmatmul.mubr.f32.gmra.mrb[0].mxu0 %v3119
      %v3190 = vpop.f32.mrb[0].mxu0
      %v3191 = vadd.f32 0.0, %v3190
      %v3192 = vpop.f32.mrb[0].mxu0
      %3193 = vdwg.mxu0
      %v3195 = vsel %vm1199, %v2409, 0
      %v3198 = vsel %vm1199, %v2689, 0
      %3200 = vmatprep.subr.mxu0 0.0
      %3201 = vmatpush1.xpose.msra.mxu0 %v3198
      %3202 = vmatprep.subr.mxu0 0.0
      %3203 = vmatpush1.xpose.msra.mxu0 0.0
      %3204 = vmatprep.subr.mxu0 0.0
      %3205 = vmatpush1.xpose.msra.mxu0 0.0
      %3206 = vmatprep.subr.mxu0 0.0
      %3207 = vmatpush1.xpose.msra.mxu0 0.0
      %3208 = vmatprep.subr.mxu0 0.0
      %3209 = vmatpush1.xpose.msra.mxu0 0.0
      %3210 = vmatprep.subr.mxu0 0.0
      %3211 = vmatpush1.xpose.msra.mxu0 0.0
      %3212 = vmatprep.subr.mxu0 0.0
      %3213 = vmatpush1.xpose.msra.mxu0 0.0
      %3214 = vmatprep.subr.mxu0 0.0
      %3215 = vmatpush1.xpose.msra.mxu0 0.0
      %3216 = vmatprep.subr.mxu0 0.0
      %3217 = vmatpush1.xpose.msra.mxu0 0.0
      %3218 = vmatprep.subr.mxu0 0.0
      %3219 = vmatpush1.xpose.msra.mxu0 0.0
      %3220 = vmatprep.subr.mxu0 0.0
      %3221 = vmatpush1.xpose.msra.mxu0 0.0
      %3222 = vmatprep.subr.mxu0 0.0
      %3223 = vmatpush1.xpose.msra.mxu0 0.0
      %3224 = vmatprep.subr.mxu0 0.0
      %3225 = vmatpush1.xpose.msra.mxu0 0.0
      %3226 = vmatprep.subr.mxu0 0.0
      %3227 = vmatpush1.xpose.msra.mxu0 0.0
      %3228 = vmatprep.subr.mxu0 0.0
      %3229 = vmatpush1.xpose.msra.mxu0 0.0
      %3230 = vmatprep.subr.mxu0 0.0
      %3231 = vmatpush1.xpose.msra.mxu0 0.0
      %3232 = vmatprep.subr.mxu0 0.0
      %3233 = vmatpush1.xpose.msra.mxu0 0.0
      %3234 = vmatprep.subr.mxu0 0.0
      %3235 = vmatpush1.xpose.msra.mxu0 0.0
      %3236 = vmatprep.subr.mxu0 0.0
      %3237 = vmatpush1.xpose.msra.mxu0 0.0
      %3238 = vmatprep.subr.mxu0 0.0
      %3239 = vmatpush1.xpose.msra.mxu0 0.0
      %3240 = vmatprep.subr.mxu0 0.0
      %3241 = vmatpush1.xpose.msra.mxu0 0.0
      %3242 = vmatprep.subr.mxu0 0.0
      %3243 = vmatpush1.xpose.msra.mxu0 0.0
      %3244 = vmatprep.subr.mxu0 0.0
      %3245 = vmatpush1.xpose.msra.mxu0 0.0
      %3246 = vmatprep.subr.mxu0 0.0
      %3247 = vmatpush1.xpose.msra.mxu0 0.0
      %3248 = vmatprep.subr.mxu0 0.0
      %3249 = vmatpush1.xpose.msra.mxu0 0.0
      %3250 = vmatprep.subr.mxu0 0.0
      %3251 = vmatpush1.xpose.msra.mxu0 0.0
      %3252 = vmatprep.subr.mxu0 0.0
      %3253 = vmatpush1.xpose.msra.mxu0 0.0
      %3254 = vmatprep.subr.mxu0 0.0
      %3255 = vmatpush1.xpose.msra.mxu0 0.0
      %3256 = vmatprep.subr.mxu0 0.0
      %3257 = vmatpush1.xpose.msra.mxu0 0.0
      %3258 = vmatprep.subr.mxu0 0.0
      %3259 = vmatpush1.xpose.msra.mxu0 0.0
      %3260 = vmatprep.subr.mxu0 0.0
      %3261 = vmatpush1.xpose.msra.mxu0 0.0
      %3262 = vmatprep.subr.mxu0 0.0
      %3263 = vmatpush1.xpose.msra.mxu0 0.0
      %3264 = vmatprep.mubr.f32.mxu0 0.0
      %3265 = vmatmul.mubr.f32.gmra.mrb[0].mxu0 %v3195
      %v3266 = vpop.f32.mrb[0].mxu0
      %v3267 = vadd.f32 0.0, %v3266
      %v3268 = vpop.f32.mrb[0].mxu0
      %3269 = vdwg.mxu0
      %v3271 = vsel %vm1199, %v2479, 0
      %v3274 = vsel %vm1199, %v2759, 0
      %3276 = vmatprep.subr.mxu0 0.0
      %3277 = vmatpush1.xpose.msra.mxu0 %v3274
      %3278 = vmatprep.subr.mxu0 0.0
      %3279 = vmatpush1.xpose.msra.mxu0 0.0
      %3280 = vmatprep.subr.mxu0 0.0
      %3281 = vmatpush1.xpose.msra.mxu0 0.0
      %3282 = vmatprep.subr.mxu0 0.0
      %3283 = vmatpush1.xpose.msra.mxu0 0.0
      %3284 = vmatprep.subr.mxu0 0.0
      %3285 = vmatpush1.xpose.msra.mxu0 0.0
      %3286 = vmatprep.subr.mxu0 0.0
      %3287 = vmatpush1.xpose.msra.mxu0 0.0
      %3288 = vmatprep.subr.mxu0 0.0
      %3289 = vmatpush1.xpose.msra.mxu0 0.0
      %3290 = vmatprep.subr.mxu0 0.0
      %3291 = vmatpush1.xpose.msra.mxu0 0.0
      %3292 = vmatprep.subr.mxu0 0.0
      %3293 = vmatpush1.xpose.msra.mxu0 0.0
      %3294 = vmatprep.subr.mxu0 0.0
      %3295 = vmatpush1.xpose.msra.mxu0 0.0
      %3296 = vmatprep.subr.mxu0 0.0
      %3297 = vmatpush1.xpose.msra.mxu0 0.0
      %3298 = vmatprep.subr.mxu0 0.0
      %3299 = vmatpush1.xpose.msra.mxu0 0.0
      %3300 = vmatprep.subr.mxu0 0.0
      %3301 = vmatpush1.xpose.msra.mxu0 0.0
      %3302 = vmatprep.subr.mxu0 0.0
      %3303 = vmatpush1.xpose.msra.mxu0 0.0
      %3304 = vmatprep.subr.mxu0 0.0
      %3305 = vmatpush1.xpose.msra.mxu0 0.0
      %3306 = vmatprep.subr.mxu0 0.0
      %3307 = vmatpush1.xpose.msra.mxu0 0.0
      %3308 = vmatprep.subr.mxu0 0.0
      %3309 = vmatpush1.xpose.msra.mxu0 0.0
      %3310 = vmatprep.subr.mxu0 0.0
      %3311 = vmatpush1.xpose.msra.mxu0 0.0
      %3312 = vmatprep.subr.mxu0 0.0
      %3313 = vmatpush1.xpose.msra.mxu0 0.0
      %3314 = vmatprep.subr.mxu0 0.0
      %3315 = vmatpush1.xpose.msra.mxu0 0.0
      %3316 = vmatprep.subr.mxu0 0.0
      %3317 = vmatpush1.xpose.msra.mxu0 0.0
      %3318 = vmatprep.subr.mxu0 0.0
      %3319 = vmatpush1.xpose.msra.mxu0 0.0
      %3320 = vmatprep.subr.mxu0 0.0
      %3321 = vmatpush1.xpose.msra.mxu0 0.0
      %3322 = vmatprep.subr.mxu0 0.0
      %3323 = vmatpush1.xpose.msra.mxu0 0.0
      %3324 = vmatprep.subr.mxu0 0.0
      %3325 = vmatpush1.xpose.msra.mxu0 0.0
      %3326 = vmatprep.subr.mxu0 0.0
      %3327 = vmatpush1.xpose.msra.mxu0 0.0
      %3328 = vmatprep.subr.mxu0 0.0
      %3329 = vmatpush1.xpose.msra.mxu0 0.0
      %3330 = vmatprep.subr.mxu0 0.0
      %3331 = vmatpush1.xpose.msra.mxu0 0.0
      %3332 = vmatprep.subr.mxu0 0.0
      %3333 = vmatpush1.xpose.msra.mxu0 0.0
      %3334 = vmatprep.subr.mxu0 0.0
      %3335 = vmatpush1.xpose.msra.mxu0 0.0
      %3336 = vmatprep.subr.mxu0 0.0
      %3337 = vmatpush1.xpose.msra.mxu0 0.0
      %3338 = vmatprep.subr.mxu0 0.0
      %3339 = vmatpush1.xpose.msra.mxu0 0.0
      %3340 = vmatprep.mubr.f32.mxu0 0.0
      %3341 = vmatmul.mubr.f32.gmra.mrb[0].mxu0 %v3271
      %v3342 = vpop.f32.mrb[0].mxu0
      %v3343 = vadd.f32 0.0, %v3342
      %v3344 = vpop.f32.mrb[0].mxu0
      %3345 = vdwg.mxu0
      %v3346 = vmul.f32 %v3115, %v302
      %v3347 = vmul.f32 %v3191, %v302
      %v3348 = vmul.f32 %v3267, %v302
      %v3349 = vmul.f32 %v3343, %v302
      %v3350 = vsel %vm1199, %v3346, -inf
      %3351 = vmax.xlane.f32.xlu0 %v3350
      %v3352 = vpop.xlane.xlu0 %3351
      %v3353 = vsel %vm1199, %v3347, -inf
      %3354 = vmax.xlane.f32.xlu0 %v3353
      %v3355 = vpop.xlane.xlu0 %3354
      %v3356 = vsel %vm1199, %v3348, -inf
      %3357 = vmax.xlane.f32.xlu0 %v3356
      %v3358 = vpop.xlane.xlu0 %3357
      %v3359 = vsel %vm1199, %v3349, -inf
      %3360 = vmax.xlane.f32.xlu0 %v3359
      %v3361 = vpop.xlane.xlu0 %3360
      %v3362 = vsub.f32 %v3346, %v3352
      %v3363 = vsub.f32 %v3347, %v3355
      %v3364 = vsub.f32 %v3348, %v3358
      %v3365 = vsub.f32 %v3349, %v3361
      %v3366 = vmul.f32 %v3362, 1.442695
      %v3367 = vpow.pop %v3366
      %v3368 = vmul.f32 %v3363, 1.442695
      %v3369 = vpow.pop %v3368
      %v3370 = vmul.f32 %v3364, 1.442695
      %v3371 = vpow.pop %v3370
      %v3372 = vmul.f32 %v3365, 1.442695
      %v3373 = vpow.pop %v3372
      %v3374 = vsel %vm1199, %v3367, 0.0
      %3375 = vadd.xlane.f32.xlu0 %v3374
      %v3376 = vpop.xlane.xlu0 %3375
      %v3377 = vsel %vm1199, %v3369, 0.0
      %3378 = vadd.xlane.f32.xlu0 %v3377
      %v3379 = vpop.xlane.xlu0 %3378
      %v3380 = vsel %vm1199, %v3371, 0.0
      %3381 = vadd.xlane.f32.xlu0 %v3380
      %v3382 = vpop.xlane.xlu0 %3381
      %v3383 = vsel %vm1199, %v3373, 0.0
      %3384 = vadd.xlane.f32.xlu0 %v3383
      %v3385 = vpop.xlane.xlu0 %3384
      %v3386 = vrcp.pop %v3376
      %v3387 = vrcp.pop %v3379
      %v3388 = vrcp.pop %v3382
      %v3389 = vrcp.pop %v3385
      %v3391 = vsel %vm1199, %v3367, 0
      %3393 = vmatprep.subr.mxu0 0.0
      %3394 = vmatpush1.msra.mxu0 %v2829
      %3395 = vmatprep.subr.mxu0 0.0
      %3396 = vmatpush1.msra.mxu0 0.0
      %3397 = vmatprep.subr.mxu0 0.0
      %3398 = vmatpush1.msra.mxu0 0.0
      %3399 = vmatprep.subr.mxu0 0.0
      %3400 = vmatpush1.msra.mxu0 0.0
      %3401 = vmatprep.subr.mxu0 0.0
      %3402 = vmatpush1.msra.mxu0 0.0
      %3403 = vmatprep.subr.mxu0 0.0
      %3404 = vmatpush1.msra.mxu0 0.0
      %3405 = vmatprep.subr.mxu0 0.0
      %3406 = vmatpush1.msra.mxu0 0.0
      %3407 = vmatprep.subr.mxu0 0.0
      %3408 = vmatpush1.msra.mxu0 0.0
      %3409 = vmatprep.subr.mxu0 0.0
      %3410 = vmatpush1.msra.mxu0 0.0
      %3411 = vmatprep.subr.mxu0 0.0
      %3412 = vmatpush1.msra.mxu0 0.0
      %3413 = vmatprep.subr.mxu0 0.0
      %3414 = vmatpush1.msra.mxu0 0.0
      %3415 = vmatprep.subr.mxu0 0.0
      %3416 = vmatpush1.msra.mxu0 0.0
      %3417 = vmatprep.subr.mxu0 0.0
      %3418 = vmatpush1.msra.mxu0 0.0
      %3419 = vmatprep.subr.mxu0 0.0
      %3420 = vmatpush1.msra.mxu0 0.0
      %3421 = vmatprep.subr.mxu0 0.0
      %3422 = vmatpush1.msra.mxu0 0.0
      %3423 = vmatprep.subr.mxu0 0.0
      %3424 = vmatpush1.msra.mxu0 0.0
      %3425 = vmatprep.subr.mxu0 0.0
      %3426 = vmatpush1.msra.mxu0 0.0
      %3427 = vmatprep.subr.mxu0 0.0
      %3428 = vmatpush1.msra.mxu0 0.0
      %3429 = vmatprep.subr.mxu0 0.0
      %3430 = vmatpush1.msra.mxu0 0.0
      %3431 = vmatprep.subr.mxu0 0.0
      %3432 = vmatpush1.msra.mxu0 0.0
      %3433 = vmatprep.subr.mxu0 0.0
      %3434 = vmatpush1.msra.mxu0 0.0
      %3435 = vmatprep.subr.mxu0 0.0
      %3436 = vmatpush1.msra.mxu0 0.0
      %3437 = vmatprep.subr.mxu0 0.0
      %3438 = vmatpush1.msra.mxu0 0.0
      %3439 = vmatprep.subr.mxu0 0.0
      %3440 = vmatpush1.msra.mxu0 0.0
      %3441 = vmatprep.subr.mxu0 0.0
      %3442 = vmatpush1.msra.mxu0 0.0
      %3443 = vmatprep.subr.mxu0 0.0
      %3444 = vmatpush1.msra.mxu0 0.0
      %3445 = vmatprep.subr.mxu0 0.0
      %3446 = vmatpush1.msra.mxu0 0.0
      %3447 = vmatprep.subr.mxu0 0.0
      %3448 = vmatpush1.msra.mxu0 0.0
      %3449 = vmatprep.subr.mxu0 0.0
      %3450 = vmatpush1.msra.mxu0 0.0
      %3451 = vmatprep.subr.mxu0 0.0
      %3452 = vmatpush1.msra.mxu0 0.0
      %3453 = vmatprep.subr.mxu0 0.0
      %3454 = vmatpush1.msra.mxu0 0.0
      %3455 = vmatprep.subr.mxu0 0.0
      %3456 = vmatpush1.msra.mxu0 0.0
      %3457 = vmatprep.mubr.f32.mxu0 0.0
      %3458 = vmatmul.mubr.f32.gmra.mrb[0].mxu0 %v3391
      %v3459 = vpop.f32.mrb[0].mxu0
      %v3460 = vadd.f32 0.0, %v3459
      %v3461 = vpop.f32.mrb[0].mxu0
      %3462 = vdwg.mxu0
      %v3464 = vsel %vm1199, %v3369, 0
      %3466 = vmatprep.subr.mxu0 0.0
      %3467 = vmatpush1.msra.mxu0 %v2899
      %3468 = vmatprep.subr.mxu0 0.0
      %3469 = vmatpush1.msra.mxu0 0.0
      %3470 = vmatprep.subr.mxu0 0.0
      %3471 = vmatpush1.msra.mxu0 0.0
      %3472 = vmatprep.subr.mxu0 0.0
      %3473 = vmatpush1.msra.mxu0 0.0
      %3474 = vmatprep.subr.mxu0 0.0
      %3475 = vmatpush1.msra.mxu0 0.0
      %3476 = vmatprep.subr.mxu0 0.0
      %3477 = vmatpush1.msra.mxu0 0.0
      %3478 = vmatprep.subr.mxu0 0.0
      %3479 = vmatpush1.msra.mxu0 0.0
      %3480 = vmatprep.subr.mxu0 0.0
      %3481 = vmatpush1.msra.mxu0 0.0
      %3482 = vmatprep.subr.mxu0 0.0
      %3483 = vmatpush1.msra.mxu0 0.0
      %3484 = vmatprep.subr.mxu0 0.0
      %3485 = vmatpush1.msra.mxu0 0.0
      %3486 = vmatprep.subr.mxu0 0.0
      %3487 = vmatpush1.msra.mxu0 0.0
      %3488 = vmatprep.subr.mxu0 0.0
      %3489 = vmatpush1.msra.mxu0 0.0
      %3490 = vmatprep.subr.mxu0 0.0
      %3491 = vmatpush1.msra.mxu0 0.0
      %3492 = vmatprep.subr.mxu0 0.0
      %3493 = vmatpush1.msra.mxu0 0.0
      %3494 = vmatprep.subr.mxu0 0.0
      %3495 = vmatpush1.msra.mxu0 0.0
      %3496 = vmatprep.subr.mxu0 0.0
      %3497 = vmatpush1.msra.mxu0 0.0
      %3498 = vmatprep.subr.mxu0 0.0
      %3499 = vmatpush1.msra.mxu0 0.0
      %3500 = vmatprep.subr.mxu0 0.0
      %3501 = vmatpush1.msra.mxu0 0.0
      %3502 = vmatprep.subr.mxu0 0.0
      %3503 = vmatpush1.msra.mxu0 0.0
      %3504 = vmatprep.subr.mxu0 0.0
      %3505 = vmatpush1.msra.mxu0 0.0
      %3506 = vmatprep.subr.mxu0 0.0
      %3507 = vmatpush1.msra.mxu0 0.0
      %3508 = vmatprep.subr.mxu0 0.0
      %3509 = vmatpush1.msra.mxu0 0.0
      %3510 = vmatprep.subr.mxu0 0.0
      %3511 = vmatpush1.msra.mxu0 0.0
      %3512 = vmatprep.subr.mxu0 0.0
      %3513 = vmatpush1.msra.mxu0 0.0
      %3514 = vmatprep.subr.mxu0 0.0
      %3515 = vmatpush1.msra.mxu0 0.0
      %3516 = vmatprep.subr.mxu0 0.0
      %3517 = vmatpush1.msra.mxu0 0.0
      %3518 = vmatprep.subr.mxu0 0.0
      %3519 = vmatpush1.msra.mxu0 0.0
      %3520 = vmatprep.subr.mxu0 0.0
      %3521 = vmatpush1.msra.mxu0 0.0
      %3522 = vmatprep.subr.mxu0 0.0
      %3523 = vmatpush1.msra.mxu0 0.0
      %3524 = vmatprep.subr.mxu0 0.0
      %3525 = vmatpush1.msra.mxu0 0.0
      %3526 = vmatprep.subr.mxu0 0.0
      %3527 = vmatpush1.msra.mxu0 0.0
      %3528 = vmatprep.subr.mxu0 0.0
      %3529 = vmatpush1.msra.mxu0 0.0
      %3530 = vmatprep.mubr.f32.mxu0 0.0
      %3531 = vmatmul.mubr.f32.gmra.mrb[0].mxu0 %v3464
      %v3532 = vpop.f32.mrb[0].mxu0
      %v3533 = vadd.f32 0.0, %v3532
      %v3534 = vpop.f32.mrb[0].mxu0
      %3535 = vdwg.mxu0
      %v3537 = vsel %vm1199, %v3371, 0
      %3539 = vmatprep.subr.mxu0 0.0
      %3540 = vmatpush1.msra.mxu0 %v2969
      %3541 = vmatprep.subr.mxu0 0.0
      %3542 = vmatpush1.msra.mxu0 0.0
      %3543 = vmatprep.subr.mxu0 0.0
      %3544 = vmatpush1.msra.mxu0 0.0
      %3545 = vmatprep.subr.mxu0 0.0
      %3546 = vmatpush1.msra.mxu0 0.0
      %3547 = vmatprep.subr.mxu0 0.0
      %3548 = vmatpush1.msra.mxu0 0.0
      %3549 = vmatprep.subr.mxu0 0.0
      %3550 = vmatpush1.msra.mxu0 0.0
      %3551 = vmatprep.subr.mxu0 0.0
      %3552 = vmatpush1.msra.mxu0 0.0
      %3553 = vmatprep.subr.mxu0 0.0
      %3554 = vmatpush1.msra.mxu0 0.0
      %3555 = vmatprep.subr.mxu0 0.0
      %3556 = vmatpush1.msra.mxu0 0.0
      %3557 = vmatprep.subr.mxu0 0.0
      %3558 = vmatpush1.msra.mxu0 0.0
      %3559 = vmatprep.subr.mxu0 0.0
      %3560 = vmatpush1.msra.mxu0 0.0
      %3561 = vmatprep.subr.mxu0 0.0
      %3562 = vmatpush1.msra.mxu0 0.0
      %3563 = vmatprep.subr.mxu0 0.0
      %3564 = vmatpush1.msra.mxu0 0.0
      %3565 = vmatprep.subr.mxu0 0.0
      %3566 = vmatpush1.msra.mxu0 0.0
      %3567 = vmatprep.subr.mxu0 0.0
      %3568 = vmatpush1.msra.mxu0 0.0
      %3569 = vmatprep.subr.mxu0 0.0
      %3570 = vmatpush1.msra.mxu0 0.0
      %3571 = vmatprep.subr.mxu0 0.0
      %3572 = vmatpush1.msra.mxu0 0.0
      %3573 = vmatprep.subr.mxu0 0.0
      %3574 = vmatpush1.msra.mxu0 0.0
      %3575 = vmatprep.subr.mxu0 0.0
      %3576 = vmatpush1.msra.mxu0 0.0
      %3577 = vmatprep.subr.mxu0 0.0
      %3578 = vmatpush1.msra.mxu0 0.0
      %3579 = vmatprep.subr.mxu0 0.0
      %3580 = vmatpush1.msra.mxu0 0.0
      %3581 = vmatprep.subr.mxu0 0.0
      %3582 = vmatpush1.msra.mxu0 0.0
      %3583 = vmatprep.subr.mxu0 0.0
      %3584 = vmatpush1.msra.mxu0 0.0
      %3585 = vmatprep.subr.mxu0 0.0
      %3586 = vmatpush1.msra.mxu0 0.0
      %3587 = vmatprep.subr.mxu0 0.0
      %3588 = vmatpush1.msra.mxu0 0.0
      %3589 = vmatprep.subr.mxu0 0.0
      %3590 = vmatpush1.msra.mxu0 0.0
      %3591 = vmatprep.subr.mxu0 0.0
      %3592 = vmatpush1.msra.mxu0 0.0
      %3593 = vmatprep.subr.mxu0 0.0
      %3594 = vmatpush1.msra.mxu0 0.0
      %3595 = vmatprep.subr.mxu0 0.0
      %3596 = vmatpush1.msra.mxu0 0.0
      %3597 = vmatprep.subr.mxu0 0.0
      %3598 = vmatpush1.msra.mxu0 0.0
      %3599 = vmatprep.subr.mxu0 0.0
      %3600 = vmatpush1.msra.mxu0 0.0
      %3601 = vmatprep.subr.mxu0 0.0
      %3602 = vmatpush1.msra.mxu0 0.0
      %3603 = vmatprep.mubr.f32.mxu0 0.0
      %3604 = vmatmul.mubr.f32.gmra.mrb[0].mxu0 %v3537
      %v3605 = vpop.f32.mrb[0].mxu0
      %v3606 = vadd.f32 0.0, %v3605
      %v3607 = vpop.f32.mrb[0].mxu0
      %3608 = vdwg.mxu0
      %v3610 = vsel %vm1199, %v3373, 0
      %3612 = vmatprep.subr.mxu0 0.0
      %3613 = vmatpush1.msra.mxu0 %v3039
      %3614 = vmatprep.subr.mxu0 0.0
      %3615 = vmatpush1.msra.mxu0 0.0
      %3616 = vmatprep.subr.mxu0 0.0
      %3617 = vmatpush1.msra.mxu0 0.0
      %3618 = vmatprep.subr.mxu0 0.0
      %3619 = vmatpush1.msra.mxu0 0.0
      %3620 = vmatprep.subr.mxu0 0.0
      %3621 = vmatpush1.msra.mxu0 0.0
      %3622 = vmatprep.subr.mxu0 0.0
      %3623 = vmatpush1.msra.mxu0 0.0
      %3624 = vmatprep.subr.mxu0 0.0
      %3625 = vmatpush1.msra.mxu0 0.0
      %3626 = vmatprep.subr.mxu0 0.0
      %3627 = vmatpush1.msra.mxu0 0.0
      %3628 = vmatprep.subr.mxu0 0.0
      %3629 = vmatpush1.msra.mxu0 0.0
      %3630 = vmatprep.subr.mxu0 0.0
      %3631 = vmatpush1.msra.mxu0 0.0
      %3632 = vmatprep.subr.mxu0 0.0
      %3633 = vmatpush1.msra.mxu0 0.0
      %3634 = vmatprep.subr.mxu0 0.0
      %3635 = vmatpush1.msra.mxu0 0.0
      %3636 = vmatprep.subr.mxu0 0.0
      %3637 = vmatpush1.msra.mxu0 0.0
      %3638 = vmatprep.subr.mxu0 0.0
      %3639 = vmatpush1.msra.mxu0 0.0
      %3640 = vmatprep.subr.mxu0 0.0
      %3641 = vmatpush1.msra.mxu0 0.0
      %3642 = vmatprep.subr.mxu0 0.0
      %3643 = vmatpush1.msra.mxu0 0.0
      %3644 = vmatprep.subr.mxu0 0.0
      %3645 = vmatpush1.msra.mxu0 0.0
      %3646 = vmatprep.subr.mxu0 0.0
      %3647 = vmatpush1.msra.mxu0 0.0
      %3648 = vmatprep.subr.mxu0 0.0
      %3649 = vmatpush1.msra.mxu0 0.0
      %3650 = vmatprep.subr.mxu0 0.0
      %3651 = vmatpush1.msra.mxu0 0.0
      %3652 = vmatprep.subr.mxu0 0.0
      %3653 = vmatpush1.msra.mxu0 0.0
      %3654 = vmatprep.subr.mxu0 0.0
      %3655 = vmatpush1.msra.mxu0 0.0
      %3656 = vmatprep.subr.mxu0 0.0
      %3657 = vmatpush1.msra.mxu0 0.0
      %3658 = vmatprep.subr.mxu0 0.0
      %3659 = vmatpush1.msra.mxu0 0.0
      %3660 = vmatprep.subr.mxu0 0.0
      %3661 = vmatpush1.msra.mxu0 0.0
      %3662 = vmatprep.subr.mxu0 0.0
      %3663 = vmatpush1.msra.mxu0 0.0
      %3664 = vmatprep.subr.mxu0 0.0
      %3665 = vmatpush1.msra.mxu0 0.0
      %3666 = vmatprep.subr.mxu0 0.0
      %3667 = vmatpush1.msra.mxu0 0.0
      %3668 = vmatprep.subr.mxu0 0.0
      %3669 = vmatpush1.msra.mxu0 0.0
      %3670 = vmatprep.subr.mxu0 0.0
      %3671 = vmatpush1.msra.mxu0 0.0
      %3672 = vmatprep.subr.mxu0 0.0
      %3673 = vmatpush1.msra.mxu0 0.0
      %3674 = vmatprep.subr.mxu0 0.0
      %3675 = vmatpush1.msra.mxu0 0.0
      %3676 = vmatprep.mubr.f32.mxu0 0.0
      %3677 = vmatmul.mubr.f32.gmra.mrb[0].mxu0 %v3610
      %v3678 = vpop.f32.mrb[0].mxu0
      %v3679 = vadd.f32 0.0, %v3678
      %v3680 = vpop.f32.mrb[0].mxu0
      %3681 = vdwg.mxu0
      %v3682 = vmul.f32 %v3460, %v3386
      %v3683 = vmul.f32 %v3533, %v3387
      %v3684 = vmul.f32 %v3606, %v3388
      %v3685 = vmul.f32 %v3679, %v3389
      %v3687 = vsel %vm1199, %v3682, 0
      %3689 = vmatprep.subr.mxu0 0.0
      %3690 = vmatpush1.msra.mxu0 %v2195
      %3691 = vmatprep.subr.mxu0 0.0
      %3692 = vmatpush1.msra.mxu0 0.0
      %3693 = vmatprep.subr.mxu0 0.0
      %3694 = vmatpush1.msra.mxu0 0.0
      %3695 = vmatprep.subr.mxu0 0.0
      %3696 = vmatpush1.msra.mxu0 0.0
      %3697 = vmatprep.subr.mxu0 0.0
      %3698 = vmatpush1.msra.mxu0 0.0
      %3699 = vmatprep.subr.mxu0 0.0
      %3700 = vmatpush1.msra.mxu0 0.0
      %3701 = vmatprep.subr.mxu0 0.0
      %3702 = vmatpush1.msra.mxu0 0.0
      %3703 = vmatprep.subr.mxu0 0.0
      %3704 = vmatpush1.msra.mxu0 0.0
      %3705 = vmatprep.subr.mxu0 0.0
      %3706 = vmatpush1.msra.mxu0 0.0
      %3707 = vmatprep.subr.mxu0 0.0
      %3708 = vmatpush1.msra.mxu0 0.0
      %3709 = vmatprep.subr.mxu0 0.0
      %3710 = vmatpush1.msra.mxu0 0.0
      %3711 = vmatprep.subr.mxu0 0.0
      %3712 = vmatpush1.msra.mxu0 0.0
      %3713 = vmatprep.subr.mxu0 0.0
      %3714 = vmatpush1.msra.mxu0 0.0
      %3715 = vmatprep.subr.mxu0 0.0
      %3716 = vmatpush1.msra.mxu0 0.0
      %3717 = vmatprep.subr.mxu0 0.0
      %3718 = vmatpush1.msra.mxu0 0.0
      %3719 = vmatprep.subr.mxu0 0.0
      %3720 = vmatpush1.msra.mxu0 0.0
      %3721 = vmatprep.subr.mxu0 0.0
      %3722 = vmatpush1.msra.mxu0 0.0
      %3723 = vmatprep.subr.mxu0 0.0
      %3724 = vmatpush1.msra.mxu0 0.0
      %3725 = vmatprep.subr.mxu0 0.0
      %3726 = vmatpush1.msra.mxu0 0.0
      %3727 = vmatprep.subr.mxu0 0.0
      %3728 = vmatpush1.msra.mxu0 0.0
      %3729 = vmatprep.subr.mxu0 0.0
      %3730 = vmatpush1.msra.mxu0 0.0
      %3731 = vmatprep.subr.mxu0 0.0
      %3732 = vmatpush1.msra.mxu0 0.0
      %3733 = vmatprep.subr.mxu0 0.0
      %3734 = vmatpush1.msra.mxu0 0.0
      %3735 = vmatprep.subr.mxu0 0.0
      %3736 = vmatpush1.msra.mxu0 0.0
      %3737 = vmatprep.subr.mxu0 0.0
      %3738 = vmatpush1.msra.mxu0 0.0
      %3739 = vmatprep.subr.mxu0 0.0
      %3740 = vmatpush1.msra.mxu0 0.0
      %3741 = vmatprep.subr.mxu0 0.0
      %3742 = vmatpush1.msra.mxu0 0.0
      %3743 = vmatprep.subr.mxu0 0.0
      %3744 = vmatpush1.msra.mxu0 0.0
      %3745 = vmatprep.subr.mxu0 0.0
      %3746 = vmatpush1.msra.mxu0 0.0
      %3747 = vmatprep.subr.mxu0 0.0
      %3748 = vmatpush1.msra.mxu0 0.0
      %3749 = vmatprep.subr.mxu0 0.0
      %3750 = vmatpush1.msra.mxu0 0.0
      %3751 = vmatprep.subr.mxu0 0.0
      %3752 = vmatpush1.msra.mxu0 0.0
      %3753 = vmatprep.mubr.f32.mxu0 0.0
      %3754 = vmatmul.mubr.f32.gmra.mrb[0].mxu0 %v3687
      %v3755 = vpop.f32.mrb[0].mxu0
      %v3756 = vadd.f32 0.0, %v3755
      %v3757 = vpop.f32.mrb[0].mxu0
      %3758 = vdwg.mxu0
      %v3760 = vsel %vm1199, %v3683, 0
      %3762 = vmatprep.subr.mxu0 0.0
      %3763 = vmatpush1.msra.mxu0 %v2196
      %3764 = vmatprep.subr.mxu0 0.0
      %3765 = vmatpush1.msra.mxu0 0.0
      %3766 = vmatprep.subr.mxu0 0.0
      %3767 = vmatpush1.msra.mxu0 0.0
      %3768 = vmatprep.subr.mxu0 0.0
      %3769 = vmatpush1.msra.mxu0 0.0
      %3770 = vmatprep.subr.mxu0 0.0
      %3771 = vmatpush1.msra.mxu0 0.0
      %3772 = vmatprep.subr.mxu0 0.0
      %3773 = vmatpush1.msra.mxu0 0.0
      %3774 = vmatprep.subr.mxu0 0.0
      %3775 = vmatpush1.msra.mxu0 0.0
      %3776 = vmatprep.subr.mxu0 0.0
      %3777 = vmatpush1.msra.mxu0 0.0
      %3778 = vmatprep.subr.mxu0 0.0
      %3779 = vmatpush1.msra.mxu0 0.0
      %3780 = vmatprep.subr.mxu0 0.0
      %3781 = vmatpush1.msra.mxu0 0.0
      %3782 = vmatprep.subr.mxu0 0.0
      %3783 = vmatpush1.msra.mxu0 0.0
      %3784 = vmatprep.subr.mxu0 0.0
      %3785 = vmatpush1.msra.mxu0 0.0
      %3786 = vmatprep.subr.mxu0 0.0
      %3787 = vmatpush1.msra.mxu0 0.0
      %3788 = vmatprep.subr.mxu0 0.0
      %3789 = vmatpush1.msra.mxu0 0.0
      %3790 = vmatprep.subr.mxu0 0.0
      %3791 = vmatpush1.msra.mxu0 0.0
      %3792 = vmatprep.subr.mxu0 0.0
      %3793 = vmatpush1.msra.mxu0 0.0
      %3794 = vmatprep.subr.mxu0 0.0
      %3795 = vmatpush1.msra.mxu0 0.0
      %3796 = vmatprep.subr.mxu0 0.0
      %3797 = vmatpush1.msra.mxu0 0.0
      %3798 = vmatprep.subr.mxu0 0.0
      %3799 = vmatpush1.msra.mxu0 0.0
      %3800 = vmatprep.subr.mxu0 0.0
      %3801 = vmatpush1.msra.mxu0 0.0
      %3802 = vmatprep.subr.mxu0 0.0
      %3803 = vmatpush1.msra.mxu0 0.0
      %3804 = vmatprep.subr.mxu0 0.0
      %3805 = vmatpush1.msra.mxu0 0.0
      %3806 = vmatprep.subr.mxu0 0.0
      %3807 = vmatpush1.msra.mxu0 0.0
      %3808 = vmatprep.subr.mxu0 0.0
      %3809 = vmatpush1.msra.mxu0 0.0
      %3810 = vmatprep.subr.mxu0 0.0
      %3811 = vmatpush1.msra.mxu0 0.0
      %3812 = vmatprep.subr.mxu0 0.0
      %3813 = vmatpush1.msra.mxu0 0.0
      %3814 = vmatprep.subr.mxu0 0.0
      %3815 = vmatpush1.msra.mxu0 0.0
      %3816 = vmatprep.subr.mxu0 0.0
      %3817 = vmatpush1.msra.mxu0 0.0
      %3818 = vmatprep.subr.mxu0 0.0
      %3819 = vmatpush1.msra.mxu0 0.0
      %3820 = vmatprep.subr.mxu0 0.0
      %3821 = vmatpush1.msra.mxu0 0.0
      %3822 = vmatprep.subr.mxu0 0.0
      %3823 = vmatpush1.msra.mxu0 0.0
      %3824 = vmatprep.subr.mxu0 0.0
      %3825 = vmatpush1.msra.mxu0 0.0
      %3826 = vmatprep.mubr.f32.mxu0 0.0
      %3827 = vmatmul.mubr.f32.gmra.mrb[0].mxu0 %v3760
      %v3828 = vpop.f32.mrb[0].mxu0
      %v3829 = vadd.f32 0.0, %v3828
      %v3830 = vpop.f32.mrb[0].mxu0
      %3831 = vdwg.mxu0
      %v3833 = vsel %vm1199, %v3684, 0
      %3835 = vmatprep.subr.mxu0 0.0
      %3836 = vmatpush1.msra.mxu0 %v2197
      %3837 = vmatprep.subr.mxu0 0.0
      %3838 = vmatpush1.msra.mxu0 0.0
      %3839 = vmatprep.subr.mxu0 0.0
      %3840 = vmatpush1.msra.mxu0 0.0
      %3841 = vmatprep.subr.mxu0 0.0
      %3842 = vmatpush1.msra.mxu0 0.0
      %3843 = vmatprep.subr.mxu0 0.0
      %3844 = vmatpush1.msra.mxu0 0.0
      %3845 = vmatprep.subr.mxu0 0.0
      %3846 = vmatpush1.msra.mxu0 0.0
      %3847 = vmatprep.subr.mxu0 0.0
      %3848 = vmatpush1.msra.mxu0 0.0
      %3849 = vmatprep.subr.mxu0 0.0
      %3850 = vmatpush1.msra.mxu0 0.0
      %3851 = vmatprep.subr.mxu0 0.0
      %3852 = vmatpush1.msra.mxu0 0.0
      %3853 = vmatprep.subr.mxu0 0.0
      %3854 = vmatpush1.msra.mxu0 0.0
      %3855 = vmatprep.subr.mxu0 0.0
      %3856 = vmatpush1.msra.mxu0 0.0
      %3857 = vmatprep.subr.mxu0 0.0
      %3858 = vmatpush1.msra.mxu0 0.0
      %3859 = vmatprep.subr.mxu0 0.0
      %3860 = vmatpush1.msra.mxu0 0.0
      %3861 = vmatprep.subr.mxu0 0.0
      %3862 = vmatpush1.msra.mxu0 0.0
      %3863 = vmatprep.subr.mxu0 0.0
      %3864 = vmatpush1.msra.mxu0 0.0
      %3865 = vmatprep.subr.mxu0 0.0
      %3866 = vmatpush1.msra.mxu0 0.0
      %3867 = vmatprep.subr.mxu0 0.0
      %3868 = vmatpush1.msra.mxu0 0.0
      %3869 = vmatprep.subr.mxu0 0.0
      %3870 = vmatpush1.msra.mxu0 0.0
      %3871 = vmatprep.subr.mxu0 0.0
      %3872 = vmatpush1.msra.mxu0 0.0
      %3873 = vmatprep.subr.mxu0 0.0
      %3874 = vmatpush1.msra.mxu0 0.0
      %3875 = vmatprep.subr.mxu0 0.0
      %3876 = vmatpush1.msra.mxu0 0.0
      %3877 = vmatprep.subr.mxu0 0.0
      %3878 = vmatpush1.msra.mxu0 0.0
      %3879 = vmatprep.subr.mxu0 0.0
      %3880 = vmatpush1.msra.mxu0 0.0
      %3881 = vmatprep.subr.mxu0 0.0
      %3882 = vmatpush1.msra.mxu0 0.0
      %3883 = vmatprep.subr.mxu0 0.0
      %3884 = vmatpush1.msra.mxu0 0.0
      %3885 = vmatprep.subr.mxu0 0.0
      %3886 = vmatpush1.msra.mxu0 0.0
      %3887 = vmatprep.subr.mxu0 0.0
      %3888 = vmatpush1.msra.mxu0 0.0
      %3889 = vmatprep.subr.mxu0 0.0
      %3890 = vmatpush1.msra.mxu0 0.0
      %3891 = vmatprep.subr.mxu0 0.0
      %3892 = vmatpush1.msra.mxu0 0.0
      %3893 = vmatprep.subr.mxu0 0.0
      %3894 = vmatpush1.msra.mxu0 0.0
      %3895 = vmatprep.subr.mxu0 0.0
      %3896 = vmatpush1.msra.mxu0 0.0
      %3897 = vmatprep.subr.mxu0 0.0
      %3898 = vmatpush1.msra.mxu0 0.0
      %3899 = vmatprep.mubr.f32.mxu0 0.0
      %3900 = vmatmul.mubr.f32.gmra.mrb[0].mxu0 %v3833
      %v3901 = vpop.f32.mrb[0].mxu0
      %v3902 = vadd.f32 0.0, %v3901
      %v3903 = vpop.f32.mrb[0].mxu0
      %3904 = vdwg.mxu0
      %v3906 = vsel %vm1199, %v3685, 0
      %3908 = vmatprep.subr.mxu0 0.0
      %3909 = vmatpush1.msra.mxu0 %v2198
      %3910 = vmatprep.subr.mxu0 0.0
      %3911 = vmatpush1.msra.mxu0 0.0
      %3912 = vmatprep.subr.mxu0 0.0
      %3913 = vmatpush1.msra.mxu0 0.0
      %3914 = vmatprep.subr.mxu0 0.0
      %3915 = vmatpush1.msra.mxu0 0.0
      %3916 = vmatprep.subr.mxu0 0.0
      %3917 = vmatpush1.msra.mxu0 0.0
      %3918 = vmatprep.subr.mxu0 0.0
      %3919 = vmatpush1.msra.mxu0 0.0
      %3920 = vmatprep.subr.mxu0 0.0
      %3921 = vmatpush1.msra.mxu0 0.0
      %3922 = vmatprep.subr.mxu0 0.0
      %3923 = vmatpush1.msra.mxu0 0.0
      %3924 = vmatprep.subr.mxu0 0.0
      %3925 = vmatpush1.msra.mxu0 0.0
      %3926 = vmatprep.subr.mxu0 0.0
      %3927 = vmatpush1.msra.mxu0 0.0
      %3928 = vmatprep.subr.mxu0 0.0
      %3929 = vmatpush1.msra.mxu0 0.0
      %3930 = vmatprep.subr.mxu0 0.0
      %3931 = vmatpush1.msra.mxu0 0.0
      %3932 = vmatprep.subr.mxu0 0.0
      %3933 = vmatpush1.msra.mxu0 0.0
      %3934 = vmatprep.subr.mxu0 0.0
      %3935 = vmatpush1.msra.mxu0 0.0
      %3936 = vmatprep.subr.mxu0 0.0
      %3937 = vmatpush1.msra.mxu0 0.0
      %3938 = vmatprep.subr.mxu0 0.0
      %3939 = vmatpush1.msra.mxu0 0.0
      %3940 = vmatprep.subr.mxu0 0.0
      %3941 = vmatpush1.msra.mxu0 0.0
      %3942 = vmatprep.subr.mxu0 0.0
      %3943 = vmatpush1.msra.mxu0 0.0
      %3944 = vmatprep.subr.mxu0 0.0
      %3945 = vmatpush1.msra.mxu0 0.0
      %3946 = vmatprep.subr.mxu0 0.0
      %3947 = vmatpush1.msra.mxu0 0.0
      %3948 = vmatprep.subr.mxu0 0.0
      %3949 = vmatpush1.msra.mxu0 0.0
      %3950 = vmatprep.subr.mxu0 0.0
      %3951 = vmatpush1.msra.mxu0 0.0
      %3952 = vmatprep.subr.mxu0 0.0
      %3953 = vmatpush1.msra.mxu0 0.0
      %3954 = vmatprep.subr.mxu0 0.0
      %3955 = vmatpush1.msra.mxu0 0.0
      %3956 = vmatprep.subr.mxu0 0.0
      %3957 = vmatpush1.msra.mxu0 0.0
      %3958 = vmatprep.subr.mxu0 0.0
      %3959 = vmatpush1.msra.mxu0 0.0
      %3960 = vmatprep.subr.mxu0 0.0
      %3961 = vmatpush1.msra.mxu0 0.0
      %3962 = vmatprep.subr.mxu0 0.0
      %3963 = vmatpush1.msra.mxu0 0.0
      %3964 = vmatprep.subr.mxu0 0.0
      %3965 = vmatpush1.msra.mxu0 0.0
      %3966 = vmatprep.subr.mxu0 0.0
      %3967 = vmatpush1.msra.mxu0 0.0
      %3968 = vmatprep.subr.mxu0 0.0
      %3969 = vmatpush1.msra.mxu0 0.0
      %3970 = vmatprep.subr.mxu0 0.0
      %3971 = vmatpush1.msra.mxu0 0.0
      %3972 = vmatprep.mubr.f32.mxu0 0.0
      %3973 = vmatmul.mubr.f32.gmra.mrb[0].mxu0 %v3906
      %v3974 = vpop.f32.mrb[0].mxu0
      %v3975 = vadd.f32 0.0, %v3974
      %v3976 = vpop.f32.mrb[0].mxu0
      %3977 = vdwg.mxu0
      %v3978 = vsel %vm355, %v3756, 0.0
      %v3979 = vsel %vm355, %v3829, 0.0
      %v3980 = vadd.f32 %v3978, %v3979
      %v3981 = vsel %vm355, %v3902, 0.0
      %v3982 = vadd.f32 %v3980, %v3981
      %v3983 = vsel %vm355, %v3975, 0.0
      %v3984 = vadd.f32 %v3982, %v3983
      %v3985 = vld [vmem:[%s6] sm:$0xff]
      %v3986 = vld [vmem:[%s6 + $0x8] sm:$0xff]
      %v3987 = vld [vmem:[%s6 + $0x10] sm:$0xff]
      %v3988 = vld [vmem:[%s6 + $0x18] sm:$0xff]
      %v3989 = vld [vmem:[%s7] sm:$0x1]
      %v3991 = vlaneseq
      %v3992 = vshrl.u32 %v3991, 7
      %v3993 = vsub.s32 0, %v3992
      %v3994 = vrot.slane %v3989, %v3993
      %v3997 = vsel %vm355, %v3984, 0
      %3999 = vmatprep.subr.mxu0 0.0
      %4000 = vmatpush1.msra.mxu0 %v3985
      %4001 = vmatprep.subr.mxu0 0.0
      %4002 = vmatpush1.msra.mxu0 %v3986
      %4003 = vmatprep.subr.mxu0 0.0
      %4004 = vmatpush1.msra.mxu0 %v3987
      %4005 = vmatprep.subr.mxu0 0.0
      %4006 = vmatpush1.msra.mxu0 %v3988
      %4007 = vmatprep.subr.mxu0 0.0
      %4008 = vmatpush1.msra.mxu0 0.0
      %4009 = vmatprep.subr.mxu0 0.0
      %4010 = vmatpush1.msra.mxu0 0.0
      %4011 = vmatprep.subr.mxu0 0.0
      %4012 = vmatpush1.msra.mxu0 0.0
      %4013 = vmatprep.subr.mxu0 0.0
      %4014 = vmatpush1.msra.mxu0 0.0
      %4015 = vmatprep.subr.mxu0 0.0
      %4016 = vmatpush1.msra.mxu0 0.0
      %4017 = vmatprep.subr.mxu0 0.0
      %4018 = vmatpush1.msra.mxu0 0.0
      %4019 = vmatprep.subr.mxu0 0.0
      %4020 = vmatpush1.msra.mxu0 0.0
      %4021 = vmatprep.subr.mxu0 0.0
      %4022 = vmatpush1.msra.mxu0 0.0
      %4023 = vmatprep.subr.mxu0 0.0
      %4024 = vmatpush1.msra.mxu0 0.0
      %4025 = vmatprep.subr.mxu0 0.0
      %4026 = vmatpush1.msra.mxu0 0.0
      %4027 = vmatprep.subr.mxu0 0.0
      %4028 = vmatpush1.msra.mxu0 0.0
      %4029 = vmatprep.subr.mxu0 0.0
      %4030 = vmatpush1.msra.mxu0 0.0
      %4031 = vmatprep.subr.mxu0 0.0
      %4032 = vmatpush1.msra.mxu0 0.0
      %4033 = vmatprep.subr.mxu0 0.0
      %4034 = vmatpush1.msra.mxu0 0.0
      %4035 = vmatprep.subr.mxu0 0.0
      %4036 = vmatpush1.msra.mxu0 0.0
      %4037 = vmatprep.subr.mxu0 0.0
      %4038 = vmatpush1.msra.mxu0 0.0
      %4039 = vmatprep.subr.mxu0 0.0
      %4040 = vmatpush1.msra.mxu0 0.0
      %4041 = vmatprep.subr.mxu0 0.0
      %4042 = vmatpush1.msra.mxu0 0.0
      %4043 = vmatprep.subr.mxu0 0.0
      %4044 = vmatpush1.msra.mxu0 0.0
      %4045 = vmatprep.subr.mxu0 0.0
      %4046 = vmatpush1.msra.mxu0 0.0
      %4047 = vmatprep.subr.mxu0 0.0
      %4048 = vmatpush1.msra.mxu0 0.0
      %4049 = vmatprep.subr.mxu0 0.0
      %4050 = vmatpush1.msra.mxu0 0.0
      %4051 = vmatprep.subr.mxu0 0.0
      %4052 = vmatpush1.msra.mxu0 0.0
      %4053 = vmatprep.subr.mxu0 0.0
      %4054 = vmatpush1.msra.mxu0 0.0
      %4055 = vmatprep.subr.mxu0 0.0
      %4056 = vmatpush1.msra.mxu0 0.0
      %4057 = vmatprep.subr.mxu0 0.0
      %4058 = vmatpush1.msra.mxu0 0.0
      %4059 = vmatprep.subr.mxu0 0.0
      %4060 = vmatpush1.msra.mxu0 0.0
      %4061 = vmatprep.subr.mxu0 0.0
      %4062 = vmatpush1.msra.mxu0 0.0
      %4063 = vmatprep.mubr.f32.mxu0 0.0
      %4064 = vmatmul.mubr.f32.gmra.mrb[0].mxu0 %v3997
      %v4065 = vpop.f32.mrb[0].mxu0
      %v4066 = vadd.f32 %v3994, %v4065
      %v4067 = vpop.f32.mrb[0].mxu0
      %4068 = vdwg.mxu0
      %4069 = vst [vmem:[%s300] sm:$0xff] %v4066
      %p4070 = scmp.lt.s32.totalorder %s19, 1
      %s4071 = scalar_select %p4070, %s19, 1
      %s4072 = smul.addr %s4071, 8
      %s4073 = scalar_lea.vmem %s8, %s4072
      // Predicated region
      $region53: #{_lambda_.1} parent=51 // pred_check
        %p4074 = pneg %p210
      $region54: #{_lambda_.1} parent=51 // pred_check_branch
        %4076 = sbr.rel (%p4074) target = $region56
      $region55: #{_lambda_.1} parent=51 // pred_region
        _
      $region56: #{_lambda_.1} parent=51 // pred_fallthru
        _
    $region52: #{_lambda_.1} parent=5 // pred_fallthru
      _
    %p4077 = scmp.le.s32.totalorder 2, %s14
    // Predicated region
    $region57: #{_lambda_.1} parent=5 // pred_check
      %p4078 = pneg %p4077
    $region58: #{_lambda_.1} parent=5 // pred_check_branch
      %4080 = sbr.rel (%p4078) target = $region60
    $region59: #{_lambda_.1} parent=5 // pred_region
      %s4081 = ssub.s32 %s14, 2
      // Predicated region
      $region61: #{_lambda_.1} parent=59 // pred_check
        %p4082 = pneg %p216
      $region62: #{_lambda_.1} parent=59 // pred_check_branch
        %4084 = sbr.rel (%p4082) target = $region64
      $region63: #{_lambda_.1} parent=59 // pred_region
        %p4085 = scmp.lt.s32.totalorder %s20, 1
        %s4086 = scalar_select %p4085, %s20, 1
        %s4087 = smul.addr %s4086, 8
        %s4088 = scalar_lea.vmem %s8, %s4087
      $region64: #{_lambda_.1} parent=59 // pred_fallthru
        _
    $region60: #{_lambda_.1} parent=5 // pred_fallthru
      _
  $region6: #{_lambda_.1} parent=0 // loop_footer
    %s18 = sadd.s32 1, %s14
  $region7: #{_lambda_.1} parent=0 // loop_footer_branch
    %13 = sbr.rel target = $region3
  $region8: #{_lambda_.1} parent=0 // loop_exit
    _

</llo_original>
